<compile_context>
chip_gen: v7x
topology: tpu7x:2x2x1
jax: 0.10.0
libtpu: 0.0.40
codegen_flags: <defaults>
</compile_context>

<pallas_src>
import functools
import math

import jax
import jax.numpy as jnp
from jax.experimental import pallas as pl
from jax.experimental.pallas import tpu as pltpu


VMEM_SPEC = pl.BlockSpec(memory_space=pltpu.MemorySpace.VMEM)


def _vmem_specs(n):
    return [pl.BlockSpec(memory_space=pltpu.MemorySpace.VMEM) for _ in range(n)]


def _dot(a, b):
    # bf16 MXU operands, f32 accumulation.
    return jnp.dot(a.astype(jnp.bfloat16), b.astype(jnp.bfloat16),
                   preferred_element_type=jnp.float32)


# ----------------------------------------------------------------------------
# Fused GNN layer kernel: TransformerConv + Linear/ReLU + LayerNorm
# ----------------------------------------------------------------------------
def _gnn_layer_kernel(x_ref, adj_ref, ea_ref,
                      wq_ref, bq_ref, wk_ref, bk_ref, wv_ref, bv_ref,
                      we_ref, wskip_ref, bskip_ref,
                      wt_ref, bt_ref, g_ref, beta_ref, o_ref,
                      *, heads, head_dim, edge_dim, eps):
    x = x_ref[...]                                   # [N, F]
    adj = adj_ref[...]                               # [N, N]   adj[i, j]: edge j -> i
    ea = ea_ref[...]                                 # [E, N, N] dense edge attrs
    scale = 1.0 / math.sqrt(head_dim)

    q = (_dot(x, wq_ref[...]) + bq_ref[...]) * scale  # scale folded into q
    k = _dot(x, wk_ref[...]) + bk_ref[...]
    v = _dot(x, wv_ref[...]) + bv_ref[...]

    we = we_ref[...]                                 # [E, H*C]
    wt = wt_ref[...]                                 # [H*C, emb]

    # root/skip projection folded through the transf linear
    skip = _dot(x, wskip_ref[...]) + bskip_ref[...]
    y = _dot(skip, wt) + bt_ref[...]                 # [N, emb]

    edge_mask = adj > 0
    for h in range(heads):                           # static unroll (heads small)
        sl = slice(h * head_dim, (h + 1) * head_dim)
        qh, kh, vh = q[:, sl], k[:, sl], v[:, sl]    # [N, C]
        weh = we[:, sl]                              # [E, C]

        # scores: s[i, j] = q_i . (k_j + W_e e_ij) / sqrt(C)
        s = _dot(qh, kh.T)                           # [N, N]
        qe = _dot(qh, weh.T)                         # [N, E]  (edge-dim space)
        for d in range(edge_dim):
            s = s + qe[:, d:d + 1] * ea[d]           # broadcast over src axis

        s = jnp.where(edge_mask, s, -1e30)
        m = jnp.max(s, axis=-1, keepdims=True)
        p = jnp.where(edge_mask, jnp.exp(s - m), 0.0)
        l = jnp.sum(p, axis=-1, keepdims=True)
        alpha = p * pl.reciprocal(jnp.maximum(l, 1e-30), approx=True)

        out_h = _dot(alpha, vh)                      # [N, C]
        # value edge term in edge_dim space: ae[i, d] = sum_j alpha[i, j] * ea[d, i, j]
        ae_cols = [jnp.sum(alpha * ea[d], axis=-1, keepdims=True)
                   for d in range(edge_dim)]
        ae = jnp.concatenate(ae_cols, axis=-1)       # [N, E]
        out_h = out_h + _dot(ae, weh)

        # accumulate through the transf linear slice (no lane-axis head concat)
        y = y + _dot(out_h, wt[sl, :])

    # ReLU + (dropout: identity in eval) + LayerNorm
    y = jnp.maximum(y, 0.0)
    mu = jnp.mean(y, axis=-1, keepdims=True)
    dev = y - mu
    var = jnp.mean(dev * dev, axis=-1, keepdims=True)
    o_ref[...] = dev * jax.lax.rsqrt(var + eps) * g_ref[...] + beta_ref[...]


# ----------------------------------------------------------------------------
# Fused pooling + charge concat + dense head kernel
# ----------------------------------------------------------------------------
def _pool_head_kernel(x_ref, seg_ref, mol_ref, ctr_ref, wg_ref, bg_ref,
                      w1_ref, b1_ref, *rest, n_fc, emb):
    fc_refs = rest[:2 * n_fc]
    wout_ref = rest[2 * n_fc]
    bout_ref = rest[2 * n_fc + 1]
    o_ref = rest[2 * n_fc + 2]

    x = x_ref[...]                                   # [Ns, D]
    gate = jnp.dot(x, wg_ref[...], preferred_element_type=jnp.float32) + bg_ref[...]
    gt = jnp.transpose(gate, (1, 0))                 # [1, Ns]
    seg = seg_ref[...]                               # [B, Ns] one-hot membership
    gm = jnp.where(seg > 0, gt, -1e30)
    m = jnp.max(gm, axis=-1, keepdims=True)
    p = jnp.where(seg > 0, jnp.exp(gt - m), 0.0)
    l = jnp.sum(p, axis=-1, keepdims=True)
    alpha = p * pl.reciprocal(jnp.maximum(l, 1e-30), approx=True)
    pooled = jnp.dot(alpha, x, preferred_element_type=jnp.float32)   # [B, D]

    # linear1 with formal-charge concat folded in algebraically:
    # [pooled, mol, ctr] @ w1 = pooled @ w1[:emb] + mol*w1[emb] + ctr*w1[emb+1]
    w1 = w1_ref[...]
    h = (jnp.dot(pooled, w1[:emb, :], preferred_element_type=jnp.float32)
         + mol_ref[...] * w1[emb:emb + 1, :]
         + ctr_ref[...] * w1[emb + 1:emb + 2, :]
         + b1_ref[...])
    h = jnp.maximum(h, 0.0)
    # TODO(synk): reference applies F.dropout (training=True by default) here;
    # implemented as identity (inference semantics).
    for i in range(n_fc):
        w = fc_refs[2 * i][...]
        b = fc_refs[2 * i + 1][...]
        h = jnp.maximum(jnp.dot(h, w, preferred_element_type=jnp.float32) + b, 0.0)
    o_ref[...] = jnp.dot(h, wout_ref[...],
                         preferred_element_type=jnp.float32) + bout_ref[...]


# ----------------------------------------------------------------------------
# Pallas wrappers
# ----------------------------------------------------------------------------
def gnn_layer(x, adj, ea, conv, transf, ln, heads, head_dim, edge_dim):
    wt, bt = transf
    g, beta = ln
    N = x.shape[0]
    emb = wt.shape[1]
    kern = functools.partial(_gnn_layer_kernel, heads=heads, head_dim=head_dim,
                             edge_dim=edge_dim, eps=1e-5)
    return pl.pallas_call(
        kern,
        out_shape=jax.ShapeDtypeStruct((N, emb), jnp.float32),
        in_specs=_vmem_specs(16),
        out_specs=VMEM_SPEC,
    )(x, adj, ea, conv['wq'], conv['bq'], conv['wk'], conv['bk'],
      conv['wv'], conv['bv'], conv['we'], conv['wskip'], conv['bskip'],
      wt, bt, g, beta)


def pool_and_head(x_sel, seg, mol, ctr, gate, lin1, fc, out_lin, emb):
    wg, bg = gate
    w1, b1 = lin1
    wout, bout = out_lin
    n_fc = len(fc)
    args = [x_sel, seg, mol, ctr, wg, bg, w1, b1]
    for (w, b) in fc:
        args += [w, b]
    args += [wout, bout]
    kern = functools.partial(_pool_head_kernel, n_fc=n_fc, emb=emb)
    B = seg.shape[0]
    return pl.pallas_call(
        kern,
        out_shape=jax.ShapeDtypeStruct((B, 1), jnp.float32),
        in_specs=_vmem_specs(len(args)),
        out_specs=VMEM_SPEC,
    )(*args)


# ----------------------------------------------------------------------------
# Parameter construction (deterministic)
# ----------------------------------------------------------------------------
def init_params(key, feature_size, edge_dim, mp):
    emb = mp['model_embedding_size']
    H = mp['model_attention_heads']
    gnn_layers = mp['model_gnn_layers']
    dense_layers = mp['model_fc_layers']
    dn = mp['model_dense_neurons']
    HC = H * emb
    kit = iter(jax.random.split(key, 256))

    def lin(in_f, out_f, bias=True):
        w = 0.1 * jax.random.normal(next(kit), (in_f, out_f), jnp.float32)
        b = (0.1 * jax.random.normal(next(kit), (1, out_f), jnp.float32)
             if bias else None)
        return w, b

    def conv_params(in_f):
        wq, bq = lin(in_f, HC)
        wk, bk = lin(in_f, HC)
        wv, bv = lin(in_f, HC)
        we, _ = lin(edge_dim, HC, bias=False)
        ws, bs = lin(in_f, HC)
        return dict(wq=wq, bq=bq, wk=wk, bk=bk, wv=wv, bv=bv,
                    we=we, wskip=ws, bskip=bs)

    p = {}
    p['conv1'] = conv_params(feature_size)
    p['transf1'] = lin(HC, emb)
    p['bn1'] = (jnp.ones((1, emb), jnp.float32), jnp.zeros((1, emb), jnp.float32))
    p['convs'] = [conv_params(emb) for _ in range(gnn_layers)]
    p['transfs'] = [lin(HC, emb) for _ in range(gnn_layers)]
    p['bns'] = [(jnp.ones((1, emb), jnp.float32), jnp.zeros((1, emb), jnp.float32))
                for _ in range(gnn_layers)]
    p['gate'] = lin(emb, 1)
    p['linear1'] = lin(emb + 2, dn)
    fc = []
    for _ in range(dense_layers - 1):
        fc.append(lin(dn, dn // 4))
        dn = dn // 4
    p['fc'] = fc
    p['out'] = lin(dn, 1)
    return p


# ----------------------------------------------------------------------------
# Forward pass (mirrors GNN_New.forward, eval mode) — fully jittable
# ----------------------------------------------------------------------------
def gnn_forward(p, mp, num_graphs, x, edge_index, edge_attr, node_index,
                mol_formal_charge, center_formal_charge, batch_index):
    emb = mp['model_embedding_size']
    H = mp['model_attention_heads']
    gnn_layers = mp['model_gnn_layers']
    edge_dim = edge_attr.shape[1]
    N = x.shape[0]

    # densify graph once (shared by all layers): adjacency + [E, N, N] edge attrs
    src, dst = edge_index[0], edge_index[1]
    adj = jnp.zeros((N, N), jnp.float32).at[dst, src].set(1.0)
    ea = jnp.zeros((edge_dim, N, N), jnp.float32).at[:, dst, src].set(edge_attr.T)

    # conv1 -> relu(transf1) -> (dropout: identity in eval) -> LayerNorm
    x = gnn_layer(x, adj, ea, p['conv1'], p['transf1'], p['bn1'], H, emb, edge_dim)
    for i in range(gnn_layers - 1):
        x = gnn_layer(x, adj, ea, p['convs'][i], p['transfs'][i], p['bns'][i],
                      H, emb, edge_dim)

    # node selection + graph membership (node_index sorted/unique as in reference)
    x_sel = x[node_index]
    batch_sel = batch_index[node_index]
    seg = (batch_sel[None, :] == jnp.arange(num_graphs)[:, None]).astype(jnp.float32)

    # GlobalAttention pooling + formal-charge concat + dense head (one kernel)
    return pool_and_head(x_sel, seg,
                         mol_formal_charge[:, None], center_formal_charge[:, None],
                         p['gate'], p['linear1'], p['fc'], p['out'], emb)


# ----------------------------------------------------------------------------
# Example run
# ----------------------------------------------------------------------------
if __name__ == "__main__":
    key = jax.random.PRNGKey(0)
    k_x, k_e, k_p = jax.random.split(key, 3)

    feature_size = 16
    edge_dim = 4
    model_params = dict(
        model_embedding_size=32,
        model_gnn_layers=2,
        model_fc_layers=2,
        model_dropout_rate=0.1,
        model_dense_neurons=64,
        model_attention_heads=2,
    )
    num_graphs = 2

    N = 16                                   # total nodes (2 graphs x 8)
    x = jax.random.normal(k_x, (N, feature_size), jnp.float32)

    # simple deterministic graph: i -> (i+1)%N and i -> (i+2)%N  (32 unique edges)
    src = jnp.concatenate([jnp.arange(N), jnp.arange(N)]).astype(jnp.int32)
    dst = jnp.concatenate([(jnp.arange(N) + 1) % N,
                           (jnp.arange(N) + 2) % N]).astype(jnp.int32)
    edge_index = jnp.stack([src, dst], axis=0)            # [2, 32]
    edge_attr = jax.random.normal(k_e, (edge_index.shape[1], edge_dim), jnp.float32)

    batch_index = jnp.array([0] * 8 + [1] * 8, jnp.int32)
    node_index = jnp.array([0, 2, 3, 5, 8, 10, 13, 15], jnp.int32)  # sorted, unique
    mol_formal_charge = jnp.array([0.0, -1.0], jnp.float32)
    center_formal_charge = jnp.array([1.0, 0.0], jnp.float32)

    params = init_params(k_p, feature_size, edge_dim, model_params)

    @jax.jit
    def fwd(params, x, edge_index, edge_attr, node_index, mol, ctr, batch_index):
        return gnn_forward(params, model_params, num_graphs, x, edge_index,
                           edge_attr, node_index, mol, ctr, batch_index)

    out = fwd(params, x, edge_index, edge_attr, node_index,
              mol_formal_charge, center_formal_charge, batch_index)
    jax.block_until_ready(out)
    assert out.shape == (num_graphs, 1)
    print("KERNEL_OK")
</pallas_src>

<mosaic_0001>
module attributes {stable_mosaic.version = 11 : i64} {
  func.func @_gnn_layer_kernel(%arg0: memref<16x16xf32, #tpu.memory_space<vmem>>, %arg1: memref<16x16xf32, #tpu.memory_space<vmem>>, %arg2: memref<4x16x16xf32, #tpu.memory_space<vmem>>, %arg3: memref<16x64xf32, #tpu.memory_space<vmem>>, %arg4: memref<1x64xf32, #tpu.memory_space<vmem>>, %arg5: memref<16x64xf32, #tpu.memory_space<vmem>>, %arg6: memref<1x64xf32, #tpu.memory_space<vmem>>, %arg7: memref<16x64xf32, #tpu.memory_space<vmem>>, %arg8: memref<1x64xf32, #tpu.memory_space<vmem>>, %arg9: memref<4x64xf32, #tpu.memory_space<vmem>>, %arg10: memref<16x64xf32, #tpu.memory_space<vmem>>, %arg11: memref<1x64xf32, #tpu.memory_space<vmem>>, %arg12: memref<64x32xf32, #tpu.memory_space<vmem>>, %arg13: memref<1x32xf32, #tpu.memory_space<vmem>>, %arg14: memref<1x32xf32, #tpu.memory_space<vmem>>, %arg15: memref<1x32xf32, #tpu.memory_space<vmem>>, %arg16: memref<16x32xf32, #tpu.memory_space<vmem>>) attributes {dimension_semantics = [], scalar_prefetch = 0 : i64, scratch_operands = 0 : i64, tpu.core_type = #tpu.core_type<tc>} {
    %c0 = arith.constant 0 : index
    %c0_0 = arith.constant 0 : index
    %0 = vector.load %arg0[%c0, %c0_0] : memref<16x16xf32, #tpu.memory_space<vmem>>, vector<16x16xf32>
    %c0_1 = arith.constant 0 : index
    %c0_2 = arith.constant 0 : index
    %1 = vector.load %arg1[%c0_1, %c0_2] : memref<16x16xf32, #tpu.memory_space<vmem>>, vector<16x16xf32>
    %c0_3 = arith.constant 0 : index
    %c0_4 = arith.constant 0 : index
    %c0_5 = arith.constant 0 : index
    %2 = vector.load %arg2[%c0_3, %c0_4, %c0_5] : memref<4x16x16xf32, #tpu.memory_space<vmem>>, vector<4x16x16xf32>
    %c0_6 = arith.constant 0 : index
    %c0_7 = arith.constant 0 : index
    %3 = vector.load %arg3[%c0_6, %c0_7] : memref<16x64xf32, #tpu.memory_space<vmem>>, vector<16x64xf32>
    %4 = arith.truncf %0 : vector<16x16xf32> to vector<16x16xbf16>
    %5 = arith.truncf %3 : vector<16x64xf32> to vector<16x64xbf16>
    %cst = arith.constant dense<0.000000e+00> : vector<16x64xf32>
    %6 = tpu.matmul %4, %5, %cst {dimension_numbers = #tpu.dot_dimension_numbers<[1], [0], [0], [1], [0, 0, 1, 1], [], []>} : vector<16x16xbf16>, vector<16x64xbf16>, vector<16x64xf32> -> vector<16x64xf32>
    %c0_8 = arith.constant 0 : index
    %c0_9 = arith.constant 0 : index
    %7 = vector.load %arg4[%c0_8, %c0_9] : memref<1x64xf32, #tpu.memory_space<vmem>>, vector<1x64xf32>
    %8 = vector.broadcast %7 : vector<1x64xf32> to vector<16x64xf32>
    %9 = arith.addf %6, %8 : vector<16x64xf32>
    %cst_10 = arith.constant 0.176776692 : f32
    %10 = vector.broadcast %cst_10 : f32 to vector<16x64xf32>
    %11 = arith.mulf %9, %10 : vector<16x64xf32>
    %c0_11 = arith.constant 0 : index
    %c0_12 = arith.constant 0 : index
    %12 = vector.load %arg5[%c0_11, %c0_12] : memref<16x64xf32, #tpu.memory_space<vmem>>, vector<16x64xf32>
    %13 = arith.truncf %0 : vector<16x16xf32> to vector<16x16xbf16>
    %14 = arith.truncf %12 : vector<16x64xf32> to vector<16x64xbf16>
    %cst_13 = arith.constant dense<0.000000e+00> : vector<16x64xf32>
    %15 = tpu.matmul %13, %14, %cst_13 {dimension_numbers = #tpu.dot_dimension_numbers<[1], [0], [0], [1], [0, 0, 1, 1], [], []>} : vector<16x16xbf16>, vector<16x64xbf16>, vector<16x64xf32> -> vector<16x64xf32>
    %c0_14 = arith.constant 0 : index
    %c0_15 = arith.constant 0 : index
    %16 = vector.load %arg6[%c0_14, %c0_15] : memref<1x64xf32, #tpu.memory_space<vmem>>, vector<1x64xf32>
    %17 = vector.broadcast %16 : vector<1x64xf32> to vector<16x64xf32>
    %18 = arith.addf %15, %17 : vector<16x64xf32>
    %c0_16 = arith.constant 0 : index
    %c0_17 = arith.constant 0 : index
    %19 = vector.load %arg7[%c0_16, %c0_17] : memref<16x64xf32, #tpu.memory_space<vmem>>, vector<16x64xf32>
    %20 = arith.truncf %0 : vector<16x16xf32> to vector<16x16xbf16>
    %21 = arith.truncf %19 : vector<16x64xf32> to vector<16x64xbf16>
    %cst_18 = arith.constant dense<0.000000e+00> : vector<16x64xf32>
    %22 = tpu.matmul %20, %21, %cst_18 {dimension_numbers = #tpu.dot_dimension_numbers<[1], [0], [0], [1], [0, 0, 1, 1], [], []>} : vector<16x16xbf16>, vector<16x64xbf16>, vector<16x64xf32> -> vector<16x64xf32>
    %c0_19 = arith.constant 0 : index
    %c0_20 = arith.constant 0 : index
    %23 = vector.load %arg8[%c0_19, %c0_20] : memref<1x64xf32, #tpu.memory_space<vmem>>, vector<1x64xf32>
    %24 = vector.broadcast %23 : vector<1x64xf32> to vector<16x64xf32>
    %25 = arith.addf %22, %24 : vector<16x64xf32>
    %c0_21 = arith.constant 0 : index
    %c0_22 = arith.constant 0 : index
    %26 = vector.load %arg9[%c0_21, %c0_22] : memref<4x64xf32, #tpu.memory_space<vmem>>, vector<4x64xf32>
    %c0_23 = arith.constant 0 : index
    %c0_24 = arith.constant 0 : index
    %27 = vector.load %arg12[%c0_23, %c0_24] : memref<64x32xf32, #tpu.memory_space<vmem>>, vector<64x32xf32>
    %c0_25 = arith.constant 0 : index
    %c0_26 = arith.constant 0 : index
    %28 = vector.load %arg10[%c0_25, %c0_26] : memref<16x64xf32, #tpu.memory_space<vmem>>, vector<16x64xf32>
    %29 = arith.truncf %0 : vector<16x16xf32> to vector<16x16xbf16>
    %30 = arith.truncf %28 : vector<16x64xf32> to vector<16x64xbf16>
    %cst_27 = arith.constant dense<0.000000e+00> : vector<16x64xf32>
    %31 = tpu.matmul %29, %30, %cst_27 {dimension_numbers = #tpu.dot_dimension_numbers<[1], [0], [0], [1], [0, 0, 1, 1], [], []>} : vector<16x16xbf16>, vector<16x64xbf16>, vector<16x64xf32> -> vector<16x64xf32>
    %c0_28 = arith.constant 0 : index
    %c0_29 = arith.constant 0 : index
    %32 = vector.load %arg11[%c0_28, %c0_29] : memref<1x64xf32, #tpu.memory_space<vmem>>, vector<1x64xf32>
    %33 = vector.broadcast %32 : vector<1x64xf32> to vector<16x64xf32>
    %34 = arith.addf %31, %33 : vector<16x64xf32>
    %35 = arith.truncf %34 : vector<16x64xf32> to vector<16x64xbf16>
    %36 = arith.truncf %27 : vector<64x32xf32> to vector<64x32xbf16>
    %cst_30 = arith.constant dense<0.000000e+00> : vector<16x32xf32>
    %37 = tpu.matmul %35, %36, %cst_30 {dimension_numbers = #tpu.dot_dimension_numbers<[1], [0], [0], [1], [0, 0, 1, 1], [], []>} : vector<16x64xbf16>, vector<64x32xbf16>, vector<16x32xf32> -> vector<16x32xf32>
    %c0_31 = arith.constant 0 : index
    %c0_32 = arith.constant 0 : index
    %38 = vector.load %arg13[%c0_31, %c0_32] : memref<1x32xf32, #tpu.memory_space<vmem>>, vector<1x32xf32>
    %39 = vector.broadcast %38 : vector<1x32xf32> to vector<16x32xf32>
    %40 = arith.addf %37, %39 : vector<16x32xf32>
    %cst_33 = arith.constant 0.000000e+00 : f32
    %41 = vector.broadcast %cst_33 : f32 to vector<16x16xf32>
    %42 = arith.cmpf ogt, %1, %41 : vector<16x16xf32>
    %43 = vector.extract_strided_slice %11 {offsets = [0, 0], sizes = [16, 32], strides = [1, 1]} : vector<16x64xf32> to vector<16x32xf32>
    %44 = vector.extract_strided_slice %18 {offsets = [0, 0], sizes = [16, 32], strides = [1, 1]} : vector<16x64xf32> to vector<16x32xf32>
    %45 = vector.extract_strided_slice %25 {offsets = [0, 0], sizes = [16, 32], strides = [1, 1]} : vector<16x64xf32> to vector<16x32xf32>
    %46 = vector.extract_strided_slice %26 {offsets = [0, 0], sizes = [4, 32], strides = [1, 1]} : vector<4x64xf32> to vector<4x32xf32>
    %47 = tpu.transpose %44, [1, 0] : vector<16x32xf32> -> vector<32x16xf32>
    %48 = arith.truncf %43 : vector<16x32xf32> to vector<16x32xbf16>
    %49 = arith.truncf %47 : vector<32x16xf32> to vector<32x16xbf16>
    %cst_34 = arith.constant dense<0.000000e+00> : vector<16x16xf32>
    %50 = tpu.matmul %48, %49, %cst_34 {dimension_numbers = #tpu.dot_dimension_numbers<[1], [0], [0], [1], [0, 0, 1, 1], [], []>} : vector<16x32xbf16>, vector<32x16xbf16>, vector<16x16xf32> -> vector<16x16xf32>
    %51 = tpu.transpose %46, [1, 0] : vector<4x32xf32> -> vector<32x4xf32>
    %52 = arith.truncf %43 : vector<16x32xf32> to vector<16x32xbf16>
    %53 = arith.truncf %51 : vector<32x4xf32> to vector<32x4xbf16>
    %cst_35 = arith.constant dense<0.000000e+00> : vector<16x4xf32>
    %54 = tpu.matmul %52, %53, %cst_35 {dimension_numbers = #tpu.dot_dimension_numbers<[1], [0], [0], [1], [0, 0, 1, 1], [], []>} : vector<16x32xbf16>, vector<32x4xbf16>, vector<16x4xf32> -> vector<16x4xf32>
    %55 = vector.extract_strided_slice %54 {offsets = [0, 0], sizes = [16, 1], strides = [1, 1]} : vector<16x4xf32> to vector<16x1xf32>
    %56 = vector.extract_strided_slice %2 {offsets = [0, 0, 0], sizes = [1, 16, 16], strides = [1, 1, 1]} : vector<4x16x16xf32> to vector<1x16x16xf32>
    %57 = vector.shape_cast %56 : vector<1x16x16xf32> to vector<16x16xf32>
    %58 = vector.broadcast %55 : vector<16x1xf32> to vector<16x16xf32>
    %59 = arith.mulf %58, %57 : vector<16x16xf32>
    %60 = arith.addf %50, %59 : vector<16x16xf32>
    %61 = vector.extract_strided_slice %54 {offsets = [0, 1], sizes = [16, 1], strides = [1, 1]} : vector<16x4xf32> to vector<16x1xf32>
    %62 = vector.extract_strided_slice %2 {offsets = [1, 0, 0], sizes = [1, 16, 16], strides = [1, 1, 1]} : vector<4x16x16xf32> to vector<1x16x16xf32>
    %63 = vector.shape_cast %62 : vector<1x16x16xf32> to vector<16x16xf32>
    %64 = vector.broadcast %61 : vector<16x1xf32> to vector<16x16xf32>
    %65 = arith.mulf %64, %63 : vector<16x16xf32>
    %66 = arith.addf %60, %65 : vector<16x16xf32>
    %67 = vector.extract_strided_slice %54 {offsets = [0, 2], sizes = [16, 1], strides = [1, 1]} : vector<16x4xf32> to vector<16x1xf32>
    %68 = vector.extract_strided_slice %2 {offsets = [2, 0, 0], sizes = [1, 16, 16], strides = [1, 1, 1]} : vector<4x16x16xf32> to vector<1x16x16xf32>
    %69 = vector.shape_cast %68 : vector<1x16x16xf32> to vector<16x16xf32>
    %70 = vector.broadcast %67 : vector<16x1xf32> to vector<16x16xf32>
    %71 = arith.mulf %70, %69 : vector<16x16xf32>
    %72 = arith.addf %66, %71 : vector<16x16xf32>
    %73 = vector.extract_strided_slice %54 {offsets = [0, 3], sizes = [16, 1], strides = [1, 1]} : vector<16x4xf32> to vector<16x1xf32>
    %74 = vector.extract_strided_slice %2 {offsets = [3, 0, 0], sizes = [1, 16, 16], strides = [1, 1, 1]} : vector<4x16x16xf32> to vector<1x16x16xf32>
    %75 = vector.shape_cast %74 : vector<1x16x16xf32> to vector<16x16xf32>
    %76 = vector.broadcast %73 : vector<16x1xf32> to vector<16x16xf32>
    %77 = arith.mulf %76, %75 : vector<16x16xf32>
    %78 = arith.addf %72, %77 : vector<16x16xf32>
    %cst_36 = arith.constant -1.000000e+30 : f32
    %79 = vector.broadcast %cst_36 : f32 to vector<16x16xf32>
    %80 = arith.select %42, %78, %79 : vector<16x16xi1>, vector<16x16xf32>
    %cst_37 = arith.constant dense<0xFF800000> : vector<16xf32>
    %81 = vector.multi_reduction <maximumf>, %80, %cst_37 [1] : vector<16x16xf32> to vector<16xf32>
    %82 = vector.shape_cast %81 : vector<16xf32> to vector<16x1xf32>
    %83 = vector.broadcast %82 : vector<16x1xf32> to vector<16x16xf32>
    %84 = arith.subf %80, %83 : vector<16x16xf32>
    %85 = math.exp %84 : vector<16x16xf32>
    %cst_38 = arith.constant 0.000000e+00 : f32
    %86 = vector.broadcast %cst_38 : f32 to vector<16x16xf32>
    %87 = arith.select %42, %85, %86 : vector<16x16xi1>, vector<16x16xf32>
    %cst_39 = arith.constant dense<0.000000e+00> : vector<16xf32>
    %88 = vector.multi_reduction <add>, %87, %cst_39 [1] : vector<16x16xf32> to vector<16xf32>
    %89 = vector.shape_cast %88 : vector<16xf32> to vector<16x1xf32>
    %cst_40 = arith.constant 1.000000e-30 : f32
    %90 = vector.broadcast %cst_40 : f32 to vector<16x1xf32>
    %91 = arith.maximumf %89, %90 : vector<16x1xf32>
    %92 = tpu.reciprocal %91 {approx = true} : vector<16x1xf32> -> vector<16x1xf32>
    %93 = vector.broadcast %92 : vector<16x1xf32> to vector<16x16xf32>
    %94 = arith.mulf %87, %93 : vector<16x16xf32>
    %95 = arith.truncf %94 : vector<16x16xf32> to vector<16x16xbf16>
    %96 = arith.truncf %45 : vector<16x32xf32> to vector<16x32xbf16>
    %cst_41 = arith.constant dense<0.000000e+00> : vector<16x32xf32>
    %97 = tpu.matmul %95, %96, %cst_41 {dimension_numbers = #tpu.dot_dimension_numbers<[1], [0], [0], [1], [0, 0, 1, 1], [], []>} : vector<16x16xbf16>, vector<16x32xbf16>, vector<16x32xf32> -> vector<16x32xf32>
    %98 = vector.extract_strided_slice %2 {offsets = [0, 0, 0], sizes = [1, 16, 16], strides = [1, 1, 1]} : vector<4x16x16xf32> to vector<1x16x16xf32>
    %99 = vector.shape_cast %98 : vector<1x16x16xf32> to vector<16x16xf32>
    %100 = arith.mulf %94, %99 : vector<16x16xf32>
    %cst_42 = arith.constant dense<0.000000e+00> : vector<16xf32>
    %101 = vector.multi_reduction <add>, %100, %cst_42 [1] : vector<16x16xf32> to vector<16xf32>
    %102 = vector.shape_cast %101 : vector<16xf32> to vector<16x1xf32>
    %103 = vector.extract_strided_slice %2 {offsets = [1, 0, 0], sizes = [1, 16, 16], strides = [1, 1, 1]} : vector<4x16x16xf32> to vector<1x16x16xf32>
    %104 = vector.shape_cast %103 : vector<1x16x16xf32> to vector<16x16xf32>
    %105 = arith.mulf %94, %104 : vector<16x16xf32>
    %cst_43 = arith.constant dense<0.000000e+00> : vector<16xf32>
    %106 = vector.multi_reduction <add>, %105, %cst_43 [1] : vector<16x16xf32> to vector<16xf32>
    %107 = vector.shape_cast %106 : vector<16xf32> to vector<16x1xf32>
    %108 = vector.extract_strided_slice %2 {offsets = [2, 0, 0], sizes = [1, 16, 16], strides = [1, 1, 1]} : vector<4x16x16xf32> to vector<1x16x16xf32>
    %109 = vector.shape_cast %108 : vector<1x16x16xf32> to vector<16x16xf32>
    %110 = arith.mulf %94, %109 : vector<16x16xf32>
    %cst_44 = arith.constant dense<0.000000e+00> : vector<16xf32>
    %111 = vector.multi_reduction <add>, %110, %cst_44 [1] : vector<16x16xf32> to vector<16xf32>
    %112 = vector.shape_cast %111 : vector<16xf32> to vector<16x1xf32>
    %113 = vector.extract_strided_slice %2 {offsets = [3, 0, 0], sizes = [1, 16, 16], strides = [1, 1, 1]} : vector<4x16x16xf32> to vector<1x16x16xf32>
    %114 = vector.shape_cast %113 : vector<1x16x16xf32> to vector<16x16xf32>
    %115 = arith.mulf %94, %114 : vector<16x16xf32>
    %cst_45 = arith.constant dense<0.000000e+00> : vector<16xf32>
    %116 = vector.multi_reduction <add>, %115, %cst_45 [1] : vector<16x16xf32> to vector<16xf32>
    %117 = vector.shape_cast %116 : vector<16xf32> to vector<16x1xf32>
    %118 = tpu.concatenate %102, %107, %112, %117 in 1 : vector<16x1xf32>, vector<16x1xf32>, vector<16x1xf32>, vector<16x1xf32> -> vector<16x4xf32>
    %119 = arith.truncf %118 : vector<16x4xf32> to vector<16x4xbf16>
    %120 = arith.truncf %46 : vector<4x32xf32> to vector<4x32xbf16>
    %cst_46 = arith.constant dense<0.000000e+00> : vector<16x32xf32>
    %121 = tpu.matmul %119, %120, %cst_46 {dimension_numbers = #tpu.dot_dimension_numbers<[1], [0], [0], [1], [0, 0, 1, 1], [], []>} : vector<16x4xbf16>, vector<4x32xbf16>, vector<16x32xf32> -> vector<16x32xf32>
    %122 = arith.addf %97, %121 : vector<16x32xf32>
    %123 = vector.extract_strided_slice %27 {offsets = [0, 0], sizes = [32, 32], strides = [1, 1]} : vector<64x32xf32> to vector<32x32xf32>
    %124 = arith.truncf %122 : vector<16x32xf32> to vector<16x32xbf16>
    %125 = arith.truncf %123 : vector<32x32xf32> to vector<32x32xbf16>
    %cst_47 = arith.constant dense<0.000000e+00> : vector<16x32xf32>
    %126 = tpu.matmul %124, %125, %cst_47 {dimension_numbers = #tpu.dot_dimension_numbers<[1], [0], [0], [1], [0, 0, 1, 1], [], []>} : vector<16x32xbf16>, vector<32x32xbf16>, vector<16x32xf32> -> vector<16x32xf32>
    %127 = arith.addf %40, %126 : vector<16x32xf32>
    %128 = vector.extract_strided_slice %11 {offsets = [0, 32], sizes = [16, 32], strides = [1, 1]} : vector<16x64xf32> to vector<16x32xf32>
    %129 = vector.extract_strided_slice %18 {offsets = [0, 32], sizes = [16, 32], strides = [1, 1]} : vector<16x64xf32> to vector<16x32xf32>
    %130 = vector.extract_strided_slice %25 {offsets = [0, 32], sizes = [16, 32], strides = [1, 1]} : vector<16x64xf32> to vector<16x32xf32>
    %131 = vector.extract_strided_slice %26 {offsets = [0, 32], sizes = [4, 32], strides = [1, 1]} : vector<4x64xf32> to vector<4x32xf32>
    %132 = tpu.transpose %129, [1, 0] : vector<16x32xf32> -> vector<32x16xf32>
    %133 = arith.truncf %128 : vector<16x32xf32> to vector<16x32xbf16>
    %134 = arith.truncf %132 : vector<32x16xf32> to vector<32x16xbf16>
    %cst_48 = arith.constant dense<0.000000e+00> : vector<16x16xf32>
    %135 = tpu.matmul %133, %134, %cst_48 {dimension_numbers = #tpu.dot_dimension_numbers<[1], [0], [0], [1], [0, 0, 1, 1], [], []>} : vector<16x32xbf16>, vector<32x16xbf16>, vector<16x16xf32> -> vector<16x16xf32>
    %136 = tpu.transpose %131, [1, 0] : vector<4x32xf32> -> vector<32x4xf32>
    %137 = arith.truncf %128 : vector<16x32xf32> to vector<16x32xbf16>
    %138 = arith.truncf %136 : vector<32x4xf32> to vector<32x4xbf16>
    %cst_49 = arith.constant dense<0.000000e+00> : vector<16x4xf32>
    %139 = tpu.matmul %137, %138, %cst_49 {dimension_numbers = #tpu.dot_dimension_numbers<[1], [0], [0], [1], [0, 0, 1, 1], [], []>} : vector<16x32xbf16>, vector<32x4xbf16>, vector<16x4xf32> -> vector<16x4xf32>
    %140 = vector.extract_strided_slice %139 {offsets = [0, 0], sizes = [16, 1], strides = [1, 1]} : vector<16x4xf32> to vector<16x1xf32>
    %141 = vector.extract_strided_slice %2 {offsets = [0, 0, 0], sizes = [1, 16, 16], strides = [1, 1, 1]} : vector<4x16x16xf32> to vector<1x16x16xf32>
    %142 = vector.shape_cast %141 : vector<1x16x16xf32> to vector<16x16xf32>
    %143 = vector.broadcast %140 : vector<16x1xf32> to vector<16x16xf32>
    %144 = arith.mulf %143, %142 : vector<16x16xf32>
    %145 = arith.addf %135, %144 : vector<16x16xf32>
    %146 = vector.extract_strided_slice %139 {offsets = [0, 1], sizes = [16, 1], strides = [1, 1]} : vector<16x4xf32> to vector<16x1xf32>
    %147 = vector.extract_strided_slice %2 {offsets = [1, 0, 0], sizes = [1, 16, 16], strides = [1, 1, 1]} : vector<4x16x16xf32> to vector<1x16x16xf32>
    %148 = vector.shape_cast %147 : vector<1x16x16xf32> to vector<16x16xf32>
    %149 = vector.broadcast %146 : vector<16x1xf32> to vector<16x16xf32>
    %150 = arith.mulf %149, %148 : vector<16x16xf32>
    %151 = arith.addf %145, %150 : vector<16x16xf32>
    %152 = vector.extract_strided_slice %139 {offsets = [0, 2], sizes = [16, 1], strides = [1, 1]} : vector<16x4xf32> to vector<16x1xf32>
    %153 = vector.extract_strided_slice %2 {offsets = [2, 0, 0], sizes = [1, 16, 16], strides = [1, 1, 1]} : vector<4x16x16xf32> to vector<1x16x16xf32>
    %154 = vector.shape_cast %153 : vector<1x16x16xf32> to vector<16x16xf32>
    %155 = vector.broadcast %152 : vector<16x1xf32> to vector<16x16xf32>
    %156 = arith.mulf %155, %154 : vector<16x16xf32>
    %157 = arith.addf %151, %156 : vector<16x16xf32>
    %158 = vector.extract_strided_slice %139 {offsets = [0, 3], sizes = [16, 1], strides = [1, 1]} : vector<16x4xf32> to vector<16x1xf32>
    %159 = vector.extract_strided_slice %2 {offsets = [3, 0, 0], sizes = [1, 16, 16], strides = [1, 1, 1]} : vector<4x16x16xf32> to vector<1x16x16xf32>
    %160 = vector.shape_cast %159 : vector<1x16x16xf32> to vector<16x16xf32>
    %161 = vector.broadcast %158 : vector<16x1xf32> to vector<16x16xf32>
    %162 = arith.mulf %161, %160 : vector<16x16xf32>
    %163 = arith.addf %157, %162 : vector<16x16xf32>
    %cst_50 = arith.constant -1.000000e+30 : f32
    %164 = vector.broadcast %cst_50 : f32 to vector<16x16xf32>
    %165 = arith.select %42, %163, %164 : vector<16x16xi1>, vector<16x16xf32>
    %cst_51 = arith.constant dense<0xFF800000> : vector<16xf32>
    %166 = vector.multi_reduction <maximumf>, %165, %cst_51 [1] : vector<16x16xf32> to vector<16xf32>
    %167 = vector.shape_cast %166 : vector<16xf32> to vector<16x1xf32>
    %168 = vector.broadcast %167 : vector<16x1xf32> to vector<16x16xf32>
    %169 = arith.subf %165, %168 : vector<16x16xf32>
    %170 = math.exp %169 : vector<16x16xf32>
    %cst_52 = arith.constant 0.000000e+00 : f32
    %171 = vector.broadcast %cst_52 : f32 to vector<16x16xf32>
    %172 = arith.select %42, %170, %171 : vector<16x16xi1>, vector<16x16xf32>
    %cst_53 = arith.constant dense<0.000000e+00> : vector<16xf32>
    %173 = vector.multi_reduction <add>, %172, %cst_53 [1] : vector<16x16xf32> to vector<16xf32>
    %174 = vector.shape_cast %173 : vector<16xf32> to vector<16x1xf32>
    %cst_54 = arith.constant 1.000000e-30 : f32
    %175 = vector.broadcast %cst_54 : f32 to vector<16x1xf32>
    %176 = arith.maximumf %174, %175 : vector<16x1xf32>
    %177 = tpu.reciprocal %176 {approx = true} : vector<16x1xf32> -> vector<16x1xf32>
    %178 = vector.broadcast %177 : vector<16x1xf32> to vector<16x16xf32>
    %179 = arith.mulf %172, %178 : vector<16x16xf32>
    %180 = arith.truncf %179 : vector<16x16xf32> to vector<16x16xbf16>
    %181 = arith.truncf %130 : vector<16x32xf32> to vector<16x32xbf16>
    %cst_55 = arith.constant dense<0.000000e+00> : vector<16x32xf32>
    %182 = tpu.matmul %180, %181, %cst_55 {dimension_numbers = #tpu.dot_dimension_numbers<[1], [0], [0], [1], [0, 0, 1, 1], [], []>} : vector<16x16xbf16>, vector<16x32xbf16>, vector<16x32xf32> -> vector<16x32xf32>
    %183 = vector.extract_strided_slice %2 {offsets = [0, 0, 0], sizes = [1, 16, 16], strides = [1, 1, 1]} : vector<4x16x16xf32> to vector<1x16x16xf32>
    %184 = vector.shape_cast %183 : vector<1x16x16xf32> to vector<16x16xf32>
    %185 = arith.mulf %179, %184 : vector<16x16xf32>
    %cst_56 = arith.constant dense<0.000000e+00> : vector<16xf32>
    %186 = vector.multi_reduction <add>, %185, %cst_56 [1] : vector<16x16xf32> to vector<16xf32>
    %187 = vector.shape_cast %186 : vector<16xf32> to vector<16x1xf32>
    %188 = vector.extract_strided_slice %2 {offsets = [1, 0, 0], sizes = [1, 16, 16], strides = [1, 1, 1]} : vector<4x16x16xf32> to vector<1x16x16xf32>
    %189 = vector.shape_cast %188 : vector<1x16x16xf32> to vector<16x16xf32>
    %190 = arith.mulf %179, %189 : vector<16x16xf32>
    %cst_57 = arith.constant dense<0.000000e+00> : vector<16xf32>
    %191 = vector.multi_reduction <add>, %190, %cst_57 [1] : vector<16x16xf32> to vector<16xf32>
    %192 = vector.shape_cast %191 : vector<16xf32> to vector<16x1xf32>
    %193 = vector.extract_strided_slice %2 {offsets = [2, 0, 0], sizes = [1, 16, 16], strides = [1, 1, 1]} : vector<4x16x16xf32> to vector<1x16x16xf32>
    %194 = vector.shape_cast %193 : vector<1x16x16xf32> to vector<16x16xf32>
    %195 = arith.mulf %179, %194 : vector<16x16xf32>
    %cst_58 = arith.constant dense<0.000000e+00> : vector<16xf32>
    %196 = vector.multi_reduction <add>, %195, %cst_58 [1] : vector<16x16xf32> to vector<16xf32>
    %197 = vector.shape_cast %196 : vector<16xf32> to vector<16x1xf32>
    %198 = vector.extract_strided_slice %2 {offsets = [3, 0, 0], sizes = [1, 16, 16], strides = [1, 1, 1]} : vector<4x16x16xf32> to vector<1x16x16xf32>
    %199 = vector.shape_cast %198 : vector<1x16x16xf32> to vector<16x16xf32>
    %200 = arith.mulf %179, %199 : vector<16x16xf32>
    %cst_59 = arith.constant dense<0.000000e+00> : vector<16xf32>
    %201 = vector.multi_reduction <add>, %200, %cst_59 [1] : vector<16x16xf32> to vector<16xf32>
    %202 = vector.shape_cast %201 : vector<16xf32> to vector<16x1xf32>
    %203 = tpu.concatenate %187, %192, %197, %202 in 1 : vector<16x1xf32>, vector<16x1xf32>, vector<16x1xf32>, vector<16x1xf32> -> vector<16x4xf32>
    %204 = arith.truncf %203 : vector<16x4xf32> to vector<16x4xbf16>
    %205 = arith.truncf %131 : vector<4x32xf32> to vector<4x32xbf16>
    %cst_60 = arith.constant dense<0.000000e+00> : vector<16x32xf32>
    %206 = tpu.matmul %204, %205, %cst_60 {dimension_numbers = #tpu.dot_dimension_numbers<[1], [0], [0], [1], [0, 0, 1, 1], [], []>} : vector<16x4xbf16>, vector<4x32xbf16>, vector<16x32xf32> -> vector<16x32xf32>
    %207 = arith.addf %182, %206 : vector<16x32xf32>
    %208 = vector.extract_strided_slice %27 {offsets = [32, 0], sizes = [32, 32], strides = [1, 1]} : vector<64x32xf32> to vector<32x32xf32>
    %209 = arith.truncf %207 : vector<16x32xf32> to vector<16x32xbf16>
    %210 = arith.truncf %208 : vector<32x32xf32> to vector<32x32xbf16>
    %cst_61 = arith.constant dense<0.000000e+00> : vector<16x32xf32>
    %211 = tpu.matmul %209, %210, %cst_61 {dimension_numbers = #tpu.dot_dimension_numbers<[1], [0], [0], [1], [0, 0, 1, 1], [], []>} : vector<16x32xbf16>, vector<32x32xbf16>, vector<16x32xf32> -> vector<16x32xf32>
    %212 = arith.addf %127, %211 : vector<16x32xf32>
    %cst_62 = arith.constant 0.000000e+00 : f32
    %213 = vector.broadcast %cst_62 : f32 to vector<16x32xf32>
    %214 = arith.maximumf %212, %213 : vector<16x32xf32>
    %cst_63 = arith.constant dense<0.000000e+00> : vector<16xf32>
    %215 = vector.multi_reduction <add>, %214, %cst_63 [1] : vector<16x32xf32> to vector<16xf32>
    %216 = vector.shape_cast %215 : vector<16xf32> to vector<16x1xf32>
    %cst_64 = arith.constant 3.200000e+01 : f32
    %217 = vector.broadcast %cst_64 : f32 to vector<16x1xf32>
    %218 = arith.divf %216, %217 : vector<16x1xf32>
    %219 = vector.broadcast %218 : vector<16x1xf32> to vector<16x32xf32>
    %220 = arith.subf %214, %219 : vector<16x32xf32>
    %221 = arith.mulf %220, %220 : vector<16x32xf32>
    %cst_65 = arith.constant dense<0.000000e+00> : vector<16xf32>
    %222 = vector.multi_reduction <add>, %221, %cst_65 [1] : vector<16x32xf32> to vector<16xf32>
    %223 = vector.shape_cast %222 : vector<16xf32> to vector<16x1xf32>
    %cst_66 = arith.constant 3.200000e+01 : f32
    %224 = vector.broadcast %cst_66 : f32 to vector<16x1xf32>
    %225 = arith.divf %223, %224 : vector<16x1xf32>
    %cst_67 = arith.constant 9.99999974E-6 : f32
    %226 = vector.broadcast %cst_67 : f32 to vector<16x1xf32>
    %227 = arith.addf %225, %226 : vector<16x1xf32>
    %228 = math.rsqrt %227 : vector<16x1xf32>
    %229 = vector.broadcast %228 : vector<16x1xf32> to vector<16x32xf32>
    %230 = arith.mulf %220, %229 : vector<16x32xf32>
    %c0_68 = arith.constant 0 : index
    %c0_69 = arith.constant 0 : index
    %231 = vector.load %arg14[%c0_68, %c0_69] : memref<1x32xf32, #tpu.memory_space<vmem>>, vector<1x32xf32>
    %232 = vector.broadcast %231 : vector<1x32xf32> to vector<16x32xf32>
    %233 = arith.mulf %230, %232 : vector<16x32xf32>
    %c0_70 = arith.constant 0 : index
    %c0_71 = arith.constant 0 : index
    %234 = vector.load %arg15[%c0_70, %c0_71] : memref<1x32xf32, #tpu.memory_space<vmem>>, vector<1x32xf32>
    %235 = vector.broadcast %234 : vector<1x32xf32> to vector<16x32xf32>
    %236 = arith.addf %233, %235 : vector<16x32xf32>
    %c0_72 = arith.constant 0 : index
    %c0_73 = arith.constant 0 : index
    %237 = vector.load %arg16[%c0_72, %c0_73] : memref<16x32xf32, #tpu.memory_space<vmem>>, vector<16x32xf32>
    tpu.vector_store %arg16[%c0_72, %c0_73], %236 {strides = array<i32>} : memref<16x32xf32, #tpu.memory_space<vmem>>, vector<16x32xf32>,
    return
  }
}

module attributes {stable_mosaic.version = 11 : i64} {
  func.func @_gnn_layer_kernel(%arg0: memref<16x32xf32, #tpu.memory_space<vmem>>, %arg1: memref<16x16xf32, #tpu.memory_space<vmem>>, %arg2: memref<4x16x16xf32, #tpu.memory_space<vmem>>, %arg3: memref<32x64xf32, #tpu.memory_space<vmem>>, %arg4: memref<1x64xf32, #tpu.memory_space<vmem>>, %arg5: memref<32x64xf32, #tpu.memory_space<vmem>>, %arg6: memref<1x64xf32, #tpu.memory_space<vmem>>, %arg7: memref<32x64xf32, #tpu.memory_space<vmem>>, %arg8: memref<1x64xf32, #tpu.memory_space<vmem>>, %arg9: memref<4x64xf32, #tpu.memory_space<vmem>>, %arg10: memref<32x64xf32, #tpu.memory_space<vmem>>, %arg11: memref<1x64xf32, #tpu.memory_space<vmem>>, %arg12: memref<64x32xf32, #tpu.memory_space<vmem>>, %arg13: memref<1x32xf32, #tpu.memory_space<vmem>>, %arg14: memref<1x32xf32, #tpu.memory_space<vmem>>, %arg15: memref<1x32xf32, #tpu.memory_space<vmem>>, %arg16: memref<16x32xf32, #tpu.memory_space<vmem>>) attributes {dimension_semantics = [], scalar_prefetch = 0 : i64, scratch_operands = 0 : i64, tpu.core_type = #tpu.core_type<tc>} {
    %c0 = arith.constant 0 : index
    %c0_0 = arith.constant 0 : index
    %0 = vector.load %arg0[%c0, %c0_0] : memref<16x32xf32, #tpu.memory_space<vmem>>, vector<16x32xf32>
    %c0_1 = arith.constant 0 : index
    %c0_2 = arith.constant 0 : index
    %1 = vector.load %arg1[%c0_1, %c0_2] : memref<16x16xf32, #tpu.memory_space<vmem>>, vector<16x16xf32>
    %c0_3 = arith.constant 0 : index
    %c0_4 = arith.constant 0 : index
    %c0_5 = arith.constant 0 : index
    %2 = vector.load %arg2[%c0_3, %c0_4, %c0_5] : memref<4x16x16xf32, #tpu.memory_space<vmem>>, vector<4x16x16xf32>
    %c0_6 = arith.constant 0 : index
    %c0_7 = arith.constant 0 : index
    %3 = vector.load %arg3[%c0_6, %c0_7] : memref<32x64xf32, #tpu.memory_space<vmem>>, vector<32x64xf32>
    %4 = arith.truncf %0 : vector<16x32xf32> to vector<16x32xbf16>
    %5 = arith.truncf %3 : vector<32x64xf32> to vector<32x64xbf16>
    %cst = arith.constant dense<0.000000e+00> : vector<16x64xf32>
    %6 = tpu.matmul %4, %5, %cst {dimension_numbers = #tpu.dot_dimension_numbers<[1], [0], [0], [1], [0, 0, 1, 1], [], []>} : vector<16x32xbf16>, vector<32x64xbf16>, vector<16x64xf32> -> vector<16x64xf32>
    %c0_8 = arith.constant 0 : index
    %c0_9 = arith.constant 0 : index
    %7 = vector.load %arg4[%c0_8, %c0_9] : memref<1x64xf32, #tpu.memory_space<vmem>>, vector<1x64xf32>
    %8 = vector.broadcast %7 : vector<1x64xf32> to vector<16x64xf32>
    %9 = arith.addf %6, %8 : vector<16x64xf32>
    %cst_10 = arith.constant 0.176776692 : f32
    %10 = vector.broadcast %cst_10 : f32 to vector<16x64xf32>
    %11 = arith.mulf %9, %10 : vector<16x64xf32>
    %c0_11 = arith.constant 0 : index
    %c0_12 = arith.constant 0 : index
    %12 = vector.load %arg5[%c0_11, %c0_12] : memref<32x64xf32, #tpu.memory_space<vmem>>, vector<32x64xf32>
    %13 = arith.truncf %0 : vector<16x32xf32> to vector<16x32xbf16>
    %14 = arith.truncf %12 : vector<32x64xf32> to vector<32x64xbf16>
    %cst_13 = arith.constant dense<0.000000e+00> : vector<16x64xf32>
    %15 = tpu.matmul %13, %14, %cst_13 {dimension_numbers = #tpu.dot_dimension_numbers<[1], [0], [0], [1], [0, 0, 1, 1], [], []>} : vector<16x32xbf16>, vector<32x64xbf16>, vector<16x64xf32> -> vector<16x64xf32>
    %c0_14 = arith.constant 0 : index
    %c0_15 = arith.constant 0 : index
    %16 = vector.load %arg6[%c0_14, %c0_15] : memref<1x64xf32, #tpu.memory_space<vmem>>, vector<1x64xf32>
    %17 = vector.broadcast %16 : vector<1x64xf32> to vector<16x64xf32>
    %18 = arith.addf %15, %17 : vector<16x64xf32>
    %c0_16 = arith.constant 0 : index
    %c0_17 = arith.constant 0 : index
    %19 = vector.load %arg7[%c0_16, %c0_17] : memref<32x64xf32, #tpu.memory_space<vmem>>, vector<32x64xf32>
    %20 = arith.truncf %0 : vector<16x32xf32> to vector<16x32xbf16>
    %21 = arith.truncf %19 : vector<32x64xf32> to vector<32x64xbf16>
    %cst_18 = arith.constant dense<0.000000e+00> : vector<16x64xf32>
    %22 = tpu.matmul %20, %21, %cst_18 {dimension_numbers = #tpu.dot_dimension_numbers<[1], [0], [0], [1], [0, 0, 1, 1], [], []>} : vector<16x32xbf16>, vector<32x64xbf16>, vector<16x64xf32> -> vector<16x64xf32>
    %c0_19 = arith.constant 0 : index
    %c0_20 = arith.constant 0 : index
    %23 = vector.load %arg8[%c0_19, %c0_20] : memref<1x64xf32, #tpu.memory_space<vmem>>, vector<1x64xf32>
    %24 = vector.broadcast %23 : vector<1x64xf32> to vector<16x64xf32>
    %25 = arith.addf %22, %24 : vector<16x64xf32>
    %c0_21 = arith.constant 0 : index
    %c0_22 = arith.constant 0 : index
    %26 = vector.load %arg9[%c0_21, %c0_22] : memref<4x64xf32, #tpu.memory_space<vmem>>, vector<4x64xf32>
    %c0_23 = arith.constant 0 : index
    %c0_24 = arith.constant 0 : index
    %27 = vector.load %arg12[%c0_23, %c0_24] : memref<64x32xf32, #tpu.memory_space<vmem>>, vector<64x32xf32>
    %c0_25 = arith.constant 0 : index
    %c0_26 = arith.constant 0 : index
    %28 = vector.load %arg10[%c0_25, %c0_26] : memref<32x64xf32, #tpu.memory_space<vmem>>, vector<32x64xf32>
    %29 = arith.truncf %0 : vector<16x32xf32> to vector<16x32xbf16>
    %30 = arith.truncf %28 : vector<32x64xf32> to vector<32x64xbf16>
    %cst_27 = arith.constant dense<0.000000e+00> : vector<16x64xf32>
    %31 = tpu.matmul %29, %30, %cst_27 {dimension_numbers = #tpu.dot_dimension_numbers<[1], [0], [0], [1], [0, 0, 1, 1], [], []>} : vector<16x32xbf16>, vector<32x64xbf16>, vector<16x64xf32> -> vector<16x64xf32>
    %c0_28 = arith.constant 0 : index
    %c0_29 = arith.constant 0 : index
    %32 = vector.load %arg11[%c0_28, %c0_29] : memref<1x64xf32, #tpu.memory_space<vmem>>, vector<1x64xf32>
    %33 = vector.broadcast %32 : vector<1x64xf32> to vector<16x64xf32>
    %34 = arith.addf %31, %33 : vector<16x64xf32>
    %35 = arith.truncf %34 : vector<16x64xf32> to vector<16x64xbf16>
    %36 = arith.truncf %27 : vector<64x32xf32> to vector<64x32xbf16>
    %cst_30 = arith.constant dense<0.000000e+00> : vector<16x32xf32>
    %37 = tpu.matmul %35, %36, %cst_30 {dimension_numbers = #tpu.dot_dimension_numbers<[1], [0], [0], [1], [0, 0, 1, 1], [], []>} : vector<16x64xbf16>, vector<64x32xbf16>, vector<16x32xf32> -> vector<16x32xf32>
    %c0_31 = arith.constant 0 : index
    %c0_32 = arith.constant 0 : index
    %38 = vector.load %arg13[%c0_31, %c0_32] : memref<1x32xf32, #tpu.memory_space<vmem>>, vector<1x32xf32>
    %39 = vector.broadcast %38 : vector<1x32xf32> to vector<16x32xf32>
    %40 = arith.addf %37, %39 : vector<16x32xf32>
    %cst_33 = arith.constant 0.000000e+00 : f32
    %41 = vector.broadcast %cst_33 : f32 to vector<16x16xf32>
    %42 = arith.cmpf ogt, %1, %41 : vector<16x16xf32>
    %43 = vector.extract_strided_slice %11 {offsets = [0, 0], sizes = [16, 32], strides = [1, 1]} : vector<16x64xf32> to vector<16x32xf32>
    %44 = vector.extract_strided_slice %18 {offsets = [0, 0], sizes = [16, 32], strides = [1, 1]} : vector<16x64xf32> to vector<16x32xf32>
    %45 = vector.extract_strided_slice %25 {offsets = [0, 0], sizes = [16, 32], strides = [1, 1]} : vector<16x64xf32> to vector<16x32xf32>
    %46 = vector.extract_strided_slice %26 {offsets = [0, 0], sizes = [4, 32], strides = [1, 1]} : vector<4x64xf32> to vector<4x32xf32>
    %47 = tpu.transpose %44, [1, 0] : vector<16x32xf32> -> vector<32x16xf32>
    %48 = arith.truncf %43 : vector<16x32xf32> to vector<16x32xbf16>
    %49 = arith.truncf %47 : vector<32x16xf32> to vector<32x16xbf16>
    %cst_34 = arith.constant dense<0.000000e+00> : vector<16x16xf32>
    %50 = tpu.matmul %48, %49, %cst_34 {dimension_numbers = #tpu.dot_dimension_numbers<[1], [0], [0], [1], [0, 0, 1, 1], [], []>} : vector<16x32xbf16>, vector<32x16xbf16>, vector<16x16xf32> -> vector<16x16xf32>
    %51 = tpu.transpose %46, [1, 0] : vector<4x32xf32> -> vector<32x4xf32>
    %52 = arith.truncf %43 : vector<16x32xf32> to vector<16x32xbf16>
    %53 = arith.truncf %51 : vector<32x4xf32> to vector<32x4xbf16>
    %cst_35 = arith.constant dense<0.000000e+00> : vector<16x4xf32>
    %54 = tpu.matmul %52, %53, %cst_35 {dimension_numbers = #tpu.dot_dimension_numbers<[1], [0], [0], [1], [0, 0, 1, 1], [], []>} : vector<16x32xbf16>, vector<32x4xbf16>, vector<16x4xf32> -> vector<16x4xf32>
    %55 = vector.extract_strided_slice %54 {offsets = [0, 0], sizes = [16, 1], strides = [1, 1]} : vector<16x4xf32> to vector<16x1xf32>
    %56 = vector.extract_strided_slice %2 {offsets = [0, 0, 0], sizes = [1, 16, 16], strides = [1, 1, 1]} : vector<4x16x16xf32> to vector<1x16x16xf32>
    %57 = vector.shape_cast %56 : vector<1x16x16xf32> to vector<16x16xf32>
    %58 = vector.broadcast %55 : vector<16x1xf32> to vector<16x16xf32>
    %59 = arith.mulf %58, %57 : vector<16x16xf32>
    %60 = arith.addf %50, %59 : vector<16x16xf32>
    %61 = vector.extract_strided_slice %54 {offsets = [0, 1], sizes = [16, 1], strides = [1, 1]} : vector<16x4xf32> to vector<16x1xf32>
    %62 = vector.extract_strided_slice %2 {offsets = [1, 0, 0], sizes = [1, 16, 16], strides = [1, 1, 1]} : vector<4x16x16xf32> to vector<1x16x16xf32>
    %63 = vector.shape_cast %62 : vector<1x16x16xf32> to vector<16x16xf32>
    %64 = vector.broadcast %61 : vector<16x1xf32> to vector<16x16xf32>
    %65 = arith.mulf %64, %63 : vector<16x16xf32>
    %66 = arith.addf %60, %65 : vector<16x16xf32>
    %67 = vector.extract_strided_slice %54 {offsets = [0, 2], sizes = [16, 1], strides = [1, 1]} : vector<16x4xf32> to vector<16x1xf32>
    %68 = vector.extract_strided_slice %2 {offsets = [2, 0, 0], sizes = [1, 16, 16], strides = [1, 1, 1]} : vector<4x16x16xf32> to vector<1x16x16xf32>
    %69 = vector.shape_cast %68 : vector<1x16x16xf32> to vector<16x16xf32>
    %70 = vector.broadcast %67 : vector<16x1xf32> to vector<16x16xf32>
    %71 = arith.mulf %70, %69 : vector<16x16xf32>
    %72 = arith.addf %66, %71 : vector<16x16xf32>
    %73 = vector.extract_strided_slice %54 {offsets = [0, 3], sizes = [16, 1], strides = [1, 1]} : vector<16x4xf32> to vector<16x1xf32>
    %74 = vector.extract_strided_slice %2 {offsets = [3, 0, 0], sizes = [1, 16, 16], strides = [1, 1, 1]} : vector<4x16x16xf32> to vector<1x16x16xf32>
    %75 = vector.shape_cast %74 : vector<1x16x16xf32> to vector<16x16xf32>
    %76 = vector.broadcast %73 : vector<16x1xf32> to vector<16x16xf32>
    %77 = arith.mulf %76, %75 : vector<16x16xf32>
    %78 = arith.addf %72, %77 : vector<16x16xf32>
    %cst_36 = arith.constant -1.000000e+30 : f32
    %79 = vector.broadcast %cst_36 : f32 to vector<16x16xf32>
    %80 = arith.select %42, %78, %79 : vector<16x16xi1>, vector<16x16xf32>
    %cst_37 = arith.constant dense<0xFF800000> : vector<16xf32>
    %81 = vector.multi_reduction <maximumf>, %80, %cst_37 [1] : vector<16x16xf32> to vector<16xf32>
    %82 = vector.shape_cast %81 : vector<16xf32> to vector<16x1xf32>
    %83 = vector.broadcast %82 : vector<16x1xf32> to vector<16x16xf32>
    %84 = arith.subf %80, %83 : vector<16x16xf32>
    %85 = math.exp %84 : vector<16x16xf32>
    %cst_38 = arith.constant 0.000000e+00 : f32
    %86 = vector.broadcast %cst_38 : f32 to vector<16x16xf32>
    %87 = arith.select %42, %85, %86 : vector<16x16xi1>, vector<16x16xf32>
    %cst_39 = arith.constant dense<0.000000e+00> : vector<16xf32>
    %88 = vector.multi_reduction <add>, %87, %cst_39 [1] : vector<16x16xf32> to vector<16xf32>
    %89 = vector.shape_cast %88 : vector<16xf32> to vector<16x1xf32>
    %cst_40 = arith.constant 1.000000e-30 : f32
    %90 = vector.broadcast %cst_40 : f32 to vector<16x1xf32>
    %91 = arith.maximumf %89, %90 : vector<16x1xf32>
    %92 = tpu.reciprocal %91 {approx = true} : vector<16x1xf32> -> vector<16x1xf32>
    %93 = vector.broadcast %92 : vector<16x1xf32> to vector<16x16xf32>
    %94 = arith.mulf %87, %93 : vector<16x16xf32>
    %95 = arith.truncf %94 : vector<16x16xf32> to vector<16x16xbf16>
    %96 = arith.truncf %45 : vector<16x32xf32> to vector<16x32xbf16>
    %cst_41 = arith.constant dense<0.000000e+00> : vector<16x32xf32>
    %97 = tpu.matmul %95, %96, %cst_41 {dimension_numbers = #tpu.dot_dimension_numbers<[1], [0], [0], [1], [0, 0, 1, 1], [], []>} : vector<16x16xbf16>, vector<16x32xbf16>, vector<16x32xf32> -> vector<16x32xf32>
    %98 = vector.extract_strided_slice %2 {offsets = [0, 0, 0], sizes = [1, 16, 16], strides = [1, 1, 1]} : vector<4x16x16xf32> to vector<1x16x16xf32>
    %99 = vector.shape_cast %98 : vector<1x16x16xf32> to vector<16x16xf32>
    %100 = arith.mulf %94, %99 : vector<16x16xf32>
    %cst_42 = arith.constant dense<0.000000e+00> : vector<16xf32>
    %101 = vector.multi_reduction <add>, %100, %cst_42 [1] : vector<16x16xf32> to vector<16xf32>
    %102 = vector.shape_cast %101 : vector<16xf32> to vector<16x1xf32>
    %103 = vector.extract_strided_slice %2 {offsets = [1, 0, 0], sizes = [1, 16, 16], strides = [1, 1, 1]} : vector<4x16x16xf32> to vector<1x16x16xf32>
    %104 = vector.shape_cast %103 : vector<1x16x16xf32> to vector<16x16xf32>
    %105 = arith.mulf %94, %104 : vector<16x16xf32>
    %cst_43 = arith.constant dense<0.000000e+00> : vector<16xf32>
    %106 = vector.multi_reduction <add>, %105, %cst_43 [1] : vector<16x16xf32> to vector<16xf32>
    %107 = vector.shape_cast %106 : vector<16xf32> to vector<16x1xf32>
    %108 = vector.extract_strided_slice %2 {offsets = [2, 0, 0], sizes = [1, 16, 16], strides = [1, 1, 1]} : vector<4x16x16xf32> to vector<1x16x16xf32>
    %109 = vector.shape_cast %108 : vector<1x16x16xf32> to vector<16x16xf32>
    %110 = arith.mulf %94, %109 : vector<16x16xf32>
    %cst_44 = arith.constant dense<0.000000e+00> : vector<16xf32>
    %111 = vector.multi_reduction <add>, %110, %cst_44 [1] : vector<16x16xf32> to vector<16xf32>
    %112 = vector.shape_cast %111 : vector<16xf32> to vector<16x1xf32>
    %113 = vector.extract_strided_slice %2 {offsets = [3, 0, 0], sizes = [1, 16, 16], strides = [1, 1, 1]} : vector<4x16x16xf32> to vector<1x16x16xf32>
    %114 = vector.shape_cast %113 : vector<1x16x16xf32> to vector<16x16xf32>
    %115 = arith.mulf %94, %114 : vector<16x16xf32>
    %cst_45 = arith.constant dense<0.000000e+00> : vector<16xf32>
    %116 = vector.multi_reduction <add>, %115, %cst_45 [1] : vector<16x16xf32> to vector<16xf32>
    %117 = vector.shape_cast %116 : vector<16xf32> to vector<16x1xf32>
    %118 = tpu.concatenate %102, %107, %112, %117 in 1 : vector<16x1xf32>, vector<16x1xf32>, vector<16x1xf32>, vector<16x1xf32> -> vector<16x4xf32>
    %119 = arith.truncf %118 : vector<16x4xf32> to vector<16x4xbf16>
    %120 = arith.truncf %46 : vector<4x32xf32> to vector<4x32xbf16>
    %cst_46 = arith.constant dense<0.000000e+00> : vector<16x32xf32>
    %121 = tpu.matmul %119, %120, %cst_46 {dimension_numbers = #tpu.dot_dimension_numbers<[1], [0], [0], [1], [0, 0, 1, 1], [], []>} : vector<16x4xbf16>, vector<4x32xbf16>, vector<16x32xf32> -> vector<16x32xf32>
    %122 = arith.addf %97, %121 : vector<16x32xf32>
    %123 = vector.extract_strided_slice %27 {offsets = [0, 0], sizes = [32, 32], strides = [1, 1]} : vector<64x32xf32> to vector<32x32xf32>
    %124 = arith.truncf %122 : vector<16x32xf32> to vector<16x32xbf16>
    %125 = arith.truncf %123 : vector<32x32xf32> to vector<32x32xbf16>
    %cst_47 = arith.constant dense<0.000000e+00> : vector<16x32xf32>
    %126 = tpu.matmul %124, %125, %cst_47 {dimension_numbers = #tpu.dot_dimension_numbers<[1], [0], [0], [1], [0, 0, 1, 1], [], []>} : vector<16x32xbf16>, vector<32x32xbf16>, vector<16x32xf32> -> vector<16x32xf32>
    %127 = arith.addf %40, %126 : vector<16x32xf32>
    %128 = vector.extract_strided_slice %11 {offsets = [0, 32], sizes = [16, 32], strides = [1, 1]} : vector<16x64xf32> to vector<16x32xf32>
    %129 = vector.extract_strided_slice %18 {offsets = [0, 32], sizes = [16, 32], strides = [1, 1]} : vector<16x64xf32> to vector<16x32xf32>
    %130 = vector.extract_strided_slice %25 {offsets = [0, 32], sizes = [16, 32], strides = [1, 1]} : vector<16x64xf32> to vector<16x32xf32>
    %131 = vector.extract_strided_slice %26 {offsets = [0, 32], sizes = [4, 32], strides = [1, 1]} : vector<4x64xf32> to vector<4x32xf32>
    %132 = tpu.transpose %129, [1, 0] : vector<16x32xf32> -> vector<32x16xf32>
    %133 = arith.truncf %128 : vector<16x32xf32> to vector<16x32xbf16>
    %134 = arith.truncf %132 : vector<32x16xf32> to vector<32x16xbf16>
    %cst_48 = arith.constant dense<0.000000e+00> : vector<16x16xf32>
    %135 = tpu.matmul %133, %134, %cst_48 {dimension_numbers = #tpu.dot_dimension_numbers<[1], [0], [0], [1], [0, 0, 1, 1], [], []>} : vector<16x32xbf16>, vector<32x16xbf16>, vector<16x16xf32> -> vector<16x16xf32>
    %136 = tpu.transpose %131, [1, 0] : vector<4x32xf32> -> vector<32x4xf32>
    %137 = arith.truncf %128 : vector<16x32xf32> to vector<16x32xbf16>
    %138 = arith.truncf %136 : vector<32x4xf32> to vector<32x4xbf16>
    %cst_49 = arith.constant dense<0.000000e+00> : vector<16x4xf32>
    %139 = tpu.matmul %137, %138, %cst_49 {dimension_numbers = #tpu.dot_dimension_numbers<[1], [0], [0], [1], [0, 0, 1, 1], [], []>} : vector<16x32xbf16>, vector<32x4xbf16>, vector<16x4xf32> -> vector<16x4xf32>
    %140 = vector.extract_strided_slice %139 {offsets = [0, 0], sizes = [16, 1], strides = [1, 1]} : vector<16x4xf32> to vector<16x1xf32>
    %141 = vector.extract_strided_slice %2 {offsets = [0, 0, 0], sizes = [1, 16, 16], strides = [1, 1, 1]} : vector<4x16x16xf32> to vector<1x16x16xf32>
    %142 = vector.shape_cast %141 : vector<1x16x16xf32> to vector<16x16xf32>
    %143 = vector.broadcast %140 : vector<16x1xf32> to vector<16x16xf32>
    %144 = arith.mulf %143, %142 : vector<16x16xf32>
    %145 = arith.addf %135, %144 : vector<16x16xf32>
    %146 = vector.extract_strided_slice %139 {offsets = [0, 1], sizes = [16, 1], strides = [1, 1]} : vector<16x4xf32> to vector<16x1xf32>
    %147 = vector.extract_strided_slice %2 {offsets = [1, 0, 0], sizes = [1, 16, 16], strides = [1, 1, 1]} : vector<4x16x16xf32> to vector<1x16x16xf32>
    %148 = vector.shape_cast %147 : vector<1x16x16xf32> to vector<16x16xf32>
    %149 = vector.broadcast %146 : vector<16x1xf32> to vector<16x16xf32>
    %150 = arith.mulf %149, %148 : vector<16x16xf32>
    %151 = arith.addf %145, %150 : vector<16x16xf32>
    %152 = vector.extract_strided_slice %139 {offsets = [0, 2], sizes = [16, 1], strides = [1, 1]} : vector<16x4xf32> to vector<16x1xf32>
    %153 = vector.extract_strided_slice %2 {offsets = [2, 0, 0], sizes = [1, 16, 16], strides = [1, 1, 1]} : vector<4x16x16xf32> to vector<1x16x16xf32>
    %154 = vector.shape_cast %153 : vector<1x16x16xf32> to vector<16x16xf32>
    %155 = vector.broadcast %152 : vector<16x1xf32> to vector<16x16xf32>
    %156 = arith.mulf %155, %154 : vector<16x16xf32>
    %157 = arith.addf %151, %156 : vector<16x16xf32>
    %158 = vector.extract_strided_slice %139 {offsets = [0, 3], sizes = [16, 1], strides = [1, 1]} : vector<16x4xf32> to vector<16x1xf32>
    %159 = vector.extract_strided_slice %2 {offsets = [3, 0, 0], sizes = [1, 16, 16], strides = [1, 1, 1]} : vector<4x16x16xf32> to vector<1x16x16xf32>
    %160 = vector.shape_cast %159 : vector<1x16x16xf32> to vector<16x16xf32>
    %161 = vector.broadcast %158 : vector<16x1xf32> to vector<16x16xf32>
    %162 = arith.mulf %161, %160 : vector<16x16xf32>
    %163 = arith.addf %157, %162 : vector<16x16xf32>
    %cst_50 = arith.constant -1.000000e+30 : f32
    %164 = vector.broadcast %cst_50 : f32 to vector<16x16xf32>
    %165 = arith.select %42, %163, %164 : vector<16x16xi1>, vector<16x16xf32>
    %cst_51 = arith.constant dense<0xFF800000> : vector<16xf32>
    %166 = vector.multi_reduction <maximumf>, %165, %cst_51 [1] : vector<16x16xf32> to vector<16xf32>
    %167 = vector.shape_cast %166 : vector<16xf32> to vector<16x1xf32>
    %168 = vector.broadcast %167 : vector<16x1xf32> to vector<16x16xf32>
    %169 = arith.subf %165, %168 : vector<16x16xf32>
    %170 = math.exp %169 : vector<16x16xf32>
    %cst_52 = arith.constant 0.000000e+00 : f32
    %171 = vector.broadcast %cst_52 : f32 to vector<16x16xf32>
    %172 = arith.select %42, %170, %171 : vector<16x16xi1>, vector<16x16xf32>
    %cst_53 = arith.constant dense<0.000000e+00> : vector<16xf32>
    %173 = vector.multi_reduction <add>, %172, %cst_53 [1] : vector<16x16xf32> to vector<16xf32>
    %174 = vector.shape_cast %173 : vector<16xf32> to vector<16x1xf32>
    %cst_54 = arith.constant 1.000000e-30 : f32
    %175 = vector.broadcast %cst_54 : f32 to vector<16x1xf32>
    %176 = arith.maximumf %174, %175 : vector<16x1xf32>
    %177 = tpu.reciprocal %176 {approx = true} : vector<16x1xf32> -> vector<16x1xf32>
    %178 = vector.broadcast %177 : vector<16x1xf32> to vector<16x16xf32>
    %179 = arith.mulf %172, %178 : vector<16x16xf32>
    %180 = arith.truncf %179 : vector<16x16xf32> to vector<16x16xbf16>
    %181 = arith.truncf %130 : vector<16x32xf32> to vector<16x32xbf16>
    %cst_55 = arith.constant dense<0.000000e+00> : vector<16x32xf32>
    %182 = tpu.matmul %180, %181, %cst_55 {dimension_numbers = #tpu.dot_dimension_numbers<[1], [0], [0], [1], [0, 0, 1, 1], [], []>} : vector<16x16xbf16>, vector<16x32xbf16>, vector<16x32xf32> -> vector<16x32xf32>
    %183 = vector.extract_strided_slice %2 {offsets = [0, 0, 0], sizes = [1, 16, 16], strides = [1, 1, 1]} : vector<4x16x16xf32> to vector<1x16x16xf32>
    %184 = vector.shape_cast %183 : vector<1x16x16xf32> to vector<16x16xf32>
    %185 = arith.mulf %179, %184 : vector<16x16xf32>
    %cst_56 = arith.constant dense<0.000000e+00> : vector<16xf32>
    %186 = vector.multi_reduction <add>, %185, %cst_56 [1] : vector<16x16xf32> to vector<16xf32>
    %187 = vector.shape_cast %186 : vector<16xf32> to vector<16x1xf32>
    %188 = vector.extract_strided_slice %2 {offsets = [1, 0, 0], sizes = [1, 16, 16], strides = [1, 1, 1]} : vector<4x16x16xf32> to vector<1x16x16xf32>
    %189 = vector.shape_cast %188 : vector<1x16x16xf32> to vector<16x16xf32>
    %190 = arith.mulf %179, %189 : vector<16x16xf32>
    %cst_57 = arith.constant dense<0.000000e+00> : vector<16xf32>
    %191 = vector.multi_reduction <add>, %190, %cst_57 [1] : vector<16x16xf32> to vector<16xf32>
    %192 = vector.shape_cast %191 : vector<16xf32> to vector<16x1xf32>
    %193 = vector.extract_strided_slice %2 {offsets = [2, 0, 0], sizes = [1, 16, 16], strides = [1, 1, 1]} : vector<4x16x16xf32> to vector<1x16x16xf32>
    %194 = vector.shape_cast %193 : vector<1x16x16xf32> to vector<16x16xf32>
    %195 = arith.mulf %179, %194 : vector<16x16xf32>
    %cst_58 = arith.constant dense<0.000000e+00> : vector<16xf32>
    %196 = vector.multi_reduction <add>, %195, %cst_58 [1] : vector<16x16xf32> to vector<16xf32>
    %197 = vector.shape_cast %196 : vector<16xf32> to vector<16x1xf32>
    %198 = vector.extract_strided_slice %2 {offsets = [3, 0, 0], sizes = [1, 16, 16], strides = [1, 1, 1]} : vector<4x16x16xf32> to vector<1x16x16xf32>
    %199 = vector.shape_cast %198 : vector<1x16x16xf32> to vector<16x16xf32>
    %200 = arith.mulf %179, %199 : vector<16x16xf32>
    %cst_59 = arith.constant dense<0.000000e+00> : vector<16xf32>
    %201 = vector.multi_reduction <add>, %200, %cst_59 [1] : vector<16x16xf32> to vector<16xf32>
    %202 = vector.shape_cast %201 : vector<16xf32> to vector<16x1xf32>
    %203 = tpu.concatenate %187, %192, %197, %202 in 1 : vector<16x1xf32>, vector<16x1xf32>, vector<16x1xf32>, vector<16x1xf32> -> vector<16x4xf32>
    %204 = arith.truncf %203 : vector<16x4xf32> to vector<16x4xbf16>
    %205 = arith.truncf %131 : vector<4x32xf32> to vector<4x32xbf16>
    %cst_60 = arith.constant dense<0.000000e+00> : vector<16x32xf32>
    %206 = tpu.matmul %204, %205, %cst_60 {dimension_numbers = #tpu.dot_dimension_numbers<[1], [0], [0], [1], [0, 0, 1, 1], [], []>} : vector<16x4xbf16>, vector<4x32xbf16>, vector<16x32xf32> -> vector<16x32xf32>
    %207 = arith.addf %182, %206 : vector<16x32xf32>
    %208 = vector.extract_strided_slice %27 {offsets = [32, 0], sizes = [32, 32], strides = [1, 1]} : vector<64x32xf32> to vector<32x32xf32>
    %209 = arith.truncf %207 : vector<16x32xf32> to vector<16x32xbf16>
    %210 = arith.truncf %208 : vector<32x32xf32> to vector<32x32xbf16>
    %cst_61 = arith.constant dense<0.000000e+00> : vector<16x32xf32>
    %211 = tpu.matmul %209, %210, %cst_61 {dimension_numbers = #tpu.dot_dimension_numbers<[1], [0], [0], [1], [0, 0, 1, 1], [], []>} : vector<16x32xbf16>, vector<32x32xbf16>, vector<16x32xf32> -> vector<16x32xf32>
    %212 = arith.addf %127, %211 : vector<16x32xf32>
    %cst_62 = arith.constant 0.000000e+00 : f32
    %213 = vector.broadcast %cst_62 : f32 to vector<16x32xf32>
    %214 = arith.maximumf %212, %213 : vector<16x32xf32>
    %cst_63 = arith.constant dense<0.000000e+00> : vector<16xf32>
    %215 = vector.multi_reduction <add>, %214, %cst_63 [1] : vector<16x32xf32> to vector<16xf32>
    %216 = vector.shape_cast %215 : vector<16xf32> to vector<16x1xf32>
    %cst_64 = arith.constant 3.200000e+01 : f32
    %217 = vector.broadcast %cst_64 : f32 to vector<16x1xf32>
    %218 = arith.divf %216, %217 : vector<16x1xf32>
    %219 = vector.broadcast %218 : vector<16x1xf32> to vector<16x32xf32>
    %220 = arith.subf %214, %219 : vector<16x32xf32>
    %221 = arith.mulf %220, %220 : vector<16x32xf32>
    %cst_65 = arith.constant dense<0.000000e+00> : vector<16xf32>
    %222 = vector.multi_reduction <add>, %221, %cst_65 [1] : vector<16x32xf32> to vector<16xf32>
    %223 = vector.shape_cast %222 : vector<16xf32> to vector<16x1xf32>
    %cst_66 = arith.constant 3.200000e+01 : f32
    %224 = vector.broadcast %cst_66 : f32 to vector<16x1xf32>
    %225 = arith.divf %223, %224 : vector<16x1xf32>
    %cst_67 = arith.constant 9.99999974E-6 : f32
    %226 = vector.broadcast %cst_67 : f32 to vector<16x1xf32>
    %227 = arith.addf %225, %226 : vector<16x1xf32>
    %228 = math.rsqrt %227 : vector<16x1xf32>
    %229 = vector.broadcast %228 : vector<16x1xf32> to vector<16x32xf32>
    %230 = arith.mulf %220, %229 : vector<16x32xf32>
    %c0_68 = arith.constant 0 : index
    %c0_69 = arith.constant 0 : index
    %231 = vector.load %arg14[%c0_68, %c0_69] : memref<1x32xf32, #tpu.memory_space<vmem>>, vector<1x32xf32>
    %232 = vector.broadcast %231 : vector<1x32xf32> to vector<16x32xf32>
    %233 = arith.mulf %230, %232 : vector<16x32xf32>
    %c0_70 = arith.constant 0 : index
    %c0_71 = arith.constant 0 : index
    %234 = vector.load %arg15[%c0_70, %c0_71] : memref<1x32xf32, #tpu.memory_space<vmem>>, vector<1x32xf32>
    %235 = vector.broadcast %234 : vector<1x32xf32> to vector<16x32xf32>
    %236 = arith.addf %233, %235 : vector<16x32xf32>
    %c0_72 = arith.constant 0 : index
    %c0_73 = arith.constant 0 : index
    %237 = vector.load %arg16[%c0_72, %c0_73] : memref<16x32xf32, #tpu.memory_space<vmem>>, vector<16x32xf32>
    tpu.vector_store %arg16[%c0_72, %c0_73], %236 {strides = array<i32>} : memref<16x32xf32, #tpu.memory_space<vmem>>, vector<16x32xf32>,
    return
  }
}

module attributes {stable_mosaic.version = 11 : i64} {
  func.func @_pool_head_kernel(%arg0: memref<8x32xf32, #tpu.memory_space<vmem>>, %arg1: memref<2x8xf32, #tpu.memory_space<vmem>>, %arg2: memref<2x1xf32, #tpu.memory_space<vmem>>, %arg3: memref<2x1xf32, #tpu.memory_space<vmem>>, %arg4: memref<32x1xf32, #tpu.memory_space<vmem>>, %arg5: memref<1x1xf32, #tpu.memory_space<vmem>>, %arg6: memref<34x64xf32, #tpu.memory_space<vmem>>, %arg7: memref<1x64xf32, #tpu.memory_space<vmem>>, %arg8: memref<64x16xf32, #tpu.memory_space<vmem>>, %arg9: memref<1x16xf32, #tpu.memory_space<vmem>>, %arg10: memref<16x1xf32, #tpu.memory_space<vmem>>, %arg11: memref<1x1xf32, #tpu.memory_space<vmem>>, %arg12: memref<2x1xf32, #tpu.memory_space<vmem>>) attributes {dimension_semantics = [], scalar_prefetch = 0 : i64, scratch_operands = 0 : i64, tpu.core_type = #tpu.core_type<tc>} {
    %c0 = arith.constant 0 : index
    %c0_0 = arith.constant 0 : index
    %0 = vector.load %arg0[%c0, %c0_0] : memref<8x32xf32, #tpu.memory_space<vmem>>, vector<8x32xf32>
    %c0_1 = arith.constant 0 : index
    %c0_2 = arith.constant 0 : index
    %1 = vector.load %arg4[%c0_1, %c0_2] : memref<32x1xf32, #tpu.memory_space<vmem>>, vector<32x1xf32>
    %cst = arith.constant dense<0.000000e+00> : vector<8x1xf32>
    %2 = tpu.matmul %0, %1, %cst {dimension_numbers = #tpu.dot_dimension_numbers<[1], [0], [0], [1], [0, 0, 1, 1], [], []>} : vector<8x32xf32>, vector<32x1xf32>, vector<8x1xf32> -> vector<8x1xf32>
    %c0_3 = arith.constant 0 : index
    %c0_4 = arith.constant 0 : index
    %3 = vector.load %arg5[%c0_3, %c0_4] : memref<1x1xf32, #tpu.memory_space<vmem>>, vector<1x1xf32>
    %4 = vector.broadcast %3 : vector<1x1xf32> to vector<8x1xf32>
    %5 = arith.addf %2, %4 : vector<8x1xf32>
    %6 = tpu.transpose %5, [1, 0] : vector<8x1xf32> -> vector<1x8xf32>
    %c0_5 = arith.constant 0 : index
    %c0_6 = arith.constant 0 : index
    %7 = vector.load %arg1[%c0_5, %c0_6] : memref<2x8xf32, #tpu.memory_space<vmem>>, vector<2x8xf32>
    %cst_7 = arith.constant 0.000000e+00 : f32
    %8 = vector.broadcast %cst_7 : f32 to vector<2x8xf32>
    %9 = arith.cmpf ogt, %7, %8 : vector<2x8xf32>
    %cst_8 = arith.constant -1.000000e+30 : f32
    %10 = vector.shape_cast %6 : vector<1x8xf32> to vector<1x8xf32>
    %11 = vector.broadcast %10 : vector<1x8xf32> to vector<2x8xf32>
    %12 = vector.broadcast %cst_8 : f32 to vector<2x8xf32>
    %13 = arith.select %9, %11, %12 : vector<2x8xi1>, vector<2x8xf32>
    %cst_9 = arith.constant dense<0xFF800000> : vector<2xf32>
    %14 = vector.multi_reduction <maximumf>, %13, %cst_9 [1] : vector<2x8xf32> to vector<2xf32>
    %15 = vector.shape_cast %14 : vector<2xf32> to vector<2x1xf32>
    %cst_10 = arith.constant 0.000000e+00 : f32
    %16 = vector.broadcast %cst_10 : f32 to vector<2x8xf32>
    %17 = arith.cmpf ogt, %7, %16 : vector<2x8xf32>
    %18 = vector.broadcast %6 : vector<1x8xf32> to vector<2x8xf32>
    %19 = vector.broadcast %15 : vector<2x1xf32> to vector<2x8xf32>
    %20 = arith.subf %18, %19 : vector<2x8xf32>
    %21 = math.exp %20 : vector<2x8xf32>
    %cst_11 = arith.constant 0.000000e+00 : f32
    %22 = vector.broadcast %cst_11 : f32 to vector<2x8xf32>
    %23 = arith.select %17, %21, %22 : vector<2x8xi1>, vector<2x8xf32>
    %cst_12 = arith.constant dense<0.000000e+00> : vector<2xf32>
    %24 = vector.multi_reduction <add>, %23, %cst_12 [1] : vector<2x8xf32> to vector<2xf32>
    %25 = vector.shape_cast %24 : vector<2xf32> to vector<2x1xf32>
    %cst_13 = arith.constant 1.000000e-30 : f32
    %26 = vector.broadcast %cst_13 : f32 to vector<2x1xf32>
    %27 = arith.maximumf %25, %26 : vector<2x1xf32>
    %28 = tpu.reciprocal %27 {approx = true} : vector<2x1xf32> -> vector<2x1xf32>
    %29 = vector.broadcast %28 : vector<2x1xf32> to vector<2x8xf32>
    %30 = arith.mulf %23, %29 : vector<2x8xf32>
    %cst_14 = arith.constant dense<0.000000e+00> : vector<2x32xf32>
    %31 = tpu.matmul %30, %0, %cst_14 {dimension_numbers = #tpu.dot_dimension_numbers<[1], [0], [0], [1], [0, 0, 1, 1], [], []>} : vector<2x8xf32>, vector<8x32xf32>, vector<2x32xf32> -> vector<2x32xf32>
    %c0_15 = arith.constant 0 : index
    %c0_16 = arith.constant 0 : index
    %32 = vector.load %arg6[%c0_15, %c0_16] : memref<34x64xf32, #tpu.memory_space<vmem>>, vector<34x64xf32>
    %33 = vector.extract_strided_slice %32 {offsets = [0, 0], sizes = [32, 64], strides = [1, 1]} : vector<34x64xf32> to vector<32x64xf32>
    %cst_17 = arith.constant dense<0.000000e+00> : vector<2x64xf32>
    %34 = tpu.matmul %31, %33, %cst_17 {dimension_numbers = #tpu.dot_dimension_numbers<[1], [0], [0], [1], [0, 0, 1, 1], [], []>} : vector<2x32xf32>, vector<32x64xf32>, vector<2x64xf32> -> vector<2x64xf32>
    %c0_18 = arith.constant 0 : index
    %c0_19 = arith.constant 0 : index
    %35 = vector.load %arg2[%c0_18, %c0_19] : memref<2x1xf32, #tpu.memory_space<vmem>>, vector<2x1xf32>
    %36 = vector.extract_strided_slice %32 {offsets = [32, 0], sizes = [1, 64], strides = [1, 1]} : vector<34x64xf32> to vector<1x64xf32>
    %37 = vector.broadcast %35 : vector<2x1xf32> to vector<2x64xf32>
    %38 = vector.broadcast %36 : vector<1x64xf32> to vector<2x64xf32>
    %39 = arith.mulf %37, %38 : vector<2x64xf32>
    %40 = arith.addf %34, %39 : vector<2x64xf32>
    %c0_20 = arith.constant 0 : index
    %c0_21 = arith.constant 0 : index
    %41 = vector.load %arg3[%c0_20, %c0_21] : memref<2x1xf32, #tpu.memory_space<vmem>>, vector<2x1xf32>
    %42 = vector.extract_strided_slice %32 {offsets = [33, 0], sizes = [1, 64], strides = [1, 1]} : vector<34x64xf32> to vector<1x64xf32>
    %43 = vector.broadcast %41 : vector<2x1xf32> to vector<2x64xf32>
    %44 = vector.broadcast %42 : vector<1x64xf32> to vector<2x64xf32>
    %45 = arith.mulf %43, %44 : vector<2x64xf32>
    %46 = arith.addf %40, %45 : vector<2x64xf32>
    %c0_22 = arith.constant 0 : index
    %c0_23 = arith.constant 0 : index
    %47 = vector.load %arg7[%c0_22, %c0_23] : memref<1x64xf32, #tpu.memory_space<vmem>>, vector<1x64xf32>
    %48 = vector.broadcast %47 : vector<1x64xf32> to vector<2x64xf32>
    %49 = arith.addf %46, %48 : vector<2x64xf32>
    %cst_24 = arith.constant 0.000000e+00 : f32
    %50 = vector.broadcast %cst_24 : f32 to vector<2x64xf32>
    %51 = arith.maximumf %49, %50 : vector<2x64xf32>
    %c0_25 = arith.constant 0 : index
    %c0_26 = arith.constant 0 : index
    %52 = vector.load %arg8[%c0_25, %c0_26] : memref<64x16xf32, #tpu.memory_space<vmem>>, vector<64x16xf32>
    %c0_27 = arith.constant 0 : index
    %c0_28 = arith.constant 0 : index
    %53 = vector.load %arg9[%c0_27, %c0_28] : memref<1x16xf32, #tpu.memory_space<vmem>>, vector<1x16xf32>
    %cst_29 = arith.constant dense<0.000000e+00> : vector<2x16xf32>
    %54 = tpu.matmul %51, %52, %cst_29 {dimension_numbers = #tpu.dot_dimension_numbers<[1], [0], [0], [1], [0, 0, 1, 1], [], []>} : vector<2x64xf32>, vector<64x16xf32>, vector<2x16xf32> -> vector<2x16xf32>
    %55 = vector.broadcast %53 : vector<1x16xf32> to vector<2x16xf32>
    %56 = arith.addf %54, %55 : vector<2x16xf32>
    %cst_30 = arith.constant 0.000000e+00 : f32
    %57 = vector.broadcast %cst_30 : f32 to vector<2x16xf32>
    %58 = arith.maximumf %56, %57 : vector<2x16xf32>
    %c0_31 = arith.constant 0 : index
    %c0_32 = arith.constant 0 : index
    %59 = vector.load %arg10[%c0_31, %c0_32] : memref<16x1xf32, #tpu.memory_space<vmem>>, vector<16x1xf32>
    %cst_33 = arith.constant dense<0.000000e+00> : vector<2x1xf32>
    %60 = tpu.matmul %58, %59, %cst_33 {dimension_numbers = #tpu.dot_dimension_numbers<[1], [0], [0], [1], [0, 0, 1, 1], [], []>} : vector<2x16xf32>, vector<16x1xf32>, vector<2x1xf32> -> vector<2x1xf32>
    %c0_34 = arith.constant 0 : index
    %c0_35 = arith.constant 0 : index
    %61 = vector.load %arg11[%c0_34, %c0_35] : memref<1x1xf32, #tpu.memory_space<vmem>>, vector<1x1xf32>
    %62 = vector.broadcast %61 : vector<1x1xf32> to vector<2x1xf32>
    %63 = arith.addf %60, %62 : vector<2x1xf32>
    %c0_36 = arith.constant 0 : index
    %c0_37 = arith.constant 0 : index
    %64 = vector.load %arg12[%c0_36, %c0_37] : memref<2x1xf32, #tpu.memory_space<vmem>>, vector<2x1xf32>
    tpu.vector_store %arg12[%c0_36, %c0_37], %63 {strides = array<i32>} : memref<2x1xf32, #tpu.memory_space<vmem>>, vector<2x1xf32>,
    return
  }
}

</mosaic_0001>

<llo_original>
// kernel: fwd.3
$region0: #{fwd.3}
  #allocation0 [shape = 'u32[]', space=smem, size = 0x4, offset = 0x4, fixed_abs, tag = 'smem constant byte address 0x4 - core index']
  #allocation1 [shape = 'u32[144,128]{1,0:T(1,128)}', space=vmem, size = 0x12000, scoped, tag = 'internal scratch']
  %s0 = inlined_call_operand.vmem [shape: f32[16,16], index: 0, kind: input, shape index: {}]
  %s1 = inlined_call_operand.vmem [shape: f32[16,16], index: 1, kind: input, shape index: {}]
  %s2 = inlined_call_operand.vmem [shape: f32[4,16,16], index: 2, kind: input, shape index: {}]
  %s3 = inlined_call_operand.vmem [shape: f32[16,64], index: 3, kind: input, shape index: {}]
  %s4 = inlined_call_operand.vmem [shape: f32[1,64], index: 4, kind: input, shape index: {}]
  %s5 = inlined_call_operand.vmem [shape: f32[16,64], index: 5, kind: input, shape index: {}]
  %s6 = inlined_call_operand.vmem [shape: f32[1,64], index: 6, kind: input, shape index: {}]
  %s7 = inlined_call_operand.vmem [shape: f32[16,64], index: 7, kind: input, shape index: {}]
  %s8 = inlined_call_operand.vmem [shape: f32[1,64], index: 8, kind: input, shape index: {}]
  %s9 = inlined_call_operand.vmem [shape: f32[4,64], index: 9, kind: input, shape index: {}]
  %s10 = inlined_call_operand.vmem [shape: f32[16,64], index: 10, kind: input, shape index: {}]
  %s11 = inlined_call_operand.vmem [shape: f32[1,64], index: 11, kind: input, shape index: {}]
  %s12 = inlined_call_operand.vmem [shape: f32[64,32], index: 12, kind: input, shape index: {}]
  %s13 = inlined_call_operand.vmem [shape: f32[1,32], index: 13, kind: input, shape index: {}]
  %s14 = inlined_call_operand.vmem [shape: f32[1,32], index: 14, kind: input, shape index: {}]
  %s15 = inlined_call_operand.vmem [shape: f32[1,32], index: 15, kind: input, shape index: {}]
  %s16 = inlined_call_operand.vmem [shape: f32[16,32], index: 16, kind: output, shape index: {}]
  %s17 = sld [smem:[#allocation0]]
  $region74: #{fwd.3} parent=0
    _
  %s19 = ssub.s32 1, %s17
  %s20 = scalar_select 0, %s19, %s17
  // Predicated region
  $region2: #{fwd.3} parent=0 // pred_check
    _
  $region3: #{fwd.3} parent=0 // pred_check_branch
    %22 = sbr.rel (0) target = $region5
  $region4: #{fwd.3} parent=0 // pred_region
    _
  $region5: #{fwd.3} parent=0 // pred_fallthru
    _
  // Predicated region
  $region6: #{fwd.3} parent=0 // pred_check
    _
  $region7: #{fwd.3} parent=0 // pred_check_branch
    %24 = sbr.rel (0) target = $region9
  $region8: #{fwd.3} parent=0 // pred_region
    _
  $region9: #{fwd.3} parent=0 // pred_fallthru
    _
  // Predicated region
  $region10: #{fwd.3} parent=0 // pred_check
    _
  $region11: #{fwd.3} parent=0 // pred_check_branch
    %26 = sbr.rel (0) target = $region13
  $region12: #{fwd.3} parent=0 // pred_region
    _
  $region13: #{fwd.3} parent=0 // pred_fallthru
    _
  // Predicated region
  $region14: #{fwd.3} parent=0 // pred_check
    _
  $region15: #{fwd.3} parent=0 // pred_check_branch
    %28 = sbr.rel (0) target = $region17
  $region16: #{fwd.3} parent=0 // pred_region
    _
  $region17: #{fwd.3} parent=0 // pred_fallthru
    _
  // Predicated region
  $region18: #{fwd.3} parent=0 // pred_check
    _
  $region19: #{fwd.3} parent=0 // pred_check_branch
    %30 = sbr.rel (0) target = $region21
  $region20: #{fwd.3} parent=0 // pred_region
    _
  $region21: #{fwd.3} parent=0 // pred_fallthru
    _
  // Predicated region
  $region22: #{fwd.3} parent=0 // pred_check
    _
  $region23: #{fwd.3} parent=0 // pred_check_branch
    %32 = sbr.rel (0) target = $region25
  $region24: #{fwd.3} parent=0 // pred_region
    _
  $region25: #{fwd.3} parent=0 // pred_fallthru
    _
  // Predicated region
  $region26: #{fwd.3} parent=0 // pred_check
    _
  $region27: #{fwd.3} parent=0 // pred_check_branch
    %34 = sbr.rel (0) target = $region29
  $region28: #{fwd.3} parent=0 // pred_region
    _
  $region29: #{fwd.3} parent=0 // pred_fallthru
    _
  // Predicated region
  $region30: #{fwd.3} parent=0 // pred_check
    _
  $region31: #{fwd.3} parent=0 // pred_check_branch
    %36 = sbr.rel (0) target = $region33
  $region32: #{fwd.3} parent=0 // pred_region
    _
  $region33: #{fwd.3} parent=0 // pred_fallthru
    _
  // Predicated region
  $region34: #{fwd.3} parent=0 // pred_check
    _
  $region35: #{fwd.3} parent=0 // pred_check_branch
    %38 = sbr.rel (0) target = $region37
  $region36: #{fwd.3} parent=0 // pred_region
    _
  $region37: #{fwd.3} parent=0 // pred_fallthru
    _
  // Predicated region
  $region38: #{fwd.3} parent=0 // pred_check
    _
  $region39: #{fwd.3} parent=0 // pred_check_branch
    %40 = sbr.rel (0) target = $region41
  $region40: #{fwd.3} parent=0 // pred_region
    _
  $region41: #{fwd.3} parent=0 // pred_fallthru
    _
  // Predicated region
  $region42: #{fwd.3} parent=0 // pred_check
    _
  $region43: #{fwd.3} parent=0 // pred_check_branch
    %42 = sbr.rel (0) target = $region45
  $region44: #{fwd.3} parent=0 // pred_region
    _
  $region45: #{fwd.3} parent=0 // pred_fallthru
    _
  // Predicated region
  $region46: #{fwd.3} parent=0 // pred_check
    _
  $region47: #{fwd.3} parent=0 // pred_check_branch
    %44 = sbr.rel (0) target = $region49
  $region48: #{fwd.3} parent=0 // pred_region
    _
  $region49: #{fwd.3} parent=0 // pred_fallthru
    _
  // Predicated region
  $region50: #{fwd.3} parent=0 // pred_check
    _
  $region51: #{fwd.3} parent=0 // pred_check_branch
    %46 = sbr.rel (0) target = $region53
  $region52: #{fwd.3} parent=0 // pred_region
    _
  $region53: #{fwd.3} parent=0 // pred_fallthru
    _
  // Predicated region
  $region54: #{fwd.3} parent=0 // pred_check
    _
  $region55: #{fwd.3} parent=0 // pred_check_branch
    %48 = sbr.rel (0) target = $region57
  $region56: #{fwd.3} parent=0 // pred_region
    _
  $region57: #{fwd.3} parent=0 // pred_fallthru
    _
  // Predicated region
  $region58: #{fwd.3} parent=0 // pred_check
    _
  $region59: #{fwd.3} parent=0 // pred_check_branch
    %50 = sbr.rel (0) target = $region61
  $region60: #{fwd.3} parent=0 // pred_region
    _
  $region61: #{fwd.3} parent=0 // pred_fallthru
    _
  // Predicated region
  $region62: #{fwd.3} parent=0 // pred_check
    _
  $region63: #{fwd.3} parent=0 // pred_check_branch
    %52 = sbr.rel (0) target = $region65
  $region64: #{fwd.3} parent=0 // pred_region
    _
  $region65: #{fwd.3} parent=0 // pred_fallthru
    _
  %v54 = vld [vmem:[%s0] sm:$0xff]
  %v55 = vld [vmem:[%s0 + $0x8] sm:$0xff]
  %v56 = vld [vmem:[%s1] sm:$0xff]
  %v57 = vld [vmem:[%s1 + $0x8] sm:$0xff]
  %v58 = vld [vmem:[%s2] sm:$0xff]
  %v59 = vld [vmem:[%s2 + $0x8] sm:$0xff]
  %v60 = vld [vmem:[%s2 + $0x10] sm:$0xff]
  %v61 = vld [vmem:[%s2 + $0x18] sm:$0xff]
  %v62 = vld [vmem:[%s2 + $0x20] sm:$0xff]
  %v63 = vld [vmem:[%s2 + $0x28] sm:$0xff]
  %v64 = vld [vmem:[%s2 + $0x30] sm:$0xff]
  %v65 = vld [vmem:[%s2 + $0x38] sm:$0xff]
  %v66 = vld [vmem:[%s3] sm:$0xff]
  %v67 = vld [vmem:[%s3 + $0x8] sm:$0xff]
  %v68 = vpack.c.bf16 %v55, %v54
  %v69 = vpack.c.bf16 %v67, %v66
  %v70 = vld [vmem:[%s4] sm:$0x1]
  %v72 = vlaneseq
  %v73 = vshrl.u32 %v72, 7
  %v74 = vsub.s32 0, %v73
  %v75 = vrot.slane %v70, %v74
  %vm77 = vcmask 130048
  %v79 = vsel %vm77, %v68, 0
  %81 = vmatprep.subr.bf16.mxu0 0
  %82 = vmatpush1.bf16.msra.mxu0 %v69
  %83 = vmatprep.subr.bf16.mxu0 0
  %84 = vmatpush1.bf16.msra.mxu0 0
  %85 = vmatprep.subr.bf16.mxu0 0
  %86 = vmatpush1.bf16.msra.mxu0 0
  %87 = vmatprep.subr.bf16.mxu0 0
  %88 = vmatpush1.bf16.msra.mxu0 0
  %89 = vmatprep.subr.bf16.mxu0 0
  %90 = vmatpush1.bf16.msra.mxu0 0
  %91 = vmatprep.subr.bf16.mxu0 0
  %92 = vmatpush1.bf16.msra.mxu0 0
  %93 = vmatprep.subr.bf16.mxu0 0
  %94 = vmatpush1.bf16.msra.mxu0 0
  %95 = vmatprep.subr.bf16.mxu0 0
  %96 = vmatpush1.bf16.msra.mxu0 0
  %97 = vmatprep.subr.bf16.mxu0 0
  %98 = vmatpush1.bf16.msra.mxu0 0
  %99 = vmatprep.subr.bf16.mxu0 0
  %100 = vmatpush1.bf16.msra.mxu0 0
  %101 = vmatprep.subr.bf16.mxu0 0
  %102 = vmatpush1.bf16.msra.mxu0 0
  %103 = vmatprep.subr.bf16.mxu0 0
  %104 = vmatpush1.bf16.msra.mxu0 0
  %105 = vmatprep.subr.bf16.mxu0 0
  %106 = vmatpush1.bf16.msra.mxu0 0
  %107 = vmatprep.subr.bf16.mxu0 0
  %108 = vmatpush1.bf16.msra.mxu0 0
  %109 = vmatprep.subr.bf16.mxu0 0
  %110 = vmatpush1.bf16.msra.mxu0 0
  %111 = vmatprep.subr.bf16.mxu0 0
  %112 = vmatpush1.bf16.msra.mxu0 0
  %113 = vmatprep.mubr.bf16.mxu0 0
  %114 = vmatmul.mubr.bf16.gmra.mrb[0].mxu0 %v79
  %v115 = vpop.f32.mrb[0].mxu0
  %v116 = vadd.f32 %v75, %v115
  %v117 = vpop.f32.mrb[0].mxu0
  %v118 = vpop.f32.mrb[0].mxu0
  %v119 = vadd.f32 %v75, %v118
  %v120 = vpop.f32.mrb[0].mxu0
  %121 = vdwg.mxu0
  %v122 = vmul.f32 %v116, 0.17677669
  %v123 = vmul.f32 %v119, 0.17677669
  %v124 = vld [vmem:[%s5] sm:$0xff]
  %v125 = vld [vmem:[%s5 + $0x8] sm:$0xff]
  %v126 = vpack.c.bf16 %v125, %v124
  %v127 = vld [vmem:[%s6] sm:$0x1]
  %v129 = vlaneseq
  %v130 = vshrl.u32 %v129, 7
  %v131 = vsub.s32 0, %v130
  %v132 = vrot.slane %v127, %v131
  %134 = vmatprep.subr.bf16.mxu0 0
  %135 = vmatpush1.bf16.msra.mxu0 %v126
  %136 = vmatprep.subr.bf16.mxu0 0
  %137 = vmatpush1.bf16.msra.mxu0 0
  %138 = vmatprep.subr.bf16.mxu0 0
  %139 = vmatpush1.bf16.msra.mxu0 0
  %140 = vmatprep.subr.bf16.mxu0 0
  %141 = vmatpush1.bf16.msra.mxu0 0
  %142 = vmatprep.subr.bf16.mxu0 0
  %143 = vmatpush1.bf16.msra.mxu0 0
  %144 = vmatprep.subr.bf16.mxu0 0
  %145 = vmatpush1.bf16.msra.mxu0 0
  %146 = vmatprep.subr.bf16.mxu0 0
  %147 = vmatpush1.bf16.msra.mxu0 0
  %148 = vmatprep.subr.bf16.mxu0 0
  %149 = vmatpush1.bf16.msra.mxu0 0
  %150 = vmatprep.subr.bf16.mxu0 0
  %151 = vmatpush1.bf16.msra.mxu0 0
  %152 = vmatprep.subr.bf16.mxu0 0
  %153 = vmatpush1.bf16.msra.mxu0 0
  %154 = vmatprep.subr.bf16.mxu0 0
  %155 = vmatpush1.bf16.msra.mxu0 0
  %156 = vmatprep.subr.bf16.mxu0 0
  %157 = vmatpush1.bf16.msra.mxu0 0
  %158 = vmatprep.subr.bf16.mxu0 0
  %159 = vmatpush1.bf16.msra.mxu0 0
  %160 = vmatprep.subr.bf16.mxu0 0
  %161 = vmatpush1.bf16.msra.mxu0 0
  %162 = vmatprep.subr.bf16.mxu0 0
  %163 = vmatpush1.bf16.msra.mxu0 0
  %164 = vmatprep.subr.bf16.mxu0 0
  %165 = vmatpush1.bf16.msra.mxu0 0
  %166 = vmatprep.mubr.bf16.mxu0 0
  %167 = vmatmul.mubr.bf16.gmra.mrb[0].mxu0 %v79
  %v168 = vpop.f32.mrb[0].mxu0
  %v169 = vadd.f32 %v132, %v168
  %v170 = vpop.f32.mrb[0].mxu0
  %v171 = vpop.f32.mrb[0].mxu0
  %v172 = vadd.f32 %v132, %v171
  %v173 = vpop.f32.mrb[0].mxu0
  %174 = vdwg.mxu0
  %v175 = vld [vmem:[%s7] sm:$0xff]
  %v176 = vld [vmem:[%s7 + $0x8] sm:$0xff]
  %v177 = vpack.c.bf16 %v176, %v175
  %v178 = vld [vmem:[%s8] sm:$0x1]
  %v180 = vlaneseq
  %v181 = vshrl.u32 %v180, 7
  %v182 = vsub.s32 0, %v181
  %v183 = vrot.slane %v178, %v182
  %185 = vmatprep.subr.bf16.mxu0 0
  %186 = vmatpush1.bf16.msra.mxu0 %v177
  %187 = vmatprep.subr.bf16.mxu0 0
  %188 = vmatpush1.bf16.msra.mxu0 0
  %189 = vmatprep.subr.bf16.mxu0 0
  %190 = vmatpush1.bf16.msra.mxu0 0
  %191 = vmatprep.subr.bf16.mxu0 0
  %192 = vmatpush1.bf16.msra.mxu0 0
  %193 = vmatprep.subr.bf16.mxu0 0
  %194 = vmatpush1.bf16.msra.mxu0 0
  %195 = vmatprep.subr.bf16.mxu0 0
  %196 = vmatpush1.bf16.msra.mxu0 0
  %197 = vmatprep.subr.bf16.mxu0 0
  %198 = vmatpush1.bf16.msra.mxu0 0
  %199 = vmatprep.subr.bf16.mxu0 0
  %200 = vmatpush1.bf16.msra.mxu0 0
  %201 = vmatprep.subr.bf16.mxu0 0
  %202 = vmatpush1.bf16.msra.mxu0 0
  %203 = vmatprep.subr.bf16.mxu0 0
  %204 = vmatpush1.bf16.msra.mxu0 0
  %205 = vmatprep.subr.bf16.mxu0 0
  %206 = vmatpush1.bf16.msra.mxu0 0
  %207 = vmatprep.subr.bf16.mxu0 0
  %208 = vmatpush1.bf16.msra.mxu0 0
  %209 = vmatprep.subr.bf16.mxu0 0
  %210 = vmatpush1.bf16.msra.mxu0 0
  %211 = vmatprep.subr.bf16.mxu0 0
  %212 = vmatpush1.bf16.msra.mxu0 0
  %213 = vmatprep.subr.bf16.mxu0 0
  %214 = vmatpush1.bf16.msra.mxu0 0
  %215 = vmatprep.subr.bf16.mxu0 0
  %216 = vmatpush1.bf16.msra.mxu0 0
  %217 = vmatprep.mubr.bf16.mxu0 0
  %218 = vmatmul.mubr.bf16.gmra.mrb[0].mxu0 %v79
  %v219 = vpop.f32.mrb[0].mxu0
  %v220 = vadd.f32 %v183, %v219
  %v221 = vpop.f32.mrb[0].mxu0
  %v222 = vpop.f32.mrb[0].mxu0
  %v223 = vadd.f32 %v183, %v222
  %v224 = vpop.f32.mrb[0].mxu0
  %225 = vdwg.mxu0
  %v226 = vld [vmem:[%s9] sm:$0xf]
  %v227 = vld [vmem:[%s12] sm:$0xff]
  %v228 = vld [vmem:[%s12 + $0x8] sm:$0xff]
  %v229 = vld [vmem:[%s12 + $0x10] sm:$0xff]
  %v230 = vld [vmem:[%s12 + $0x18] sm:$0xff]
  %v231 = vld [vmem:[%s12 + $0x20] sm:$0xff]
  %v232 = vld [vmem:[%s12 + $0x28] sm:$0xff]
  %v233 = vld [vmem:[%s12 + $0x30] sm:$0xff]
  %v234 = vld [vmem:[%s12 + $0x38] sm:$0xff]
  %v235 = vld [vmem:[%s10] sm:$0xff]
  %v236 = vld [vmem:[%s10 + $0x8] sm:$0xff]
  %v237 = vpack.c.bf16 %v236, %v235
  %v238 = vld [vmem:[%s11] sm:$0x1]
  %v240 = vlaneseq
  %v241 = vshrl.u32 %v240, 7
  %v242 = vsub.s32 0, %v241
  %v243 = vrot.slane %v238, %v242
  %245 = vmatprep.subr.bf16.mxu0 0
  %246 = vmatpush1.bf16.msra.mxu0 %v237
  %247 = vmatprep.subr.bf16.mxu0 0
  %248 = vmatpush1.bf16.msra.mxu0 0
  %249 = vmatprep.subr.bf16.mxu0 0
  %250 = vmatpush1.bf16.msra.mxu0 0
  %251 = vmatprep.subr.bf16.mxu0 0
  %252 = vmatpush1.bf16.msra.mxu0 0
  %253 = vmatprep.subr.bf16.mxu0 0
  %254 = vmatpush1.bf16.msra.mxu0 0
  %255 = vmatprep.subr.bf16.mxu0 0
  %256 = vmatpush1.bf16.msra.mxu0 0
  %257 = vmatprep.subr.bf16.mxu0 0
  %258 = vmatpush1.bf16.msra.mxu0 0
  %259 = vmatprep.subr.bf16.mxu0 0
  %260 = vmatpush1.bf16.msra.mxu0 0
  %261 = vmatprep.subr.bf16.mxu0 0
  %262 = vmatpush1.bf16.msra.mxu0 0
  %263 = vmatprep.subr.bf16.mxu0 0
  %264 = vmatpush1.bf16.msra.mxu0 0
  %265 = vmatprep.subr.bf16.mxu0 0
  %266 = vmatpush1.bf16.msra.mxu0 0
  %267 = vmatprep.subr.bf16.mxu0 0
  %268 = vmatpush1.bf16.msra.mxu0 0
  %269 = vmatprep.subr.bf16.mxu0 0
  %270 = vmatpush1.bf16.msra.mxu0 0
  %271 = vmatprep.subr.bf16.mxu0 0
  %272 = vmatpush1.bf16.msra.mxu0 0
  %273 = vmatprep.subr.bf16.mxu0 0
  %274 = vmatpush1.bf16.msra.mxu0 0
  %275 = vmatprep.subr.bf16.mxu0 0
  %276 = vmatpush1.bf16.msra.mxu0 0
  %277 = vmatprep.mubr.bf16.mxu0 0
  %278 = vmatmul.mubr.bf16.gmra.mrb[0].mxu0 %v79
  %v279 = vpop.f32.mrb[0].mxu0
  %v280 = vadd.f32 %v243, %v279
  %v281 = vpop.f32.mrb[0].mxu0
  %v282 = vpop.f32.mrb[0].mxu0
  %v283 = vadd.f32 %v243, %v282
  %v284 = vpop.f32.mrb[0].mxu0
  %285 = vdwg.mxu0
  %v286 = vpack.c.bf16 %v283, %v280
  %v287 = vpack.c.bf16 %v228, %v227
  %v288 = vpack.c.bf16 %v230, %v229
  %v289 = vpack.c.bf16 %v232, %v231
  %v290 = vpack.c.bf16 %v234, %v233
  %v291 = vld [vmem:[%s13] sm:$0x1]
  %v293 = vlaneseq
  %v294 = vshrl.u32 %v293, 7
  %v295 = vsub.s32 0, %v294
  %v296 = vrot.slane %v291, %v295
  %vm298 = vcmask 523264
  %v300 = vsel %vm298, %v286, 0
  %302 = vmatprep.subr.bf16.mxu0 0
  %303 = vmatpush1.bf16.msra.mxu0 %v287
  %304 = vmatprep.subr.bf16.mxu0 0
  %305 = vmatpush1.bf16.msra.mxu0 %v288
  %306 = vmatprep.subr.bf16.mxu0 0
  %307 = vmatpush1.bf16.msra.mxu0 %v289
  %308 = vmatprep.subr.bf16.mxu0 0
  %309 = vmatpush1.bf16.msra.mxu0 %v290
  %310 = vmatprep.subr.bf16.mxu0 0
  %311 = vmatpush1.bf16.msra.mxu0 0
  %312 = vmatprep.subr.bf16.mxu0 0
  %313 = vmatpush1.bf16.msra.mxu0 0
  %314 = vmatprep.subr.bf16.mxu0 0
  %315 = vmatpush1.bf16.msra.mxu0 0
  %316 = vmatprep.subr.bf16.mxu0 0
  %317 = vmatpush1.bf16.msra.mxu0 0
  %318 = vmatprep.subr.bf16.mxu0 0
  %319 = vmatpush1.bf16.msra.mxu0 0
  %320 = vmatprep.subr.bf16.mxu0 0
  %321 = vmatpush1.bf16.msra.mxu0 0
  %322 = vmatprep.subr.bf16.mxu0 0
  %323 = vmatpush1.bf16.msra.mxu0 0
  %324 = vmatprep.subr.bf16.mxu0 0
  %325 = vmatpush1.bf16.msra.mxu0 0
  %326 = vmatprep.subr.bf16.mxu0 0
  %327 = vmatpush1.bf16.msra.mxu0 0
  %328 = vmatprep.subr.bf16.mxu0 0
  %329 = vmatpush1.bf16.msra.mxu0 0
  %330 = vmatprep.subr.bf16.mxu0 0
  %331 = vmatpush1.bf16.msra.mxu0 0
  %332 = vmatprep.subr.bf16.mxu0 0
  %333 = vmatpush1.bf16.msra.mxu0 0
  %334 = vmatprep.mubr.bf16.mxu0 0
  %335 = vmatmul.mubr.bf16.gmra.mrb[0].mxu0 %v300
  %v336 = vpop.f32.mrb[0].mxu0
  %v337 = vadd.f32 %v296, %v336
  %v338 = vpop.f32.mrb[0].mxu0
  %v339 = vpop.f32.mrb[0].mxu0
  %v340 = vadd.f32 %v296, %v339
  %v341 = vpop.f32.mrb[0].mxu0
  %342 = vdwg.mxu0
  %vm343 = vcmp.gt.f32.partialorder %v56, 0.0
  %vm344 = vcmp.gt.f32.partialorder %v57, 0.0
  %345 = vxpose.xlu0.b32.start [1/16] %v169, 128
  %346 = vxpose.xlu0.b32.cont [2/16] %v172, 128
  %347 = vxpose.xlu0.b32.cont [3/16] 0.0, 128
  %348 = vxpose.xlu0.b32.cont [4/16] 0.0, 128
  %349 = vxpose.xlu0.b32.cont [5/16] 0.0, 128
  %350 = vxpose.xlu0.b32.cont [6/16] 0.0, 128
  %351 = vxpose.xlu0.b32.cont [7/16] 0.0, 128
  %352 = vxpose.xlu0.b32.cont [8/16] 0.0, 128
  %353 = vxpose.xlu0.b32.cont [9/16] 0.0, 128
  %354 = vxpose.xlu0.b32.cont [10/16] 0.0, 128
  %355 = vxpose.xlu0.b32.cont [11/16] 0.0, 128
  %356 = vxpose.xlu0.b32.cont [12/16] 0.0, 128
  %357 = vxpose.xlu0.b32.cont [13/16] 0.0, 128
  %358 = vxpose.xlu0.b32.cont [14/16] 0.0, 128
  %359 = vxpose.xlu0.b32.cont [15/16] 0.0, 128
  %360 = vxpose.xlu0.b32.end [16/16] 0.0, 128
  %v361 = vpop.trf.xlu0
  %v362 = vpop.trf.xlu0
  %v363 = vpop.trf.xlu0
  %v364 = vpop.trf.xlu0
  %v365 = vpop.trf.xlu0
  %v366 = vpop.trf.xlu0
  %v367 = vpop.trf.xlu0
  %v368 = vpop.trf.xlu0
  %v369 = vpop.trf.xlu0
  %v370 = vpop.trf.xlu0
  %v371 = vpop.trf.xlu0
  %v372 = vpop.trf.xlu0
  %v373 = vpop.trf.xlu0
  %v374 = vpop.trf.xlu0
  %v375 = vpop.trf.xlu0
  %v376 = vpop.trf.xlu0
  %v377 = vpack.c.bf16 %v123, %v122
  %v378 = vpack.c.bf16 %v362, %v361
  %v379 = vpack.c.bf16 %v364, %v363
  %380 = vxpose.xlu0.b32.start [1/16] %v226, 128
  %381 = vxpose.xlu0.b32.cont [2/16] 0.0, 128
  %382 = vxpose.xlu0.b32.cont [3/16] 0.0, 128
  %383 = vxpose.xlu0.b32.cont [4/16] 0.0, 128
  %384 = vxpose.xlu0.b32.cont [5/16] 0.0, 128
  %385 = vxpose.xlu0.b32.cont [6/16] 0.0, 128
  %386 = vxpose.xlu0.b32.cont [7/16] 0.0, 128
  %387 = vxpose.xlu0.b32.cont [8/16] 0.0, 128
  %388 = vxpose.xlu0.b32.cont [9/16] 0.0, 128
  %389 = vxpose.xlu0.b32.cont [10/16] 0.0, 128
  %390 = vxpose.xlu0.b32.cont [11/16] 0.0, 128
  %391 = vxpose.xlu0.b32.cont [12/16] 0.0, 128
  %392 = vxpose.xlu0.b32.cont [13/16] 0.0, 128
  %393 = vxpose.xlu0.b32.cont [14/16] 0.0, 128
  %394 = vxpose.xlu0.b32.cont [15/16] 0.0, 128
  %395 = vxpose.xlu0.b32.end [16/16] 0.0, 128
  %v396 = vpop.trf.xlu0
  %v397 = vpop.trf.xlu0
  %v398 = vpop.trf.xlu0
  %v399 = vpop.trf.xlu0
  %v400 = vpop.trf.xlu0
  %v401 = vpop.trf.xlu0
  %v402 = vpop.trf.xlu0
  %v403 = vpop.trf.xlu0
  %v404 = vpop.trf.xlu0
  %v405 = vpop.trf.xlu0
  %v406 = vpop.trf.xlu0
  %v407 = vpop.trf.xlu0
  %v408 = vpop.trf.xlu0
  %v409 = vpop.trf.xlu0
  %v410 = vpop.trf.xlu0
  %v411 = vpop.trf.xlu0
  %v412 = vpack.c.bf16 %v397, %v396
  %v413 = vpack.c.bf16 %v399, %v398
  %vm414 = vcmask 261120
  %v416 = vsel %vm414, %v377, 0
  %418 = vmatprep.subr.bf16.mxu0 0
  %419 = vmatpush1.bf16.msra.mxu0 %v412
  %420 = vmatprep.subr.bf16.mxu0 0
  %421 = vmatpush1.bf16.msra.mxu0 %v413
  %422 = vmatprep.subr.bf16.mxu0 0
  %423 = vmatpush1.bf16.msra.mxu0 0
  %424 = vmatprep.subr.bf16.mxu0 0
  %425 = vmatpush1.bf16.msra.mxu0 0
  %426 = vmatprep.subr.bf16.mxu0 0
  %427 = vmatpush1.bf16.msra.mxu0 0
  %428 = vmatprep.subr.bf16.mxu0 0
  %429 = vmatpush1.bf16.msra.mxu0 0
  %430 = vmatprep.subr.bf16.mxu0 0
  %431 = vmatpush1.bf16.msra.mxu0 0
  %432 = vmatprep.subr.bf16.mxu0 0
  %433 = vmatpush1.bf16.msra.mxu0 0
  %434 = vmatprep.subr.bf16.mxu0 0
  %435 = vmatpush1.bf16.msra.mxu0 0
  %436 = vmatprep.subr.bf16.mxu0 0
  %437 = vmatpush1.bf16.msra.mxu0 0
  %438 = vmatprep.subr.bf16.mxu0 0
  %439 = vmatpush1.bf16.msra.mxu0 0
  %440 = vmatprep.subr.bf16.mxu0 0
  %441 = vmatpush1.bf16.msra.mxu0 0
  %442 = vmatprep.subr.bf16.mxu0 0
  %443 = vmatpush1.bf16.msra.mxu0 0
  %444 = vmatprep.subr.bf16.mxu0 0
  %445 = vmatpush1.bf16.msra.mxu0 0
  %446 = vmatprep.subr.bf16.mxu0 0
  %447 = vmatpush1.bf16.msra.mxu0 0
  %448 = vmatprep.subr.bf16.mxu0 0
  %449 = vmatpush1.bf16.msra.mxu0 0
  %450 = vmatprep.mubr.bf16.mxu0 0
  %451 = vmatmul.mubr.bf16.gmra.mrb[0].mxu0 %v416
  %v452 = vpop.f32.mrb[0].mxu0
  %v453 = vadd.f32 0.0, %v452
  %v454 = vpop.f32.mrb[0].mxu0
  %v455 = vpop.f32.mrb[0].mxu0
  %v456 = vadd.f32 0.0, %v455
  %v457 = vpop.f32.mrb[0].mxu0
  %458 = vdwg.mxu0
  %460 = vset.pattern.permute.xlu0 0
  %461 = vperm.xlu0 %460, %v453
  %v462 = vpop.permute.xlu0 %461
  %465 = vset.pattern.permute.xlu0 0
  %466 = vperm.xlu0 %465, %v456
  %v467 = vpop.permute.xlu0 %466
  %v469 = vmul.f32 %v462, %v58
  %v470 = vmul.f32 %v467, %v59
  %471 = vmatprep.subr.bf16.mxu0 0
  %472 = vmatpush1.bf16.msra.mxu0 %v378
  %473 = vmatprep.subr.bf16.mxu0 0
  %474 = vmatpush1.bf16.msra.mxu0 %v379
  %475 = vmatprep.subr.bf16.mxu0 0
  %476 = vmatpush1.bf16.msra.mxu0 0
  %477 = vmatprep.subr.bf16.mxu0 0
  %478 = vmatpush1.bf16.msra.mxu0 0
  %479 = vmatprep.subr.bf16.mxu0 0
  %480 = vmatpush1.bf16.msra.mxu0 0
  %481 = vmatprep.subr.bf16.mxu0 0
  %482 = vmatpush1.bf16.msra.mxu0 0
  %483 = vmatprep.subr.bf16.mxu0 0
  %484 = vmatpush1.bf16.msra.mxu0 0
  %485 = vmatprep.subr.bf16.mxu0 0
  %486 = vmatpush1.bf16.msra.mxu0 0
  %487 = vmatprep.subr.bf16.mxu0 0
  %488 = vmatpush1.bf16.msra.mxu0 0
  %489 = vmatprep.subr.bf16.mxu0 0
  %490 = vmatpush1.bf16.msra.mxu0 0
  %491 = vmatprep.subr.bf16.mxu0 0
  %492 = vmatpush1.bf16.msra.mxu0 0
  %493 = vmatprep.subr.bf16.mxu0 0
  %494 = vmatpush1.bf16.msra.mxu0 0
  %495 = vmatprep.subr.bf16.mxu0 0
  %496 = vmatpush1.bf16.msra.mxu0 0
  %497 = vmatprep.subr.bf16.mxu0 0
  %498 = vmatpush1.bf16.msra.mxu0 0
  %499 = vmatprep.subr.bf16.mxu0 0
  %500 = vmatpush1.bf16.msra.mxu0 0
  %501 = vmatprep.subr.bf16.mxu0 0
  %502 = vmatpush1.bf16.msra.mxu0 0
  %503 = vmatprep.mubr.bf16.mxu0 0
  %504 = vmatmul.mubr.bf16.gmra.mrb[0].mxu0 %v416
  %v505 = vpop.f32.mrb[0].mxu0
  %v506 = vadd.f32 %v469, %v505
  %v507 = vpop.f32.mrb[0].mxu0
  %v508 = vpop.f32.mrb[0].mxu0
  %v509 = vadd.f32 %v470, %v508
  %v510 = vpop.f32.mrb[0].mxu0
  %511 = vdwg.mxu0
  %512 = vset.pattern.permute.xlu0 1
  %513 = vperm.xlu0 %512, %v453
  %v514 = vpop.permute.xlu0 %513
  %516 = vset.pattern.permute.xlu0 1
  %517 = vperm.xlu0 %516, %v456
  %v518 = vpop.permute.xlu0 %517
  %v520 = vmul.f32 %v514, %v60
  %v521 = vmul.f32 %v518, %v61
  %v522 = vadd.f32 %v506, %v520
  %v523 = vadd.f32 %v509, %v521
  %524 = vset.pattern.permute.xlu0 2
  %525 = vperm.xlu0 %524, %v453
  %v526 = vpop.permute.xlu0 %525
  %528 = vset.pattern.permute.xlu0 2
  %529 = vperm.xlu0 %528, %v456
  %v530 = vpop.permute.xlu0 %529
  %v532 = vmul.f32 %v526, %v62
  %v533 = vmul.f32 %v530, %v63
  %v534 = vadd.f32 %v522, %v532
  %v535 = vadd.f32 %v523, %v533
  %536 = vset.pattern.permute.xlu0 3
  %537 = vperm.xlu0 %536, %v453
  %v538 = vpop.permute.xlu0 %537
  %540 = vset.pattern.permute.xlu0 3
  %541 = vperm.xlu0 %540, %v456
  %v542 = vpop.permute.xlu0 %541
  %v544 = vmul.f32 %v538, %v64
  %v545 = vmul.f32 %v542, %v65
  %v546 = vadd.f32 %v534, %v544
  %v547 = vadd.f32 %v535, %v545
  %v548 = vsel %vm343, %v546, -1e+30
  %v549 = vsel %vm344, %v547, -1e+30
  %v550 = vsel %vm77, %v548, -inf
  %551 = vmax.xlane.f32.xlu0 %v550
  %v552 = vpop.xlane.xlu0 %551
  %v553 = vsel %vm77, %v549, -inf
  %554 = vmax.xlane.f32.xlu0 %v553
  %v555 = vpop.xlane.xlu0 %554
  %v556 = vsub.f32 %v548, %v552
  %v557 = vsub.f32 %v549, %v555
  %v558 = vmul.f32 %v556, 1.442695
  %v559 = vpow.pop %v558
  %v560 = vmul.f32 %v557, 1.442695
  %v561 = vpow.pop %v560
  %v562 = vsel %vm343, %v559, 0.0
  %v563 = vsel %vm344, %v561, 0.0
  %v564 = vsel %vm77, %v562, 0.0
  %565 = vadd.xlane.f32.xlu0 %v564
  %v566 = vpop.xlane.xlu0 %565
  %v567 = vsel %vm77, %v563, 0.0
  %568 = vadd.xlane.f32.xlu0 %v567
  %v569 = vpop.xlane.xlu0 %568
  %v570 = vmax.f32 %v566, 1e-30
  %v571 = vmax.f32 %v569, 1e-30
  %v572 = vrcp.pop %v570
  %v573 = vrcp.pop %v571
  %v574 = vmul.f32 %v562, %v572
  %v575 = vmul.f32 %v563, %v573
  %v576 = vpack.c.bf16 %v575, %v574
  %v577 = vpack.c.bf16 %v223, %v220
  %v578 = vmul.f32 %v574, %v58
  %v579 = vmul.f32 %v575, %v59
  %v580 = vsel %vm77, %v578, 0.0
  %581 = vadd.xlane.f32.xlu0 %v580
  %v582 = vpop.xlane.xlu0 %581
  %v583 = vsel %vm77, %v579, 0.0
  %584 = vadd.xlane.f32.xlu0 %v583
  %v585 = vpop.xlane.xlu0 %584
  %v586 = vmul.f32 %v574, %v60
  %v587 = vmul.f32 %v575, %v61
  %v588 = vsel %vm77, %v586, 0.0
  %589 = vadd.xlane.f32.xlu0 %v588
  %v590 = vpop.xlane.xlu0 %589
  %v591 = vsel %vm77, %v587, 0.0
  %592 = vadd.xlane.f32.xlu0 %v591
  %v593 = vpop.xlane.xlu0 %592
  %v594 = vmul.f32 %v574, %v62
  %v595 = vmul.f32 %v575, %v63
  %v596 = vsel %vm77, %v594, 0.0
  %597 = vadd.xlane.f32.xlu0 %v596
  %v598 = vpop.xlane.xlu0 %597
  %v599 = vsel %vm77, %v595, 0.0
  %600 = vadd.xlane.f32.xlu0 %v599
  %v601 = vpop.xlane.xlu0 %600
  %v602 = vmul.f32 %v574, %v64
  %v603 = vmul.f32 %v575, %v65
  %v604 = vsel %vm77, %v602, 0.0
  %605 = vadd.xlane.f32.xlu0 %v604
  %v606 = vpop.xlane.xlu0 %605
  %v607 = vsel %vm77, %v603, 0.0
  %608 = vadd.xlane.f32.xlu0 %v607
  %v609 = vpop.xlane.xlu0 %608
  %vm610 = vcmask 7168
  %v611 = vsel %vm610, %v582, %v590
  %v612 = vsel %vm610, %v585, %v593
  %vm613 = vcmask 15360
  %v614 = vsel %vm613, %v611, %v598
  %v615 = vsel %vm613, %v612, %v601
  %vm616 = vcmask 23552
  %v617 = vsel %vm616, %v614, %v606
  %v618 = vsel %vm616, %v615, %v609
  %v619 = vpack.c.bf16 %v618, %v617
  %v620 = vpack.c.bf16 %v226, %v226
  %vm621 = vcmask 31744
  %v623 = vsel %vm621, %v619, 0
  %vm625 = vcmask 1041408
  %v627 = vsel %vm625, %v620, 0
  %629 = vmatprep.subr.bf16.mxu0 0
  %630 = vmatpush1.bf16.msra.mxu0 %v627
  %631 = vmatprep.subr.bf16.mxu0 0
  %632 = vmatpush1.bf16.msra.mxu0 0
  %633 = vmatprep.subr.bf16.mxu0 0
  %634 = vmatpush1.bf16.msra.mxu0 0
  %635 = vmatprep.subr.bf16.mxu0 0
  %636 = vmatpush1.bf16.msra.mxu0 0
  %637 = vmatprep.subr.bf16.mxu0 0
  %638 = vmatpush1.bf16.msra.mxu0 0
  %639 = vmatprep.subr.bf16.mxu0 0
  %640 = vmatpush1.bf16.msra.mxu0 0
  %641 = vmatprep.subr.bf16.mxu0 0
  %642 = vmatpush1.bf16.msra.mxu0 0
  %643 = vmatprep.subr.bf16.mxu0 0
  %644 = vmatpush1.bf16.msra.mxu0 0
  %645 = vmatprep.subr.bf16.mxu0 0
  %646 = vmatpush1.bf16.msra.mxu0 0
  %647 = vmatprep.subr.bf16.mxu0 0
  %648 = vmatpush1.bf16.msra.mxu0 0
  %649 = vmatprep.subr.bf16.mxu0 0
  %650 = vmatpush1.bf16.msra.mxu0 0
  %651 = vmatprep.subr.bf16.mxu0 0
  %652 = vmatpush1.bf16.msra.mxu0 0
  %653 = vmatprep.subr.bf16.mxu0 0
  %654 = vmatpush1.bf16.msra.mxu0 0
  %655 = vmatprep.subr.bf16.mxu0 0
  %656 = vmatpush1.bf16.msra.mxu0 0
  %657 = vmatprep.subr.bf16.mxu0 0
  %658 = vmatpush1.bf16.msra.mxu0 0
  %659 = vmatprep.subr.bf16.mxu0 0
  %660 = vmatpush1.bf16.msra.mxu0 0
  %661 = vmatprep.mubr.bf16.mxu0 0
  %662 = vmatmul.mubr.bf16.gmra.mrb[0].mxu0 %v623
  %v663 = vpop.f32.mrb[0].mxu0
  %v664 = vadd.f32 0.0, %v663
  %v665 = vpop.f32.mrb[0].mxu0
  %v666 = vpop.f32.mrb[0].mxu0
  %v667 = vadd.f32 0.0, %v666
  %v668 = vpop.f32.mrb[0].mxu0
  %669 = vdwg.mxu0
  %v671 = vsel %vm77, %v576, 0
  %673 = vmatprep.subr.bf16.mxu0 0
  %674 = vmatpush1.bf16.msra.mxu0 %v577
  %675 = vmatprep.subr.bf16.mxu0 0
  %676 = vmatpush1.bf16.msra.mxu0 0
  %677 = vmatprep.subr.bf16.mxu0 0
  %678 = vmatpush1.bf16.msra.mxu0 0
  %679 = vmatprep.subr.bf16.mxu0 0
  %680 = vmatpush1.bf16.msra.mxu0 0
  %681 = vmatprep.subr.bf16.mxu0 0
  %682 = vmatpush1.bf16.msra.mxu0 0
  %683 = vmatprep.subr.bf16.mxu0 0
  %684 = vmatpush1.bf16.msra.mxu0 0
  %685 = vmatprep.subr.bf16.mxu0 0
  %686 = vmatpush1.bf16.msra.mxu0 0
  %687 = vmatprep.subr.bf16.mxu0 0
  %688 = vmatpush1.bf16.msra.mxu0 0
  %689 = vmatprep.subr.bf16.mxu0 0
  %690 = vmatpush1.bf16.msra.mxu0 0
  %691 = vmatprep.subr.bf16.mxu0 0
  %692 = vmatpush1.bf16.msra.mxu0 0
  %693 = vmatprep.subr.bf16.mxu0 0
  %694 = vmatpush1.bf16.msra.mxu0 0
  %695 = vmatprep.subr.bf16.mxu0 0
  %696 = vmatpush1.bf16.msra.mxu0 0
  %697 = vmatprep.subr.bf16.mxu0 0
  %698 = vmatpush1.bf16.msra.mxu0 0
  %699 = vmatprep.subr.bf16.mxu0 0
  %700 = vmatpush1.bf16.msra.mxu0 0
  %701 = vmatprep.subr.bf16.mxu0 0
  %702 = vmatpush1.bf16.msra.mxu0 0
  %703 = vmatprep.subr.bf16.mxu0 0
  %704 = vmatpush1.bf16.msra.mxu0 0
  %705 = vmatprep.mubr.bf16.mxu0 0
  %706 = vmatmul.mubr.bf16.gmra.mrb[0].mxu0 %v671
  %v707 = vpop.f32.mrb[0].mxu0
  %v708 = vadd.f32 %v664, %v707
  %v709 = vpop.f32.mrb[0].mxu0
  %v710 = vpop.f32.mrb[0].mxu0
  %v711 = vadd.f32 %v667, %v710
  %v712 = vpop.f32.mrb[0].mxu0
  %713 = vdwg.mxu0
  %v714 = vpack.c.bf16 %v711, %v708
  %v716 = vsel %vm414, %v714, 0
  %718 = vmatprep.subr.bf16.mxu0 0
  %719 = vmatpush1.bf16.msra.mxu0 %v287
  %720 = vmatprep.subr.bf16.mxu0 0
  %721 = vmatpush1.bf16.msra.mxu0 %v288
  %722 = vmatprep.subr.bf16.mxu0 0
  %723 = vmatpush1.bf16.msra.mxu0 0
  %724 = vmatprep.subr.bf16.mxu0 0
  %725 = vmatpush1.bf16.msra.mxu0 0
  %726 = vmatprep.subr.bf16.mxu0 0
  %727 = vmatpush1.bf16.msra.mxu0 0
  %728 = vmatprep.subr.bf16.mxu0 0
  %729 = vmatpush1.bf16.msra.mxu0 0
  %730 = vmatprep.subr.bf16.mxu0 0
  %731 = vmatpush1.bf16.msra.mxu0 0
  %732 = vmatprep.subr.bf16.mxu0 0
  %733 = vmatpush1.bf16.msra.mxu0 0
  %734 = vmatprep.subr.bf16.mxu0 0
  %735 = vmatpush1.bf16.msra.mxu0 0
  %736 = vmatprep.subr.bf16.mxu0 0
  %737 = vmatpush1.bf16.msra.mxu0 0
  %738 = vmatprep.subr.bf16.mxu0 0
  %739 = vmatpush1.bf16.msra.mxu0 0
  %740 = vmatprep.subr.bf16.mxu0 0
  %741 = vmatpush1.bf16.msra.mxu0 0
  %742 = vmatprep.subr.bf16.mxu0 0
  %743 = vmatpush1.bf16.msra.mxu0 0
  %744 = vmatprep.subr.bf16.mxu0 0
  %745 = vmatpush1.bf16.msra.mxu0 0
  %746 = vmatprep.subr.bf16.mxu0 0
  %747 = vmatpush1.bf16.msra.mxu0 0
  %748 = vmatprep.subr.bf16.mxu0 0
  %749 = vmatpush1.bf16.msra.mxu0 0
  %750 = vmatprep.mubr.bf16.mxu0 0
  %751 = vmatmul.mubr.bf16.gmra.mrb[0].mxu0 %v716
  %v752 = vpop.f32.mrb[0].mxu0
  %v753 = vadd.f32 0.0, %v752
  %v754 = vpop.f32.mrb[0].mxu0
  %v755 = vpop.f32.mrb[0].mxu0
  %v756 = vadd.f32 0.0, %v755
  %v757 = vpop.f32.mrb[0].mxu0
  %758 = vdwg.mxu0
  %v759 = vadd.f32 %v337, %v753
  %v760 = vadd.f32 %v340, %v756
  %763 = vrot.lane.b32.xlu0 %v169, 96
  %v764 = vpop.permute.xlu0 %763
  %765 = vrot.lane.b32.xlu0 %v172, 96
  %v766 = vpop.permute.xlu0 %765
  %769 = vxpose.xlu0.b32.start [1/16] %v764, 128
  %770 = vxpose.xlu0.b32.cont [2/16] %v766, 128
  %771 = vxpose.xlu0.b32.cont [3/16] 0.0, 128
  %772 = vxpose.xlu0.b32.cont [4/16] 0.0, 128
  %773 = vxpose.xlu0.b32.cont [5/16] 0.0, 128
  %774 = vxpose.xlu0.b32.cont [6/16] 0.0, 128
  %775 = vxpose.xlu0.b32.cont [7/16] 0.0, 128
  %776 = vxpose.xlu0.b32.cont [8/16] 0.0, 128
  %777 = vxpose.xlu0.b32.cont [9/16] 0.0, 128
  %778 = vxpose.xlu0.b32.cont [10/16] 0.0, 128
  %779 = vxpose.xlu0.b32.cont [11/16] 0.0, 128
  %780 = vxpose.xlu0.b32.cont [12/16] 0.0, 128
  %781 = vxpose.xlu0.b32.cont [13/16] 0.0, 128
  %782 = vxpose.xlu0.b32.cont [14/16] 0.0, 128
  %783 = vxpose.xlu0.b32.cont [15/16] 0.0, 128
  %784 = vxpose.xlu0.b32.end [16/16] 0.0, 128
  %v785 = vpop.trf.xlu0
  %v786 = vpop.trf.xlu0
  %v787 = vpop.trf.xlu0
  %v788 = vpop.trf.xlu0
  %v789 = vpop.trf.xlu0
  %v790 = vpop.trf.xlu0
  %v791 = vpop.trf.xlu0
  %v792 = vpop.trf.xlu0
  %v793 = vpop.trf.xlu0
  %v794 = vpop.trf.xlu0
  %v795 = vpop.trf.xlu0
  %v796 = vpop.trf.xlu0
  %v797 = vpop.trf.xlu0
  %v798 = vpop.trf.xlu0
  %v799 = vpop.trf.xlu0
  %v800 = vpop.trf.xlu0
  %v801 = vpack.c.bf16 %v786, %v785
  %v802 = vpack.c.bf16 %v788, %v787
  %804 = vrot.lane.b32.xlu0 %v226, 96
  %v805 = vpop.permute.xlu0 %804
  %807 = vxpose.xlu0.b32.start [1/16] %v805, 128
  %808 = vxpose.xlu0.b32.cont [2/16] 0.0, 128
  %809 = vxpose.xlu0.b32.cont [3/16] 0.0, 128
  %810 = vxpose.xlu0.b32.cont [4/16] 0.0, 128
  %811 = vxpose.xlu0.b32.cont [5/16] 0.0, 128
  %812 = vxpose.xlu0.b32.cont [6/16] 0.0, 128
  %813 = vxpose.xlu0.b32.cont [7/16] 0.0, 128
  %814 = vxpose.xlu0.b32.cont [8/16] 0.0, 128
  %815 = vxpose.xlu0.b32.cont [9/16] 0.0, 128
  %816 = vxpose.xlu0.b32.cont [10/16] 0.0, 128
  %817 = vxpose.xlu0.b32.cont [11/16] 0.0, 128
  %818 = vxpose.xlu0.b32.cont [12/16] 0.0, 128
  %819 = vxpose.xlu0.b32.cont [13/16] 0.0, 128
  %820 = vxpose.xlu0.b32.cont [14/16] 0.0, 128
  %821 = vxpose.xlu0.b32.cont [15/16] 0.0, 128
  %822 = vxpose.xlu0.b32.end [16/16] 0.0, 128
  %v823 = vpop.trf.xlu0
  %v824 = vpop.trf.xlu0
  %v825 = vpop.trf.xlu0
  %v826 = vpop.trf.xlu0
  %v827 = vpop.trf.xlu0
  %v828 = vpop.trf.xlu0
  %v829 = vpop.trf.xlu0
  %v830 = vpop.trf.xlu0
  %v831 = vpop.trf.xlu0
  %v832 = vpop.trf.xlu0
  %v833 = vpop.trf.xlu0
  %v834 = vpop.trf.xlu0
  %v835 = vpop.trf.xlu0
  %v836 = vpop.trf.xlu0
  %v837 = vpop.trf.xlu0
  %v838 = vpop.trf.xlu0
  %v839 = vpack.c.bf16 %v824, %v823
  %v840 = vpack.c.bf16 %v826, %v825
  %842 = vrot.lane.b32.xlu0 %v377, 96
  %v843 = vpop.permute.xlu0 %842
  %v845 = vsel %vm414, %v843, 0
  %847 = vmatprep.subr.bf16.mxu0 0
  %848 = vmatpush1.bf16.msra.mxu0 %v839
  %849 = vmatprep.subr.bf16.mxu0 0
  %850 = vmatpush1.bf16.msra.mxu0 %v840
  %851 = vmatprep.subr.bf16.mxu0 0
  %852 = vmatpush1.bf16.msra.mxu0 0
  %853 = vmatprep.subr.bf16.mxu0 0
  %854 = vmatpush1.bf16.msra.mxu0 0
  %855 = vmatprep.subr.bf16.mxu0 0
  %856 = vmatpush1.bf16.msra.mxu0 0
  %857 = vmatprep.subr.bf16.mxu0 0
  %858 = vmatpush1.bf16.msra.mxu0 0
  %859 = vmatprep.subr.bf16.mxu0 0
  %860 = vmatpush1.bf16.msra.mxu0 0
  %861 = vmatprep.subr.bf16.mxu0 0
  %862 = vmatpush1.bf16.msra.mxu0 0
  %863 = vmatprep.subr.bf16.mxu0 0
  %864 = vmatpush1.bf16.msra.mxu0 0
  %865 = vmatprep.subr.bf16.mxu0 0
  %866 = vmatpush1.bf16.msra.mxu0 0
  %867 = vmatprep.subr.bf16.mxu0 0
  %868 = vmatpush1.bf16.msra.mxu0 0
  %869 = vmatprep.subr.bf16.mxu0 0
  %870 = vmatpush1.bf16.msra.mxu0 0
  %871 = vmatprep.subr.bf16.mxu0 0
  %872 = vmatpush1.bf16.msra.mxu0 0
  %873 = vmatprep.subr.bf16.mxu0 0
  %874 = vmatpush1.bf16.msra.mxu0 0
  %875 = vmatprep.subr.bf16.mxu0 0
  %876 = vmatpush1.bf16.msra.mxu0 0
  %877 = vmatprep.subr.bf16.mxu0 0
  %878 = vmatpush1.bf16.msra.mxu0 0
  %879 = vmatprep.mubr.bf16.mxu0 0
  %880 = vmatmul.mubr.bf16.gmra.mrb[0].mxu0 %v845
  %v881 = vpop.f32.mrb[0].mxu0
  %v882 = vadd.f32 0.0, %v881
  %v883 = vpop.f32.mrb[0].mxu0
  %v884 = vpop.f32.mrb[0].mxu0
  %v885 = vadd.f32 0.0, %v884
  %v886 = vpop.f32.mrb[0].mxu0
  %887 = vdwg.mxu0
  %889 = vset.pattern.permute.xlu0 0
  %890 = vperm.xlu0 %889, %v882
  %v891 = vpop.permute.xlu0 %890
  %894 = vset.pattern.permute.xlu0 0
  %895 = vperm.xlu0 %894, %v885
  %v896 = vpop.permute.xlu0 %895
  %v898 = vmul.f32 %v891, %v58
  %v899 = vmul.f32 %v896, %v59
  %900 = vmatprep.subr.bf16.mxu0 0
  %901 = vmatpush1.bf16.msra.mxu0 %v801
  %902 = vmatprep.subr.bf16.mxu0 0
  %903 = vmatpush1.bf16.msra.mxu0 %v802
  %904 = vmatprep.subr.bf16.mxu0 0
  %905 = vmatpush1.bf16.msra.mxu0 0
  %906 = vmatprep.subr.bf16.mxu0 0
  %907 = vmatpush1.bf16.msra.mxu0 0
  %908 = vmatprep.subr.bf16.mxu0 0
  %909 = vmatpush1.bf16.msra.mxu0 0
  %910 = vmatprep.subr.bf16.mxu0 0
  %911 = vmatpush1.bf16.msra.mxu0 0
  %912 = vmatprep.subr.bf16.mxu0 0
  %913 = vmatpush1.bf16.msra.mxu0 0
  %914 = vmatprep.subr.bf16.mxu0 0
  %915 = vmatpush1.bf16.msra.mxu0 0
  %916 = vmatprep.subr.bf16.mxu0 0
  %917 = vmatpush1.bf16.msra.mxu0 0
  %918 = vmatprep.subr.bf16.mxu0 0
  %919 = vmatpush1.bf16.msra.mxu0 0
  %920 = vmatprep.subr.bf16.mxu0 0
  %921 = vmatpush1.bf16.msra.mxu0 0
  %922 = vmatprep.subr.bf16.mxu0 0
  %923 = vmatpush1.bf16.msra.mxu0 0
  %924 = vmatprep.subr.bf16.mxu0 0
  %925 = vmatpush1.bf16.msra.mxu0 0
  %926 = vmatprep.subr.bf16.mxu0 0
  %927 = vmatpush1.bf16.msra.mxu0 0
  %928 = vmatprep.subr.bf16.mxu0 0
  %929 = vmatpush1.bf16.msra.mxu0 0
  %930 = vmatprep.subr.bf16.mxu0 0
  %931 = vmatpush1.bf16.msra.mxu0 0
  %932 = vmatprep.mubr.bf16.mxu0 0
  %933 = vmatmul.mubr.bf16.gmra.mrb[0].mxu0 %v845
  %v934 = vpop.f32.mrb[0].mxu0
  %v935 = vadd.f32 %v898, %v934
  %v936 = vpop.f32.mrb[0].mxu0
  %v937 = vpop.f32.mrb[0].mxu0
  %v938 = vadd.f32 %v899, %v937
  %v939 = vpop.f32.mrb[0].mxu0
  %940 = vdwg.mxu0
  %941 = vset.pattern.permute.xlu0 1
  %942 = vperm.xlu0 %941, %v882
  %v943 = vpop.permute.xlu0 %942
  %945 = vset.pattern.permute.xlu0 1
  %946 = vperm.xlu0 %945, %v885
  %v947 = vpop.permute.xlu0 %946
  %v949 = vmul.f32 %v943, %v60
  %v950 = vmul.f32 %v947, %v61
  %v951 = vadd.f32 %v935, %v949
  %v952 = vadd.f32 %v938, %v950
  %953 = vset.pattern.permute.xlu0 2
  %954 = vperm.xlu0 %953, %v882
  %v955 = vpop.permute.xlu0 %954
  %957 = vset.pattern.permute.xlu0 2
  %958 = vperm.xlu0 %957, %v885
  %v959 = vpop.permute.xlu0 %958
  %v961 = vmul.f32 %v955, %v62
  %v962 = vmul.f32 %v959, %v63
  %v963 = vadd.f32 %v951, %v961
  %v964 = vadd.f32 %v952, %v962
  %965 = vset.pattern.permute.xlu0 3
  %966 = vperm.xlu0 %965, %v882
  %v967 = vpop.permute.xlu0 %966
  %969 = vset.pattern.permute.xlu0 3
  %970 = vperm.xlu0 %969, %v885
  %v971 = vpop.permute.xlu0 %970
  %v973 = vmul.f32 %v967, %v64
  %v974 = vmul.f32 %v971, %v65
  %v975 = vadd.f32 %v963, %v973
  %v976 = vadd.f32 %v964, %v974
  %v977 = vsel %vm343, %v975, -1e+30
  %v978 = vsel %vm344, %v976, -1e+30
  %v979 = vsel %vm77, %v977, -inf
  %980 = vmax.xlane.f32.xlu0 %v979
  %v981 = vpop.xlane.xlu0 %980
  %v982 = vsel %vm77, %v978, -inf
  %983 = vmax.xlane.f32.xlu0 %v982
  %v984 = vpop.xlane.xlu0 %983
  %v985 = vsub.f32 %v977, %v981
  %v986 = vsub.f32 %v978, %v984
  %v987 = vmul.f32 %v985, 1.442695
  %v988 = vpow.pop %v987
  %v989 = vmul.f32 %v986, 1.442695
  %v990 = vpow.pop %v989
  %v991 = vsel %vm343, %v988, 0.0
  %v992 = vsel %vm344, %v990, 0.0
  %v993 = vsel %vm77, %v991, 0.0
  %994 = vadd.xlane.f32.xlu0 %v993
  %v995 = vpop.xlane.xlu0 %994
  %v996 = vsel %vm77, %v992, 0.0
  %997 = vadd.xlane.f32.xlu0 %v996
  %v998 = vpop.xlane.xlu0 %997
  %v999 = vmax.f32 %v995, 1e-30
  %v1000 = vmax.f32 %v998, 1e-30
  %v1001 = vrcp.pop %v999
  %v1002 = vrcp.pop %v1000
  %v1003 = vmul.f32 %v991, %v1001
  %v1004 = vmul.f32 %v992, %v1002
  %v1005 = vpack.c.bf16 %v1004, %v1003
  %v1006 = vmul.f32 %v1003, %v58
  %v1007 = vmul.f32 %v1004, %v59
  %v1008 = vsel %vm77, %v1006, 0.0
  %1009 = vadd.xlane.f32.xlu0 %v1008
  %v1010 = vpop.xlane.xlu0 %1009
  %v1011 = vsel %vm77, %v1007, 0.0
  %1012 = vadd.xlane.f32.xlu0 %v1011
  %v1013 = vpop.xlane.xlu0 %1012
  %v1014 = vmul.f32 %v1003, %v60
  %v1015 = vmul.f32 %v1004, %v61
  %v1016 = vsel %vm77, %v1014, 0.0
  %1017 = vadd.xlane.f32.xlu0 %v1016
  %v1018 = vpop.xlane.xlu0 %1017
  %v1019 = vsel %vm77, %v1015, 0.0
  %1020 = vadd.xlane.f32.xlu0 %v1019
  %v1021 = vpop.xlane.xlu0 %1020
  %v1022 = vmul.f32 %v1003, %v62
  %v1023 = vmul.f32 %v1004, %v63
  %v1024 = vsel %vm77, %v1022, 0.0
  %1025 = vadd.xlane.f32.xlu0 %v1024
  %v1026 = vpop.xlane.xlu0 %1025
  %v1027 = vsel %vm77, %v1023, 0.0
  %1028 = vadd.xlane.f32.xlu0 %v1027
  %v1029 = vpop.xlane.xlu0 %1028
  %v1030 = vmul.f32 %v1003, %v64
  %v1031 = vmul.f32 %v1004, %v65
  %v1032 = vsel %vm77, %v1030, 0.0
  %1033 = vadd.xlane.f32.xlu0 %v1032
  %v1034 = vpop.xlane.xlu0 %1033
  %v1035 = vsel %vm77, %v1031, 0.0
  %1036 = vadd.xlane.f32.xlu0 %v1035
  %v1037 = vpop.xlane.xlu0 %1036
  %v1038 = vsel %vm610, %v1010, %v1018
  %v1039 = vsel %vm610, %v1013, %v1021
  %v1040 = vsel %vm613, %v1038, %v1026
  %v1041 = vsel %vm613, %v1039, %v1029
  %v1042 = vsel %vm616, %v1040, %v1034
  %v1043 = vsel %vm616, %v1041, %v1037
  %v1044 = vpack.c.bf16 %v1043, %v1042
  %1046 = vrot.lane.b32.xlu0 %v620, 96
  %v1047 = vpop.permute.xlu0 %1046
  %v1049 = vsel %vm621, %v1044, 0
  %v1052 = vsel %vm625, %v1047, 0
  %1054 = vmatprep.subr.bf16.mxu0 0
  %1055 = vmatpush1.bf16.msra.mxu0 %v1052
  %1056 = vmatprep.subr.bf16.mxu0 0
  %1057 = vmatpush1.bf16.msra.mxu0 0
  %1058 = vmatprep.subr.bf16.mxu0 0
  %1059 = vmatpush1.bf16.msra.mxu0 0
  %1060 = vmatprep.subr.bf16.mxu0 0
  %1061 = vmatpush1.bf16.msra.mxu0 0
  %1062 = vmatprep.subr.bf16.mxu0 0
  %1063 = vmatpush1.bf16.msra.mxu0 0
  %1064 = vmatprep.subr.bf16.mxu0 0
  %1065 = vmatpush1.bf16.msra.mxu0 0
  %1066 = vmatprep.subr.bf16.mxu0 0
  %1067 = vmatpush1.bf16.msra.mxu0 0
  %1068 = vmatprep.subr.bf16.mxu0 0
  %1069 = vmatpush1.bf16.msra.mxu0 0
  %1070 = vmatprep.subr.bf16.mxu0 0
  %1071 = vmatpush1.bf16.msra.mxu0 0
  %1072 = vmatprep.subr.bf16.mxu0 0
  %1073 = vmatpush1.bf16.msra.mxu0 0
  %1074 = vmatprep.subr.bf16.mxu0 0
  %1075 = vmatpush1.bf16.msra.mxu0 0
  %1076 = vmatprep.subr.bf16.mxu0 0
  %1077 = vmatpush1.bf16.msra.mxu0 0
  %1078 = vmatprep.subr.bf16.mxu0 0
  %1079 = vmatpush1.bf16.msra.mxu0 0
  %1080 = vmatprep.subr.bf16.mxu0 0
  %1081 = vmatpush1.bf16.msra.mxu0 0
  %1082 = vmatprep.subr.bf16.mxu0 0
  %1083 = vmatpush1.bf16.msra.mxu0 0
  %1084 = vmatprep.subr.bf16.mxu0 0
  %1085 = vmatpush1.bf16.msra.mxu0 0
  %1086 = vmatprep.mubr.bf16.mxu0 0
  %1087 = vmatmul.mubr.bf16.gmra.mrb[0].mxu0 %v1049
  %v1088 = vpop.f32.mrb[0].mxu0
  %v1089 = vadd.f32 0.0, %v1088
  %v1090 = vpop.f32.mrb[0].mxu0
  %v1091 = vpop.f32.mrb[0].mxu0
  %v1092 = vadd.f32 0.0, %v1091
  %v1093 = vpop.f32.mrb[0].mxu0
  %1094 = vdwg.mxu0
  %1096 = vrot.lane.b32.xlu0 %v577, 96
  %v1097 = vpop.permute.xlu0 %1096
  %v1100 = vsel %vm77, %v1005, 0
  %1102 = vmatprep.subr.bf16.mxu0 0
  %1103 = vmatpush1.bf16.msra.mxu0 %v1097
  %1104 = vmatprep.subr.bf16.mxu0 0
  %1105 = vmatpush1.bf16.msra.mxu0 0
  %1106 = vmatprep.subr.bf16.mxu0 0
  %1107 = vmatpush1.bf16.msra.mxu0 0
  %1108 = vmatprep.subr.bf16.mxu0 0
  %1109 = vmatpush1.bf16.msra.mxu0 0
  %1110 = vmatprep.subr.bf16.mxu0 0
  %1111 = vmatpush1.bf16.msra.mxu0 0
  %1112 = vmatprep.subr.bf16.mxu0 0
  %1113 = vmatpush1.bf16.msra.mxu0 0
  %1114 = vmatprep.subr.bf16.mxu0 0
  %1115 = vmatpush1.bf16.msra.mxu0 0
  %1116 = vmatprep.subr.bf16.mxu0 0
  %1117 = vmatpush1.bf16.msra.mxu0 0
  %1118 = vmatprep.subr.bf16.mxu0 0
  %1119 = vmatpush1.bf16.msra.mxu0 0
  %1120 = vmatprep.subr.bf16.mxu0 0
  %1121 = vmatpush1.bf16.msra.mxu0 0
  %1122 = vmatprep.subr.bf16.mxu0 0
  %1123 = vmatpush1.bf16.msra.mxu0 0
  %1124 = vmatprep.subr.bf16.mxu0 0
  %1125 = vmatpush1.bf16.msra.mxu0 0
  %1126 = vmatprep.subr.bf16.mxu0 0
  %1127 = vmatpush1.bf16.msra.mxu0 0
  %1128 = vmatprep.subr.bf16.mxu0 0
  %1129 = vmatpush1.bf16.msra.mxu0 0
  %1130 = vmatprep.subr.bf16.mxu0 0
  %1131 = vmatpush1.bf16.msra.mxu0 0
  %1132 = vmatprep.subr.bf16.mxu0 0
  %1133 = vmatpush1.bf16.msra.mxu0 0
  %1134 = vmatprep.mubr.bf16.mxu0 0
  %1135 = vmatmul.mubr.bf16.gmra.mrb[0].mxu0 %v1100
  %v1136 = vpop.f32.mrb[0].mxu0
  %v1137 = vadd.f32 %v1089, %v1136
  %v1138 = vpop.f32.mrb[0].mxu0
  %v1139 = vpop.f32.mrb[0].mxu0
  %v1140 = vadd.f32 %v1092, %v1139
  %v1141 = vpop.f32.mrb[0].mxu0
  %1142 = vdwg.mxu0
  %v1143 = vpack.c.bf16 %v1140, %v1137
  %v1145 = vsel %vm414, %v1143, 0
  %1147 = vmatprep.subr.bf16.mxu0 0
  %1148 = vmatpush1.bf16.msra.mxu0 %v289
  %1149 = vmatprep.subr.bf16.mxu0 0
  %1150 = vmatpush1.bf16.msra.mxu0 %v290
  %1151 = vmatprep.subr.bf16.mxu0 0
  %1152 = vmatpush1.bf16.msra.mxu0 0
  %1153 = vmatprep.subr.bf16.mxu0 0
  %1154 = vmatpush1.bf16.msra.mxu0 0
  %1155 = vmatprep.subr.bf16.mxu0 0
  %1156 = vmatpush1.bf16.msra.mxu0 0
  %1157 = vmatprep.subr.bf16.mxu0 0
  %1158 = vmatpush1.bf16.msra.mxu0 0
  %1159 = vmatprep.subr.bf16.mxu0 0
  %1160 = vmatpush1.bf16.msra.mxu0 0
  %1161 = vmatprep.subr.bf16.mxu0 0
  %1162 = vmatpush1.bf16.msra.mxu0 0
  %1163 = vmatprep.subr.bf16.mxu0 0
  %1164 = vmatpush1.bf16.msra.mxu0 0
  %1165 = vmatprep.subr.bf16.mxu0 0
  %1166 = vmatpush1.bf16.msra.mxu0 0
  %1167 = vmatprep.subr.bf16.mxu0 0
  %1168 = vmatpush1.bf16.msra.mxu0 0
  %1169 = vmatprep.subr.bf16.mxu0 0
  %1170 = vmatpush1.bf16.msra.mxu0 0
  %1171 = vmatprep.subr.bf16.mxu0 0
  %1172 = vmatpush1.bf16.msra.mxu0 0
  %1173 = vmatprep.subr.bf16.mxu0 0
  %1174 = vmatpush1.bf16.msra.mxu0 0
  %1175 = vmatprep.subr.bf16.mxu0 0
  %1176 = vmatpush1.bf16.msra.mxu0 0
  %1177 = vmatprep.subr.bf16.mxu0 0
  %1178 = vmatpush1.bf16.msra.mxu0 0
  %1179 = vmatprep.mubr.bf16.mxu0 0
  %1180 = vmatmul.mubr.bf16.gmra.mrb[0].mxu0 %v1145
  %v1181 = vpop.f32.mrb[0].mxu0
  %v1182 = vadd.f32 0.0, %v1181
  %v1183 = vpop.f32.mrb[0].mxu0
  %v1184 = vpop.f32.mrb[0].mxu0
  %v1185 = vadd.f32 0.0, %v1184
  %v1186 = vpop.f32.mrb[0].mxu0
  %1187 = vdwg.mxu0
  %v1188 = vadd.f32 %v759, %v1182
  %v1189 = vadd.f32 %v760, %v1185
  %v1190 = vmax.f32 %v1188, 0.0
  %v1191 = vmax.f32 %v1189, 0.0
  %v1192 = vsel %vm414, %v1190, 0.0
  %1193 = vadd.xlane.f32.xlu0 %v1192
  %v1194 = vpop.xlane.xlu0 %1193
  %v1195 = vsel %vm414, %v1191, 0.0
  %1196 = vadd.xlane.f32.xlu0 %v1195
  %v1197 = vpop.xlane.xlu0 %1196
  %v1198 = vrcp.pop 32.0
  %v1199 = vmul.f32 %v1194, %v1198
  %v1200 = vmul.f32 %v1197, %v1198
  %v1201 = vsub.f32 %v1190, %v1199
  %v1202 = vsub.f32 %v1191, %v1200
  %v1203 = vmul.f32 %v1201, %v1201
  %v1204 = vmul.f32 %v1202, %v1202
  %v1205 = vsel %vm414, %v1203, 0.0
  %1206 = vadd.xlane.f32.xlu0 %v1205
  %v1207 = vpop.xlane.xlu0 %1206
  %v1208 = vsel %vm414, %v1204, 0.0
  %1209 = vadd.xlane.f32.xlu0 %v1208
  %v1210 = vpop.xlane.xlu0 %1209
  %v1211 = vmul.f32 %v1207, %v1198
  %v1212 = vmul.f32 %v1210, %v1198
  %v1213 = vadd.f32 %v1211, 1e-05
  %v1214 = vadd.f32 %v1212, 1e-05
  %v1215 = vrsqrt.pop %v1213
  %v1216 = vrsqrt.pop %v1214
  %v1217 = vmul.f32 %v1201, %v1215
  %v1218 = vmul.f32 %v1202, %v1216
  %v1219 = vld [vmem:[%s14] sm:$0x1]
  %v1221 = vlaneseq
  %v1222 = vshrl.u32 %v1221, 7
  %v1223 = vsub.s32 0, %v1222
  %v1224 = vrot.slane %v1219, %v1223
  %v1226 = vmul.f32 %v1217, %v1224
  %v1227 = vmul.f32 %v1218, %v1224
  %v1228 = vld [vmem:[%s15] sm:$0x1]
  %v1230 = vlaneseq
  %v1231 = vshrl.u32 %v1230, 7
  %v1232 = vsub.s32 0, %v1231
  %v1233 = vrot.slane %v1228, %v1232
  %v1235 = vadd.f32 %v1226, %v1233
  %v1236 = vadd.f32 %v1227, %v1233
  %1237 = vst.msk [vmem:[%s16] sm:$0xff] %vm414, %v1235
  %1238 = vst.msk [vmem:[%s16 + $0x8] sm:$0xff] %vm414, %v1236
  // Predicated region
  $region66: #{fwd.3} parent=0 // pred_check
    _
  $region67: #{fwd.3} parent=0 // pred_check_branch
    %1240 = sbr.rel (0) target = $region69
  $region68: #{fwd.3} parent=0 // pred_region
    _
  $region69: #{fwd.3} parent=0 // pred_fallthru
    _
  // Predicated region
  $region70: #{fwd.3} parent=0 // pred_check
    _
  $region71: #{fwd.3} parent=0 // pred_check_branch
    %1242 = sbr.rel (0) target = $region73
  $region72: #{fwd.3} parent=0 // pred_region
    _
  $region73: #{fwd.3} parent=0 // pred_fallthru
    _

// kernel: fwd.4
$region0: #{fwd.4}
  #allocation0 [shape = 'u32[]', space=smem, size = 0x4, offset = 0x4, fixed_abs, tag = 'smem constant byte address 0x4 - core index']
  #allocation1 [shape = 'u32[144,128]{1,0:T(1,128)}', space=vmem, size = 0x12000, scoped, tag = 'internal scratch']
  %s0 = inlined_call_operand.vmem [shape: f32[16,32], index: 0, kind: input, shape index: {}]
  %s1 = inlined_call_operand.vmem [shape: f32[16,16], index: 1, kind: input, shape index: {}]
  %s2 = inlined_call_operand.vmem [shape: f32[4,16,16], index: 2, kind: input, shape index: {}]
  %s3 = inlined_call_operand.vmem [shape: f32[32,64], index: 3, kind: input, shape index: {}]
  %s4 = inlined_call_operand.vmem [shape: f32[1,64], index: 4, kind: input, shape index: {}]
  %s5 = inlined_call_operand.vmem [shape: f32[32,64], index: 5, kind: input, shape index: {}]
  %s6 = inlined_call_operand.vmem [shape: f32[1,64], index: 6, kind: input, shape index: {}]
  %s7 = inlined_call_operand.vmem [shape: f32[32,64], index: 7, kind: input, shape index: {}]
  %s8 = inlined_call_operand.vmem [shape: f32[1,64], index: 8, kind: input, shape index: {}]
  %s9 = inlined_call_operand.vmem [shape: f32[4,64], index: 9, kind: input, shape index: {}]
  %s10 = inlined_call_operand.vmem [shape: f32[32,64], index: 10, kind: input, shape index: {}]
  %s11 = inlined_call_operand.vmem [shape: f32[1,64], index: 11, kind: input, shape index: {}]
  %s12 = inlined_call_operand.vmem [shape: f32[64,32], index: 12, kind: input, shape index: {}]
  %s13 = inlined_call_operand.vmem [shape: f32[1,32], index: 13, kind: input, shape index: {}]
  %s14 = inlined_call_operand.vmem [shape: f32[1,32], index: 14, kind: input, shape index: {}]
  %s15 = inlined_call_operand.vmem [shape: f32[1,32], index: 15, kind: input, shape index: {}]
  %s16 = inlined_call_operand.vmem [shape: f32[16,32], index: 16, kind: output, shape index: {}]
  %s17 = sld [smem:[#allocation0]]
  $region74: #{fwd.4} parent=0
    _
  %s19 = ssub.s32 1, %s17
  %s20 = scalar_select 0, %s19, %s17
  // Predicated region
  $region2: #{fwd.4} parent=0 // pred_check
    _
  $region3: #{fwd.4} parent=0 // pred_check_branch
    %22 = sbr.rel (0) target = $region5
  $region4: #{fwd.4} parent=0 // pred_region
    _
  $region5: #{fwd.4} parent=0 // pred_fallthru
    _
  // Predicated region
  $region6: #{fwd.4} parent=0 // pred_check
    _
  $region7: #{fwd.4} parent=0 // pred_check_branch
    %24 = sbr.rel (0) target = $region9
  $region8: #{fwd.4} parent=0 // pred_region
    _
  $region9: #{fwd.4} parent=0 // pred_fallthru
    _
  // Predicated region
  $region10: #{fwd.4} parent=0 // pred_check
    _
  $region11: #{fwd.4} parent=0 // pred_check_branch
    %26 = sbr.rel (0) target = $region13
  $region12: #{fwd.4} parent=0 // pred_region
    _
  $region13: #{fwd.4} parent=0 // pred_fallthru
    _
  // Predicated region
  $region14: #{fwd.4} parent=0 // pred_check
    _
  $region15: #{fwd.4} parent=0 // pred_check_branch
    %28 = sbr.rel (0) target = $region17
  $region16: #{fwd.4} parent=0 // pred_region
    _
  $region17: #{fwd.4} parent=0 // pred_fallthru
    _
  // Predicated region
  $region18: #{fwd.4} parent=0 // pred_check
    _
  $region19: #{fwd.4} parent=0 // pred_check_branch
    %30 = sbr.rel (0) target = $region21
  $region20: #{fwd.4} parent=0 // pred_region
    _
  $region21: #{fwd.4} parent=0 // pred_fallthru
    _
  // Predicated region
  $region22: #{fwd.4} parent=0 // pred_check
    _
  $region23: #{fwd.4} parent=0 // pred_check_branch
    %32 = sbr.rel (0) target = $region25
  $region24: #{fwd.4} parent=0 // pred_region
    _
  $region25: #{fwd.4} parent=0 // pred_fallthru
    _
  // Predicated region
  $region26: #{fwd.4} parent=0 // pred_check
    _
  $region27: #{fwd.4} parent=0 // pred_check_branch
    %34 = sbr.rel (0) target = $region29
  $region28: #{fwd.4} parent=0 // pred_region
    _
  $region29: #{fwd.4} parent=0 // pred_fallthru
    _
  // Predicated region
  $region30: #{fwd.4} parent=0 // pred_check
    _
  $region31: #{fwd.4} parent=0 // pred_check_branch
    %36 = sbr.rel (0) target = $region33
  $region32: #{fwd.4} parent=0 // pred_region
    _
  $region33: #{fwd.4} parent=0 // pred_fallthru
    _
  // Predicated region
  $region34: #{fwd.4} parent=0 // pred_check
    _
  $region35: #{fwd.4} parent=0 // pred_check_branch
    %38 = sbr.rel (0) target = $region37
  $region36: #{fwd.4} parent=0 // pred_region
    _
  $region37: #{fwd.4} parent=0 // pred_fallthru
    _
  // Predicated region
  $region38: #{fwd.4} parent=0 // pred_check
    _
  $region39: #{fwd.4} parent=0 // pred_check_branch
    %40 = sbr.rel (0) target = $region41
  $region40: #{fwd.4} parent=0 // pred_region
    _
  $region41: #{fwd.4} parent=0 // pred_fallthru
    _
  // Predicated region
  $region42: #{fwd.4} parent=0 // pred_check
    _
  $region43: #{fwd.4} parent=0 // pred_check_branch
    %42 = sbr.rel (0) target = $region45
  $region44: #{fwd.4} parent=0 // pred_region
    _
  $region45: #{fwd.4} parent=0 // pred_fallthru
    _
  // Predicated region
  $region46: #{fwd.4} parent=0 // pred_check
    _
  $region47: #{fwd.4} parent=0 // pred_check_branch
    %44 = sbr.rel (0) target = $region49
  $region48: #{fwd.4} parent=0 // pred_region
    _
  $region49: #{fwd.4} parent=0 // pred_fallthru
    _
  // Predicated region
  $region50: #{fwd.4} parent=0 // pred_check
    _
  $region51: #{fwd.4} parent=0 // pred_check_branch
    %46 = sbr.rel (0) target = $region53
  $region52: #{fwd.4} parent=0 // pred_region
    _
  $region53: #{fwd.4} parent=0 // pred_fallthru
    _
  // Predicated region
  $region54: #{fwd.4} parent=0 // pred_check
    _
  $region55: #{fwd.4} parent=0 // pred_check_branch
    %48 = sbr.rel (0) target = $region57
  $region56: #{fwd.4} parent=0 // pred_region
    _
  $region57: #{fwd.4} parent=0 // pred_fallthru
    _
  // Predicated region
  $region58: #{fwd.4} parent=0 // pred_check
    _
  $region59: #{fwd.4} parent=0 // pred_check_branch
    %50 = sbr.rel (0) target = $region61
  $region60: #{fwd.4} parent=0 // pred_region
    _
  $region61: #{fwd.4} parent=0 // pred_fallthru
    _
  // Predicated region
  $region62: #{fwd.4} parent=0 // pred_check
    _
  $region63: #{fwd.4} parent=0 // pred_check_branch
    %52 = sbr.rel (0) target = $region65
  $region64: #{fwd.4} parent=0 // pred_region
    _
  $region65: #{fwd.4} parent=0 // pred_fallthru
    _
  %v54 = vld [vmem:[%s0] sm:$0xff]
  %v55 = vld [vmem:[%s0 + $0x8] sm:$0xff]
  %v56 = vld [vmem:[%s1] sm:$0xff]
  %v57 = vld [vmem:[%s1 + $0x8] sm:$0xff]
  %v58 = vld [vmem:[%s2] sm:$0xff]
  %v59 = vld [vmem:[%s2 + $0x8] sm:$0xff]
  %v60 = vld [vmem:[%s2 + $0x10] sm:$0xff]
  %v61 = vld [vmem:[%s2 + $0x18] sm:$0xff]
  %v62 = vld [vmem:[%s2 + $0x20] sm:$0xff]
  %v63 = vld [vmem:[%s2 + $0x28] sm:$0xff]
  %v64 = vld [vmem:[%s2 + $0x30] sm:$0xff]
  %v65 = vld [vmem:[%s2 + $0x38] sm:$0xff]
  %v66 = vld [vmem:[%s3] sm:$0xff]
  %v67 = vld [vmem:[%s3 + $0x8] sm:$0xff]
  %v68 = vld [vmem:[%s3 + $0x10] sm:$0xff]
  %v69 = vld [vmem:[%s3 + $0x18] sm:$0xff]
  %v70 = vpack.c.bf16 %v55, %v54
  %v71 = vpack.c.bf16 %v67, %v66
  %v72 = vpack.c.bf16 %v69, %v68
  %v73 = vld [vmem:[%s4] sm:$0x1]
  %v75 = vlaneseq
  %v76 = vshrl.u32 %v75, 7
  %v77 = vsub.s32 0, %v76
  %v78 = vrot.slane %v73, %v77
  %vm80 = vcmask 261120
  %v82 = vsel %vm80, %v70, 0
  %84 = vmatprep.subr.bf16.mxu0 0
  %85 = vmatpush1.bf16.msra.mxu0 %v71
  %86 = vmatprep.subr.bf16.mxu0 0
  %87 = vmatpush1.bf16.msra.mxu0 %v72
  %88 = vmatprep.subr.bf16.mxu0 0
  %89 = vmatpush1.bf16.msra.mxu0 0
  %90 = vmatprep.subr.bf16.mxu0 0
  %91 = vmatpush1.bf16.msra.mxu0 0
  %92 = vmatprep.subr.bf16.mxu0 0
  %93 = vmatpush1.bf16.msra.mxu0 0
  %94 = vmatprep.subr.bf16.mxu0 0
  %95 = vmatpush1.bf16.msra.mxu0 0
  %96 = vmatprep.subr.bf16.mxu0 0
  %97 = vmatpush1.bf16.msra.mxu0 0
  %98 = vmatprep.subr.bf16.mxu0 0
  %99 = vmatpush1.bf16.msra.mxu0 0
  %100 = vmatprep.subr.bf16.mxu0 0
  %101 = vmatpush1.bf16.msra.mxu0 0
  %102 = vmatprep.subr.bf16.mxu0 0
  %103 = vmatpush1.bf16.msra.mxu0 0
  %104 = vmatprep.subr.bf16.mxu0 0
  %105 = vmatpush1.bf16.msra.mxu0 0
  %106 = vmatprep.subr.bf16.mxu0 0
  %107 = vmatpush1.bf16.msra.mxu0 0
  %108 = vmatprep.subr.bf16.mxu0 0
  %109 = vmatpush1.bf16.msra.mxu0 0
  %110 = vmatprep.subr.bf16.mxu0 0
  %111 = vmatpush1.bf16.msra.mxu0 0
  %112 = vmatprep.subr.bf16.mxu0 0
  %113 = vmatpush1.bf16.msra.mxu0 0
  %114 = vmatprep.subr.bf16.mxu0 0
  %115 = vmatpush1.bf16.msra.mxu0 0
  %116 = vmatprep.mubr.bf16.mxu0 0
  %117 = vmatmul.mubr.bf16.gmra.mrb[0].mxu0 %v82
  %v118 = vpop.f32.mrb[0].mxu0
  %v119 = vadd.f32 %v78, %v118
  %v120 = vpop.f32.mrb[0].mxu0
  %v121 = vpop.f32.mrb[0].mxu0
  %v122 = vadd.f32 %v78, %v121
  %v123 = vpop.f32.mrb[0].mxu0
  %124 = vdwg.mxu0
  %v125 = vmul.f32 %v119, 0.17677669
  %v126 = vmul.f32 %v122, 0.17677669
  %v127 = vld [vmem:[%s5] sm:$0xff]
  %v128 = vld [vmem:[%s5 + $0x8] sm:$0xff]
  %v129 = vld [vmem:[%s5 + $0x10] sm:$0xff]
  %v130 = vld [vmem:[%s5 + $0x18] sm:$0xff]
  %v131 = vpack.c.bf16 %v128, %v127
  %v132 = vpack.c.bf16 %v130, %v129
  %v133 = vld [vmem:[%s6] sm:$0x1]
  %v135 = vlaneseq
  %v136 = vshrl.u32 %v135, 7
  %v137 = vsub.s32 0, %v136
  %v138 = vrot.slane %v133, %v137
  %140 = vmatprep.subr.bf16.mxu0 0
  %141 = vmatpush1.bf16.msra.mxu0 %v131
  %142 = vmatprep.subr.bf16.mxu0 0
  %143 = vmatpush1.bf16.msra.mxu0 %v132
  %144 = vmatprep.subr.bf16.mxu0 0
  %145 = vmatpush1.bf16.msra.mxu0 0
  %146 = vmatprep.subr.bf16.mxu0 0
  %147 = vmatpush1.bf16.msra.mxu0 0
  %148 = vmatprep.subr.bf16.mxu0 0
  %149 = vmatpush1.bf16.msra.mxu0 0
  %150 = vmatprep.subr.bf16.mxu0 0
  %151 = vmatpush1.bf16.msra.mxu0 0
  %152 = vmatprep.subr.bf16.mxu0 0
  %153 = vmatpush1.bf16.msra.mxu0 0
  %154 = vmatprep.subr.bf16.mxu0 0
  %155 = vmatpush1.bf16.msra.mxu0 0
  %156 = vmatprep.subr.bf16.mxu0 0
  %157 = vmatpush1.bf16.msra.mxu0 0
  %158 = vmatprep.subr.bf16.mxu0 0
  %159 = vmatpush1.bf16.msra.mxu0 0
  %160 = vmatprep.subr.bf16.mxu0 0
  %161 = vmatpush1.bf16.msra.mxu0 0
  %162 = vmatprep.subr.bf16.mxu0 0
  %163 = vmatpush1.bf16.msra.mxu0 0
  %164 = vmatprep.subr.bf16.mxu0 0
  %165 = vmatpush1.bf16.msra.mxu0 0
  %166 = vmatprep.subr.bf16.mxu0 0
  %167 = vmatpush1.bf16.msra.mxu0 0
  %168 = vmatprep.subr.bf16.mxu0 0
  %169 = vmatpush1.bf16.msra.mxu0 0
  %170 = vmatprep.subr.bf16.mxu0 0
  %171 = vmatpush1.bf16.msra.mxu0 0
  %172 = vmatprep.mubr.bf16.mxu0 0
  %173 = vmatmul.mubr.bf16.gmra.mrb[0].mxu0 %v82
  %v174 = vpop.f32.mrb[0].mxu0
  %v175 = vadd.f32 %v138, %v174
  %v176 = vpop.f32.mrb[0].mxu0
  %v177 = vpop.f32.mrb[0].mxu0
  %v178 = vadd.f32 %v138, %v177
  %v179 = vpop.f32.mrb[0].mxu0
  %180 = vdwg.mxu0
  %v181 = vld [vmem:[%s7] sm:$0xff]
  %v182 = vld [vmem:[%s7 + $0x8] sm:$0xff]
  %v183 = vld [vmem:[%s7 + $0x10] sm:$0xff]
  %v184 = vld [vmem:[%s7 + $0x18] sm:$0xff]
  %v185 = vpack.c.bf16 %v182, %v181
  %v186 = vpack.c.bf16 %v184, %v183
  %v187 = vld [vmem:[%s8] sm:$0x1]
  %v189 = vlaneseq
  %v190 = vshrl.u32 %v189, 7
  %v191 = vsub.s32 0, %v190
  %v192 = vrot.slane %v187, %v191
  %194 = vmatprep.subr.bf16.mxu0 0
  %195 = vmatpush1.bf16.msra.mxu0 %v185
  %196 = vmatprep.subr.bf16.mxu0 0
  %197 = vmatpush1.bf16.msra.mxu0 %v186
  %198 = vmatprep.subr.bf16.mxu0 0
  %199 = vmatpush1.bf16.msra.mxu0 0
  %200 = vmatprep.subr.bf16.mxu0 0
  %201 = vmatpush1.bf16.msra.mxu0 0
  %202 = vmatprep.subr.bf16.mxu0 0
  %203 = vmatpush1.bf16.msra.mxu0 0
  %204 = vmatprep.subr.bf16.mxu0 0
  %205 = vmatpush1.bf16.msra.mxu0 0
  %206 = vmatprep.subr.bf16.mxu0 0
  %207 = vmatpush1.bf16.msra.mxu0 0
  %208 = vmatprep.subr.bf16.mxu0 0
  %209 = vmatpush1.bf16.msra.mxu0 0
  %210 = vmatprep.subr.bf16.mxu0 0
  %211 = vmatpush1.bf16.msra.mxu0 0
  %212 = vmatprep.subr.bf16.mxu0 0
  %213 = vmatpush1.bf16.msra.mxu0 0
  %214 = vmatprep.subr.bf16.mxu0 0
  %215 = vmatpush1.bf16.msra.mxu0 0
  %216 = vmatprep.subr.bf16.mxu0 0
  %217 = vmatpush1.bf16.msra.mxu0 0
  %218 = vmatprep.subr.bf16.mxu0 0
  %219 = vmatpush1.bf16.msra.mxu0 0
  %220 = vmatprep.subr.bf16.mxu0 0
  %221 = vmatpush1.bf16.msra.mxu0 0
  %222 = vmatprep.subr.bf16.mxu0 0
  %223 = vmatpush1.bf16.msra.mxu0 0
  %224 = vmatprep.subr.bf16.mxu0 0
  %225 = vmatpush1.bf16.msra.mxu0 0
  %226 = vmatprep.mubr.bf16.mxu0 0
  %227 = vmatmul.mubr.bf16.gmra.mrb[0].mxu0 %v82
  %v228 = vpop.f32.mrb[0].mxu0
  %v229 = vadd.f32 %v192, %v228
  %v230 = vpop.f32.mrb[0].mxu0
  %v231 = vpop.f32.mrb[0].mxu0
  %v232 = vadd.f32 %v192, %v231
  %v233 = vpop.f32.mrb[0].mxu0
  %234 = vdwg.mxu0
  %v235 = vld [vmem:[%s9] sm:$0xf]
  %v236 = vld [vmem:[%s12] sm:$0xff]
  %v237 = vld [vmem:[%s12 + $0x8] sm:$0xff]
  %v238 = vld [vmem:[%s12 + $0x10] sm:$0xff]
  %v239 = vld [vmem:[%s12 + $0x18] sm:$0xff]
  %v240 = vld [vmem:[%s12 + $0x20] sm:$0xff]
  %v241 = vld [vmem:[%s12 + $0x28] sm:$0xff]
  %v242 = vld [vmem:[%s12 + $0x30] sm:$0xff]
  %v243 = vld [vmem:[%s12 + $0x38] sm:$0xff]
  %v244 = vld [vmem:[%s10] sm:$0xff]
  %v245 = vld [vmem:[%s10 + $0x8] sm:$0xff]
  %v246 = vld [vmem:[%s10 + $0x10] sm:$0xff]
  %v247 = vld [vmem:[%s10 + $0x18] sm:$0xff]
  %v248 = vpack.c.bf16 %v245, %v244
  %v249 = vpack.c.bf16 %v247, %v246
  %v250 = vld [vmem:[%s11] sm:$0x1]
  %v252 = vlaneseq
  %v253 = vshrl.u32 %v252, 7
  %v254 = vsub.s32 0, %v253
  %v255 = vrot.slane %v250, %v254
  %257 = vmatprep.subr.bf16.mxu0 0
  %258 = vmatpush1.bf16.msra.mxu0 %v248
  %259 = vmatprep.subr.bf16.mxu0 0
  %260 = vmatpush1.bf16.msra.mxu0 %v249
  %261 = vmatprep.subr.bf16.mxu0 0
  %262 = vmatpush1.bf16.msra.mxu0 0
  %263 = vmatprep.subr.bf16.mxu0 0
  %264 = vmatpush1.bf16.msra.mxu0 0
  %265 = vmatprep.subr.bf16.mxu0 0
  %266 = vmatpush1.bf16.msra.mxu0 0
  %267 = vmatprep.subr.bf16.mxu0 0
  %268 = vmatpush1.bf16.msra.mxu0 0
  %269 = vmatprep.subr.bf16.mxu0 0
  %270 = vmatpush1.bf16.msra.mxu0 0
  %271 = vmatprep.subr.bf16.mxu0 0
  %272 = vmatpush1.bf16.msra.mxu0 0
  %273 = vmatprep.subr.bf16.mxu0 0
  %274 = vmatpush1.bf16.msra.mxu0 0
  %275 = vmatprep.subr.bf16.mxu0 0
  %276 = vmatpush1.bf16.msra.mxu0 0
  %277 = vmatprep.subr.bf16.mxu0 0
  %278 = vmatpush1.bf16.msra.mxu0 0
  %279 = vmatprep.subr.bf16.mxu0 0
  %280 = vmatpush1.bf16.msra.mxu0 0
  %281 = vmatprep.subr.bf16.mxu0 0
  %282 = vmatpush1.bf16.msra.mxu0 0
  %283 = vmatprep.subr.bf16.mxu0 0
  %284 = vmatpush1.bf16.msra.mxu0 0
  %285 = vmatprep.subr.bf16.mxu0 0
  %286 = vmatpush1.bf16.msra.mxu0 0
  %287 = vmatprep.subr.bf16.mxu0 0
  %288 = vmatpush1.bf16.msra.mxu0 0
  %289 = vmatprep.mubr.bf16.mxu0 0
  %290 = vmatmul.mubr.bf16.gmra.mrb[0].mxu0 %v82
  %v291 = vpop.f32.mrb[0].mxu0
  %v292 = vadd.f32 %v255, %v291
  %v293 = vpop.f32.mrb[0].mxu0
  %v294 = vpop.f32.mrb[0].mxu0
  %v295 = vadd.f32 %v255, %v294
  %v296 = vpop.f32.mrb[0].mxu0
  %297 = vdwg.mxu0
  %v298 = vpack.c.bf16 %v295, %v292
  %v299 = vpack.c.bf16 %v237, %v236
  %v300 = vpack.c.bf16 %v239, %v238
  %v301 = vpack.c.bf16 %v241, %v240
  %v302 = vpack.c.bf16 %v243, %v242
  %v303 = vld [vmem:[%s13] sm:$0x1]
  %v305 = vlaneseq
  %v306 = vshrl.u32 %v305, 7
  %v307 = vsub.s32 0, %v306
  %v308 = vrot.slane %v303, %v307
  %vm310 = vcmask 523264
  %v312 = vsel %vm310, %v298, 0
  %314 = vmatprep.subr.bf16.mxu0 0
  %315 = vmatpush1.bf16.msra.mxu0 %v299
  %316 = vmatprep.subr.bf16.mxu0 0
  %317 = vmatpush1.bf16.msra.mxu0 %v300
  %318 = vmatprep.subr.bf16.mxu0 0
  %319 = vmatpush1.bf16.msra.mxu0 %v301
  %320 = vmatprep.subr.bf16.mxu0 0
  %321 = vmatpush1.bf16.msra.mxu0 %v302
  %322 = vmatprep.subr.bf16.mxu0 0
  %323 = vmatpush1.bf16.msra.mxu0 0
  %324 = vmatprep.subr.bf16.mxu0 0
  %325 = vmatpush1.bf16.msra.mxu0 0
  %326 = vmatprep.subr.bf16.mxu0 0
  %327 = vmatpush1.bf16.msra.mxu0 0
  %328 = vmatprep.subr.bf16.mxu0 0
  %329 = vmatpush1.bf16.msra.mxu0 0
  %330 = vmatprep.subr.bf16.mxu0 0
  %331 = vmatpush1.bf16.msra.mxu0 0
  %332 = vmatprep.subr.bf16.mxu0 0
  %333 = vmatpush1.bf16.msra.mxu0 0
  %334 = vmatprep.subr.bf16.mxu0 0
  %335 = vmatpush1.bf16.msra.mxu0 0
  %336 = vmatprep.subr.bf16.mxu0 0
  %337 = vmatpush1.bf16.msra.mxu0 0
  %338 = vmatprep.subr.bf16.mxu0 0
  %339 = vmatpush1.bf16.msra.mxu0 0
  %340 = vmatprep.subr.bf16.mxu0 0
  %341 = vmatpush1.bf16.msra.mxu0 0
  %342 = vmatprep.subr.bf16.mxu0 0
  %343 = vmatpush1.bf16.msra.mxu0 0
  %344 = vmatprep.subr.bf16.mxu0 0
  %345 = vmatpush1.bf16.msra.mxu0 0
  %346 = vmatprep.mubr.bf16.mxu0 0
  %347 = vmatmul.mubr.bf16.gmra.mrb[0].mxu0 %v312
  %v348 = vpop.f32.mrb[0].mxu0
  %v349 = vadd.f32 %v308, %v348
  %v350 = vpop.f32.mrb[0].mxu0
  %v351 = vpop.f32.mrb[0].mxu0
  %v352 = vadd.f32 %v308, %v351
  %v353 = vpop.f32.mrb[0].mxu0
  %354 = vdwg.mxu0
  %vm355 = vcmp.gt.f32.partialorder %v56, 0.0
  %vm356 = vcmp.gt.f32.partialorder %v57, 0.0
  %357 = vxpose.xlu0.b32.start [1/16] %v175, 128
  %358 = vxpose.xlu0.b32.cont [2/16] %v178, 128
  %359 = vxpose.xlu0.b32.cont [3/16] 0.0, 128
  %360 = vxpose.xlu0.b32.cont [4/16] 0.0, 128
  %361 = vxpose.xlu0.b32.cont [5/16] 0.0, 128
  %362 = vxpose.xlu0.b32.cont [6/16] 0.0, 128
  %363 = vxpose.xlu0.b32.cont [7/16] 0.0, 128
  %364 = vxpose.xlu0.b32.cont [8/16] 0.0, 128
  %365 = vxpose.xlu0.b32.cont [9/16] 0.0, 128
  %366 = vxpose.xlu0.b32.cont [10/16] 0.0, 128
  %367 = vxpose.xlu0.b32.cont [11/16] 0.0, 128
  %368 = vxpose.xlu0.b32.cont [12/16] 0.0, 128
  %369 = vxpose.xlu0.b32.cont [13/16] 0.0, 128
  %370 = vxpose.xlu0.b32.cont [14/16] 0.0, 128
  %371 = vxpose.xlu0.b32.cont [15/16] 0.0, 128
  %372 = vxpose.xlu0.b32.end [16/16] 0.0, 128
  %v373 = vpop.trf.xlu0
  %v374 = vpop.trf.xlu0
  %v375 = vpop.trf.xlu0
  %v376 = vpop.trf.xlu0
  %v377 = vpop.trf.xlu0
  %v378 = vpop.trf.xlu0
  %v379 = vpop.trf.xlu0
  %v380 = vpop.trf.xlu0
  %v381 = vpop.trf.xlu0
  %v382 = vpop.trf.xlu0
  %v383 = vpop.trf.xlu0
  %v384 = vpop.trf.xlu0
  %v385 = vpop.trf.xlu0
  %v386 = vpop.trf.xlu0
  %v387 = vpop.trf.xlu0
  %v388 = vpop.trf.xlu0
  %v389 = vpack.c.bf16 %v126, %v125
  %v390 = vpack.c.bf16 %v374, %v373
  %v391 = vpack.c.bf16 %v376, %v375
  %392 = vxpose.xlu0.b32.start [1/16] %v235, 128
  %393 = vxpose.xlu0.b32.cont [2/16] 0.0, 128
  %394 = vxpose.xlu0.b32.cont [3/16] 0.0, 128
  %395 = vxpose.xlu0.b32.cont [4/16] 0.0, 128
  %396 = vxpose.xlu0.b32.cont [5/16] 0.0, 128
  %397 = vxpose.xlu0.b32.cont [6/16] 0.0, 128
  %398 = vxpose.xlu0.b32.cont [7/16] 0.0, 128
  %399 = vxpose.xlu0.b32.cont [8/16] 0.0, 128
  %400 = vxpose.xlu0.b32.cont [9/16] 0.0, 128
  %401 = vxpose.xlu0.b32.cont [10/16] 0.0, 128
  %402 = vxpose.xlu0.b32.cont [11/16] 0.0, 128
  %403 = vxpose.xlu0.b32.cont [12/16] 0.0, 128
  %404 = vxpose.xlu0.b32.cont [13/16] 0.0, 128
  %405 = vxpose.xlu0.b32.cont [14/16] 0.0, 128
  %406 = vxpose.xlu0.b32.cont [15/16] 0.0, 128
  %407 = vxpose.xlu0.b32.end [16/16] 0.0, 128
  %v408 = vpop.trf.xlu0
  %v409 = vpop.trf.xlu0
  %v410 = vpop.trf.xlu0
  %v411 = vpop.trf.xlu0
  %v412 = vpop.trf.xlu0
  %v413 = vpop.trf.xlu0
  %v414 = vpop.trf.xlu0
  %v415 = vpop.trf.xlu0
  %v416 = vpop.trf.xlu0
  %v417 = vpop.trf.xlu0
  %v418 = vpop.trf.xlu0
  %v419 = vpop.trf.xlu0
  %v420 = vpop.trf.xlu0
  %v421 = vpop.trf.xlu0
  %v422 = vpop.trf.xlu0
  %v423 = vpop.trf.xlu0
  %v424 = vpack.c.bf16 %v409, %v408
  %v425 = vpack.c.bf16 %v411, %v410
  %v427 = vsel %vm80, %v389, 0
  %429 = vmatprep.subr.bf16.mxu0 0
  %430 = vmatpush1.bf16.msra.mxu0 %v424
  %431 = vmatprep.subr.bf16.mxu0 0
  %432 = vmatpush1.bf16.msra.mxu0 %v425
  %433 = vmatprep.subr.bf16.mxu0 0
  %434 = vmatpush1.bf16.msra.mxu0 0
  %435 = vmatprep.subr.bf16.mxu0 0
  %436 = vmatpush1.bf16.msra.mxu0 0
  %437 = vmatprep.subr.bf16.mxu0 0
  %438 = vmatpush1.bf16.msra.mxu0 0
  %439 = vmatprep.subr.bf16.mxu0 0
  %440 = vmatpush1.bf16.msra.mxu0 0
  %441 = vmatprep.subr.bf16.mxu0 0
  %442 = vmatpush1.bf16.msra.mxu0 0
  %443 = vmatprep.subr.bf16.mxu0 0
  %444 = vmatpush1.bf16.msra.mxu0 0
  %445 = vmatprep.subr.bf16.mxu0 0
  %446 = vmatpush1.bf16.msra.mxu0 0
  %447 = vmatprep.subr.bf16.mxu0 0
  %448 = vmatpush1.bf16.msra.mxu0 0
  %449 = vmatprep.subr.bf16.mxu0 0
  %450 = vmatpush1.bf16.msra.mxu0 0
  %451 = vmatprep.subr.bf16.mxu0 0
  %452 = vmatpush1.bf16.msra.mxu0 0
  %453 = vmatprep.subr.bf16.mxu0 0
  %454 = vmatpush1.bf16.msra.mxu0 0
  %455 = vmatprep.subr.bf16.mxu0 0
  %456 = vmatpush1.bf16.msra.mxu0 0
  %457 = vmatprep.subr.bf16.mxu0 0
  %458 = vmatpush1.bf16.msra.mxu0 0
  %459 = vmatprep.subr.bf16.mxu0 0
  %460 = vmatpush1.bf16.msra.mxu0 0
  %461 = vmatprep.mubr.bf16.mxu0 0
  %462 = vmatmul.mubr.bf16.gmra.mrb[0].mxu0 %v427
  %v463 = vpop.f32.mrb[0].mxu0
  %v464 = vadd.f32 0.0, %v463
  %v465 = vpop.f32.mrb[0].mxu0
  %v466 = vpop.f32.mrb[0].mxu0
  %v467 = vadd.f32 0.0, %v466
  %v468 = vpop.f32.mrb[0].mxu0
  %469 = vdwg.mxu0
  %471 = vset.pattern.permute.xlu0 0
  %472 = vperm.xlu0 %471, %v464
  %v473 = vpop.permute.xlu0 %472
  %476 = vset.pattern.permute.xlu0 0
  %477 = vperm.xlu0 %476, %v467
  %v478 = vpop.permute.xlu0 %477
  %v480 = vmul.f32 %v473, %v58
  %v481 = vmul.f32 %v478, %v59
  %482 = vmatprep.subr.bf16.mxu0 0
  %483 = vmatpush1.bf16.msra.mxu0 %v390
  %484 = vmatprep.subr.bf16.mxu0 0
  %485 = vmatpush1.bf16.msra.mxu0 %v391
  %486 = vmatprep.subr.bf16.mxu0 0
  %487 = vmatpush1.bf16.msra.mxu0 0
  %488 = vmatprep.subr.bf16.mxu0 0
  %489 = vmatpush1.bf16.msra.mxu0 0
  %490 = vmatprep.subr.bf16.mxu0 0
  %491 = vmatpush1.bf16.msra.mxu0 0
  %492 = vmatprep.subr.bf16.mxu0 0
  %493 = vmatpush1.bf16.msra.mxu0 0
  %494 = vmatprep.subr.bf16.mxu0 0
  %495 = vmatpush1.bf16.msra.mxu0 0
  %496 = vmatprep.subr.bf16.mxu0 0
  %497 = vmatpush1.bf16.msra.mxu0 0
  %498 = vmatprep.subr.bf16.mxu0 0
  %499 = vmatpush1.bf16.msra.mxu0 0
  %500 = vmatprep.subr.bf16.mxu0 0
  %501 = vmatpush1.bf16.msra.mxu0 0
  %502 = vmatprep.subr.bf16.mxu0 0
  %503 = vmatpush1.bf16.msra.mxu0 0
  %504 = vmatprep.subr.bf16.mxu0 0
  %505 = vmatpush1.bf16.msra.mxu0 0
  %506 = vmatprep.subr.bf16.mxu0 0
  %507 = vmatpush1.bf16.msra.mxu0 0
  %508 = vmatprep.subr.bf16.mxu0 0
  %509 = vmatpush1.bf16.msra.mxu0 0
  %510 = vmatprep.subr.bf16.mxu0 0
  %511 = vmatpush1.bf16.msra.mxu0 0
  %512 = vmatprep.subr.bf16.mxu0 0
  %513 = vmatpush1.bf16.msra.mxu0 0
  %514 = vmatprep.mubr.bf16.mxu0 0
  %515 = vmatmul.mubr.bf16.gmra.mrb[0].mxu0 %v427
  %v516 = vpop.f32.mrb[0].mxu0
  %v517 = vadd.f32 %v480, %v516
  %v518 = vpop.f32.mrb[0].mxu0
  %v519 = vpop.f32.mrb[0].mxu0
  %v520 = vadd.f32 %v481, %v519
  %v521 = vpop.f32.mrb[0].mxu0
  %522 = vdwg.mxu0
  %523 = vset.pattern.permute.xlu0 1
  %524 = vperm.xlu0 %523, %v464
  %v525 = vpop.permute.xlu0 %524
  %527 = vset.pattern.permute.xlu0 1
  %528 = vperm.xlu0 %527, %v467
  %v529 = vpop.permute.xlu0 %528
  %v531 = vmul.f32 %v525, %v60
  %v532 = vmul.f32 %v529, %v61
  %v533 = vadd.f32 %v517, %v531
  %v534 = vadd.f32 %v520, %v532
  %535 = vset.pattern.permute.xlu0 2
  %536 = vperm.xlu0 %535, %v464
  %v537 = vpop.permute.xlu0 %536
  %539 = vset.pattern.permute.xlu0 2
  %540 = vperm.xlu0 %539, %v467
  %v541 = vpop.permute.xlu0 %540
  %v543 = vmul.f32 %v537, %v62
  %v544 = vmul.f32 %v541, %v63
  %v545 = vadd.f32 %v533, %v543
  %v546 = vadd.f32 %v534, %v544
  %547 = vset.pattern.permute.xlu0 3
  %548 = vperm.xlu0 %547, %v464
  %v549 = vpop.permute.xlu0 %548
  %551 = vset.pattern.permute.xlu0 3
  %552 = vperm.xlu0 %551, %v467
  %v553 = vpop.permute.xlu0 %552
  %v555 = vmul.f32 %v549, %v64
  %v556 = vmul.f32 %v553, %v65
  %v557 = vadd.f32 %v545, %v555
  %v558 = vadd.f32 %v546, %v556
  %v559 = vsel %vm355, %v557, -1e+30
  %v560 = vsel %vm356, %v558, -1e+30
  %vm561 = vcmask 130048
  %v562 = vsel %vm561, %v559, -inf
  %563 = vmax.xlane.f32.xlu0 %v562
  %v564 = vpop.xlane.xlu0 %563
  %v565 = vsel %vm561, %v560, -inf
  %566 = vmax.xlane.f32.xlu0 %v565
  %v567 = vpop.xlane.xlu0 %566
  %v568 = vsub.f32 %v559, %v564
  %v569 = vsub.f32 %v560, %v567
  %v570 = vmul.f32 %v568, 1.442695
  %v571 = vpow.pop %v570
  %v572 = vmul.f32 %v569, 1.442695
  %v573 = vpow.pop %v572
  %v574 = vsel %vm355, %v571, 0.0
  %v575 = vsel %vm356, %v573, 0.0
  %v576 = vsel %vm561, %v574, 0.0
  %577 = vadd.xlane.f32.xlu0 %v576
  %v578 = vpop.xlane.xlu0 %577
  %v579 = vsel %vm561, %v575, 0.0
  %580 = vadd.xlane.f32.xlu0 %v579
  %v581 = vpop.xlane.xlu0 %580
  %v582 = vmax.f32 %v578, 1e-30
  %v583 = vmax.f32 %v581, 1e-30
  %v584 = vrcp.pop %v582
  %v585 = vrcp.pop %v583
  %v586 = vmul.f32 %v574, %v584
  %v587 = vmul.f32 %v575, %v585
  %v588 = vpack.c.bf16 %v587, %v586
  %v589 = vpack.c.bf16 %v232, %v229
  %v590 = vmul.f32 %v586, %v58
  %v591 = vmul.f32 %v587, %v59
  %v592 = vsel %vm561, %v590, 0.0
  %593 = vadd.xlane.f32.xlu0 %v592
  %v594 = vpop.xlane.xlu0 %593
  %v595 = vsel %vm561, %v591, 0.0
  %596 = vadd.xlane.f32.xlu0 %v595
  %v597 = vpop.xlane.xlu0 %596
  %v598 = vmul.f32 %v586, %v60
  %v599 = vmul.f32 %v587, %v61
  %v600 = vsel %vm561, %v598, 0.0
  %601 = vadd.xlane.f32.xlu0 %v600
  %v602 = vpop.xlane.xlu0 %601
  %v603 = vsel %vm561, %v599, 0.0
  %604 = vadd.xlane.f32.xlu0 %v603
  %v605 = vpop.xlane.xlu0 %604
  %v606 = vmul.f32 %v586, %v62
  %v607 = vmul.f32 %v587, %v63
  %v608 = vsel %vm561, %v606, 0.0
  %609 = vadd.xlane.f32.xlu0 %v608
  %v610 = vpop.xlane.xlu0 %609
  %v611 = vsel %vm561, %v607, 0.0
  %612 = vadd.xlane.f32.xlu0 %v611
  %v613 = vpop.xlane.xlu0 %612
  %v614 = vmul.f32 %v586, %v64
  %v615 = vmul.f32 %v587, %v65
  %v616 = vsel %vm561, %v614, 0.0
  %617 = vadd.xlane.f32.xlu0 %v616
  %v618 = vpop.xlane.xlu0 %617
  %v619 = vsel %vm561, %v615, 0.0
  %620 = vadd.xlane.f32.xlu0 %v619
  %v621 = vpop.xlane.xlu0 %620
  %vm622 = vcmask 7168
  %v623 = vsel %vm622, %v594, %v602
  %v624 = vsel %vm622, %v597, %v605
  %vm625 = vcmask 15360
  %v626 = vsel %vm625, %v623, %v610
  %v627 = vsel %vm625, %v624, %v613
  %vm628 = vcmask 23552
  %v629 = vsel %vm628, %v626, %v618
  %v630 = vsel %vm628, %v627, %v621
  %v631 = vpack.c.bf16 %v630, %v629
  %v632 = vpack.c.bf16 %v235, %v235
  %vm633 = vcmask 31744
  %v635 = vsel %vm633, %v631, 0
  %vm637 = vcmask 1041408
  %v639 = vsel %vm637, %v632, 0
  %641 = vmatprep.subr.bf16.mxu0 0
  %642 = vmatpush1.bf16.msra.mxu0 %v639
  %643 = vmatprep.subr.bf16.mxu0 0
  %644 = vmatpush1.bf16.msra.mxu0 0
  %645 = vmatprep.subr.bf16.mxu0 0
  %646 = vmatpush1.bf16.msra.mxu0 0
  %647 = vmatprep.subr.bf16.mxu0 0
  %648 = vmatpush1.bf16.msra.mxu0 0
  %649 = vmatprep.subr.bf16.mxu0 0
  %650 = vmatpush1.bf16.msra.mxu0 0
  %651 = vmatprep.subr.bf16.mxu0 0
  %652 = vmatpush1.bf16.msra.mxu0 0
  %653 = vmatprep.subr.bf16.mxu0 0
  %654 = vmatpush1.bf16.msra.mxu0 0
  %655 = vmatprep.subr.bf16.mxu0 0
  %656 = vmatpush1.bf16.msra.mxu0 0
  %657 = vmatprep.subr.bf16.mxu0 0
  %658 = vmatpush1.bf16.msra.mxu0 0
  %659 = vmatprep.subr.bf16.mxu0 0
  %660 = vmatpush1.bf16.msra.mxu0 0
  %661 = vmatprep.subr.bf16.mxu0 0
  %662 = vmatpush1.bf16.msra.mxu0 0
  %663 = vmatprep.subr.bf16.mxu0 0
  %664 = vmatpush1.bf16.msra.mxu0 0
  %665 = vmatprep.subr.bf16.mxu0 0
  %666 = vmatpush1.bf16.msra.mxu0 0
  %667 = vmatprep.subr.bf16.mxu0 0
  %668 = vmatpush1.bf16.msra.mxu0 0
  %669 = vmatprep.subr.bf16.mxu0 0
  %670 = vmatpush1.bf16.msra.mxu0 0
  %671 = vmatprep.subr.bf16.mxu0 0
  %672 = vmatpush1.bf16.msra.mxu0 0
  %673 = vmatprep.mubr.bf16.mxu0 0
  %674 = vmatmul.mubr.bf16.gmra.mrb[0].mxu0 %v635
  %v675 = vpop.f32.mrb[0].mxu0
  %v676 = vadd.f32 0.0, %v675
  %v677 = vpop.f32.mrb[0].mxu0
  %v678 = vpop.f32.mrb[0].mxu0
  %v679 = vadd.f32 0.0, %v678
  %v680 = vpop.f32.mrb[0].mxu0
  %681 = vdwg.mxu0
  %v683 = vsel %vm561, %v588, 0
  %685 = vmatprep.subr.bf16.mxu0 0
  %686 = vmatpush1.bf16.msra.mxu0 %v589
  %687 = vmatprep.subr.bf16.mxu0 0
  %688 = vmatpush1.bf16.msra.mxu0 0
  %689 = vmatprep.subr.bf16.mxu0 0
  %690 = vmatpush1.bf16.msra.mxu0 0
  %691 = vmatprep.subr.bf16.mxu0 0
  %692 = vmatpush1.bf16.msra.mxu0 0
  %693 = vmatprep.subr.bf16.mxu0 0
  %694 = vmatpush1.bf16.msra.mxu0 0
  %695 = vmatprep.subr.bf16.mxu0 0
  %696 = vmatpush1.bf16.msra.mxu0 0
  %697 = vmatprep.subr.bf16.mxu0 0
  %698 = vmatpush1.bf16.msra.mxu0 0
  %699 = vmatprep.subr.bf16.mxu0 0
  %700 = vmatpush1.bf16.msra.mxu0 0
  %701 = vmatprep.subr.bf16.mxu0 0
  %702 = vmatpush1.bf16.msra.mxu0 0
  %703 = vmatprep.subr.bf16.mxu0 0
  %704 = vmatpush1.bf16.msra.mxu0 0
  %705 = vmatprep.subr.bf16.mxu0 0
  %706 = vmatpush1.bf16.msra.mxu0 0
  %707 = vmatprep.subr.bf16.mxu0 0
  %708 = vmatpush1.bf16.msra.mxu0 0
  %709 = vmatprep.subr.bf16.mxu0 0
  %710 = vmatpush1.bf16.msra.mxu0 0
  %711 = vmatprep.subr.bf16.mxu0 0
  %712 = vmatpush1.bf16.msra.mxu0 0
  %713 = vmatprep.subr.bf16.mxu0 0
  %714 = vmatpush1.bf16.msra.mxu0 0
  %715 = vmatprep.subr.bf16.mxu0 0
  %716 = vmatpush1.bf16.msra.mxu0 0
  %717 = vmatprep.mubr.bf16.mxu0 0
  %718 = vmatmul.mubr.bf16.gmra.mrb[0].mxu0 %v683
  %v719 = vpop.f32.mrb[0].mxu0
  %v720 = vadd.f32 %v676, %v719
  %v721 = vpop.f32.mrb[0].mxu0
  %v722 = vpop.f32.mrb[0].mxu0
  %v723 = vadd.f32 %v679, %v722
  %v724 = vpop.f32.mrb[0].mxu0
  %725 = vdwg.mxu0
  %v726 = vpack.c.bf16 %v723, %v720
  %v728 = vsel %vm80, %v726, 0
  %730 = vmatprep.subr.bf16.mxu0 0
  %731 = vmatpush1.bf16.msra.mxu0 %v299
  %732 = vmatprep.subr.bf16.mxu0 0
  %733 = vmatpush1.bf16.msra.mxu0 %v300
  %734 = vmatprep.subr.bf16.mxu0 0
  %735 = vmatpush1.bf16.msra.mxu0 0
  %736 = vmatprep.subr.bf16.mxu0 0
  %737 = vmatpush1.bf16.msra.mxu0 0
  %738 = vmatprep.subr.bf16.mxu0 0
  %739 = vmatpush1.bf16.msra.mxu0 0
  %740 = vmatprep.subr.bf16.mxu0 0
  %741 = vmatpush1.bf16.msra.mxu0 0
  %742 = vmatprep.subr.bf16.mxu0 0
  %743 = vmatpush1.bf16.msra.mxu0 0
  %744 = vmatprep.subr.bf16.mxu0 0
  %745 = vmatpush1.bf16.msra.mxu0 0
  %746 = vmatprep.subr.bf16.mxu0 0
  %747 = vmatpush1.bf16.msra.mxu0 0
  %748 = vmatprep.subr.bf16.mxu0 0
  %749 = vmatpush1.bf16.msra.mxu0 0
  %750 = vmatprep.subr.bf16.mxu0 0
  %751 = vmatpush1.bf16.msra.mxu0 0
  %752 = vmatprep.subr.bf16.mxu0 0
  %753 = vmatpush1.bf16.msra.mxu0 0
  %754 = vmatprep.subr.bf16.mxu0 0
  %755 = vmatpush1.bf16.msra.mxu0 0
  %756 = vmatprep.subr.bf16.mxu0 0
  %757 = vmatpush1.bf16.msra.mxu0 0
  %758 = vmatprep.subr.bf16.mxu0 0
  %759 = vmatpush1.bf16.msra.mxu0 0
  %760 = vmatprep.subr.bf16.mxu0 0
  %761 = vmatpush1.bf16.msra.mxu0 0
  %762 = vmatprep.mubr.bf16.mxu0 0
  %763 = vmatmul.mubr.bf16.gmra.mrb[0].mxu0 %v728
  %v764 = vpop.f32.mrb[0].mxu0
  %v765 = vadd.f32 0.0, %v764
  %v766 = vpop.f32.mrb[0].mxu0
  %v767 = vpop.f32.mrb[0].mxu0
  %v768 = vadd.f32 0.0, %v767
  %v769 = vpop.f32.mrb[0].mxu0
  %770 = vdwg.mxu0
  %v771 = vadd.f32 %v349, %v765
  %v772 = vadd.f32 %v352, %v768
  %775 = vrot.lane.b32.xlu0 %v175, 96
  %v776 = vpop.permute.xlu0 %775
  %777 = vrot.lane.b32.xlu0 %v178, 96
  %v778 = vpop.permute.xlu0 %777
  %781 = vxpose.xlu0.b32.start [1/16] %v776, 128
  %782 = vxpose.xlu0.b32.cont [2/16] %v778, 128
  %783 = vxpose.xlu0.b32.cont [3/16] 0.0, 128
  %784 = vxpose.xlu0.b32.cont [4/16] 0.0, 128
  %785 = vxpose.xlu0.b32.cont [5/16] 0.0, 128
  %786 = vxpose.xlu0.b32.cont [6/16] 0.0, 128
  %787 = vxpose.xlu0.b32.cont [7/16] 0.0, 128
  %788 = vxpose.xlu0.b32.cont [8/16] 0.0, 128
  %789 = vxpose.xlu0.b32.cont [9/16] 0.0, 128
  %790 = vxpose.xlu0.b32.cont [10/16] 0.0, 128
  %791 = vxpose.xlu0.b32.cont [11/16] 0.0, 128
  %792 = vxpose.xlu0.b32.cont [12/16] 0.0, 128
  %793 = vxpose.xlu0.b32.cont [13/16] 0.0, 128
  %794 = vxpose.xlu0.b32.cont [14/16] 0.0, 128
  %795 = vxpose.xlu0.b32.cont [15/16] 0.0, 128
  %796 = vxpose.xlu0.b32.end [16/16] 0.0, 128
  %v797 = vpop.trf.xlu0
  %v798 = vpop.trf.xlu0
  %v799 = vpop.trf.xlu0
  %v800 = vpop.trf.xlu0
  %v801 = vpop.trf.xlu0
  %v802 = vpop.trf.xlu0
  %v803 = vpop.trf.xlu0
  %v804 = vpop.trf.xlu0
  %v805 = vpop.trf.xlu0
  %v806 = vpop.trf.xlu0
  %v807 = vpop.trf.xlu0
  %v808 = vpop.trf.xlu0
  %v809 = vpop.trf.xlu0
  %v810 = vpop.trf.xlu0
  %v811 = vpop.trf.xlu0
  %v812 = vpop.trf.xlu0
  %v813 = vpack.c.bf16 %v798, %v797
  %v814 = vpack.c.bf16 %v800, %v799
  %816 = vrot.lane.b32.xlu0 %v235, 96
  %v817 = vpop.permute.xlu0 %816
  %819 = vxpose.xlu0.b32.start [1/16] %v817, 128
  %820 = vxpose.xlu0.b32.cont [2/16] 0.0, 128
  %821 = vxpose.xlu0.b32.cont [3/16] 0.0, 128
  %822 = vxpose.xlu0.b32.cont [4/16] 0.0, 128
  %823 = vxpose.xlu0.b32.cont [5/16] 0.0, 128
  %824 = vxpose.xlu0.b32.cont [6/16] 0.0, 128
  %825 = vxpose.xlu0.b32.cont [7/16] 0.0, 128
  %826 = vxpose.xlu0.b32.cont [8/16] 0.0, 128
  %827 = vxpose.xlu0.b32.cont [9/16] 0.0, 128
  %828 = vxpose.xlu0.b32.cont [10/16] 0.0, 128
  %829 = vxpose.xlu0.b32.cont [11/16] 0.0, 128
  %830 = vxpose.xlu0.b32.cont [12/16] 0.0, 128
  %831 = vxpose.xlu0.b32.cont [13/16] 0.0, 128
  %832 = vxpose.xlu0.b32.cont [14/16] 0.0, 128
  %833 = vxpose.xlu0.b32.cont [15/16] 0.0, 128
  %834 = vxpose.xlu0.b32.end [16/16] 0.0, 128
  %v835 = vpop.trf.xlu0
  %v836 = vpop.trf.xlu0
  %v837 = vpop.trf.xlu0
  %v838 = vpop.trf.xlu0
  %v839 = vpop.trf.xlu0
  %v840 = vpop.trf.xlu0
  %v841 = vpop.trf.xlu0
  %v842 = vpop.trf.xlu0
  %v843 = vpop.trf.xlu0
  %v844 = vpop.trf.xlu0
  %v845 = vpop.trf.xlu0
  %v846 = vpop.trf.xlu0
  %v847 = vpop.trf.xlu0
  %v848 = vpop.trf.xlu0
  %v849 = vpop.trf.xlu0
  %v850 = vpop.trf.xlu0
  %v851 = vpack.c.bf16 %v836, %v835
  %v852 = vpack.c.bf16 %v838, %v837
  %854 = vrot.lane.b32.xlu0 %v389, 96
  %v855 = vpop.permute.xlu0 %854
  %v857 = vsel %vm80, %v855, 0
  %859 = vmatprep.subr.bf16.mxu0 0
  %860 = vmatpush1.bf16.msra.mxu0 %v851
  %861 = vmatprep.subr.bf16.mxu0 0
  %862 = vmatpush1.bf16.msra.mxu0 %v852
  %863 = vmatprep.subr.bf16.mxu0 0
  %864 = vmatpush1.bf16.msra.mxu0 0
  %865 = vmatprep.subr.bf16.mxu0 0
  %866 = vmatpush1.bf16.msra.mxu0 0
  %867 = vmatprep.subr.bf16.mxu0 0
  %868 = vmatpush1.bf16.msra.mxu0 0
  %869 = vmatprep.subr.bf16.mxu0 0
  %870 = vmatpush1.bf16.msra.mxu0 0
  %871 = vmatprep.subr.bf16.mxu0 0
  %872 = vmatpush1.bf16.msra.mxu0 0
  %873 = vmatprep.subr.bf16.mxu0 0
  %874 = vmatpush1.bf16.msra.mxu0 0
  %875 = vmatprep.subr.bf16.mxu0 0
  %876 = vmatpush1.bf16.msra.mxu0 0
  %877 = vmatprep.subr.bf16.mxu0 0
  %878 = vmatpush1.bf16.msra.mxu0 0
  %879 = vmatprep.subr.bf16.mxu0 0
  %880 = vmatpush1.bf16.msra.mxu0 0
  %881 = vmatprep.subr.bf16.mxu0 0
  %882 = vmatpush1.bf16.msra.mxu0 0
  %883 = vmatprep.subr.bf16.mxu0 0
  %884 = vmatpush1.bf16.msra.mxu0 0
  %885 = vmatprep.subr.bf16.mxu0 0
  %886 = vmatpush1.bf16.msra.mxu0 0
  %887 = vmatprep.subr.bf16.mxu0 0
  %888 = vmatpush1.bf16.msra.mxu0 0
  %889 = vmatprep.subr.bf16.mxu0 0
  %890 = vmatpush1.bf16.msra.mxu0 0
  %891 = vmatprep.mubr.bf16.mxu0 0
  %892 = vmatmul.mubr.bf16.gmra.mrb[0].mxu0 %v857
  %v893 = vpop.f32.mrb[0].mxu0
  %v894 = vadd.f32 0.0, %v893
  %v895 = vpop.f32.mrb[0].mxu0
  %v896 = vpop.f32.mrb[0].mxu0
  %v897 = vadd.f32 0.0, %v896
  %v898 = vpop.f32.mrb[0].mxu0
  %899 = vdwg.mxu0
  %901 = vset.pattern.permute.xlu0 0
  %902 = vperm.xlu0 %901, %v894
  %v903 = vpop.permute.xlu0 %902
  %906 = vset.pattern.permute.xlu0 0
  %907 = vperm.xlu0 %906, %v897
  %v908 = vpop.permute.xlu0 %907
  %v910 = vmul.f32 %v903, %v58
  %v911 = vmul.f32 %v908, %v59
  %912 = vmatprep.subr.bf16.mxu0 0
  %913 = vmatpush1.bf16.msra.mxu0 %v813
  %914 = vmatprep.subr.bf16.mxu0 0
  %915 = vmatpush1.bf16.msra.mxu0 %v814
  %916 = vmatprep.subr.bf16.mxu0 0
  %917 = vmatpush1.bf16.msra.mxu0 0
  %918 = vmatprep.subr.bf16.mxu0 0
  %919 = vmatpush1.bf16.msra.mxu0 0
  %920 = vmatprep.subr.bf16.mxu0 0
  %921 = vmatpush1.bf16.msra.mxu0 0
  %922 = vmatprep.subr.bf16.mxu0 0
  %923 = vmatpush1.bf16.msra.mxu0 0
  %924 = vmatprep.subr.bf16.mxu0 0
  %925 = vmatpush1.bf16.msra.mxu0 0
  %926 = vmatprep.subr.bf16.mxu0 0
  %927 = vmatpush1.bf16.msra.mxu0 0
  %928 = vmatprep.subr.bf16.mxu0 0
  %929 = vmatpush1.bf16.msra.mxu0 0
  %930 = vmatprep.subr.bf16.mxu0 0
  %931 = vmatpush1.bf16.msra.mxu0 0
  %932 = vmatprep.subr.bf16.mxu0 0
  %933 = vmatpush1.bf16.msra.mxu0 0
  %934 = vmatprep.subr.bf16.mxu0 0
  %935 = vmatpush1.bf16.msra.mxu0 0
  %936 = vmatprep.subr.bf16.mxu0 0
  %937 = vmatpush1.bf16.msra.mxu0 0
  %938 = vmatprep.subr.bf16.mxu0 0
  %939 = vmatpush1.bf16.msra.mxu0 0
  %940 = vmatprep.subr.bf16.mxu0 0
  %941 = vmatpush1.bf16.msra.mxu0 0
  %942 = vmatprep.subr.bf16.mxu0 0
  %943 = vmatpush1.bf16.msra.mxu0 0
  %944 = vmatprep.mubr.bf16.mxu0 0
  %945 = vmatmul.mubr.bf16.gmra.mrb[0].mxu0 %v857
  %v946 = vpop.f32.mrb[0].mxu0
  %v947 = vadd.f32 %v910, %v946
  %v948 = vpop.f32.mrb[0].mxu0
  %v949 = vpop.f32.mrb[0].mxu0
  %v950 = vadd.f32 %v911, %v949
  %v951 = vpop.f32.mrb[0].mxu0
  %952 = vdwg.mxu0
  %953 = vset.pattern.permute.xlu0 1
  %954 = vperm.xlu0 %953, %v894
  %v955 = vpop.permute.xlu0 %954
  %957 = vset.pattern.permute.xlu0 1
  %958 = vperm.xlu0 %957, %v897
  %v959 = vpop.permute.xlu0 %958
  %v961 = vmul.f32 %v955, %v60
  %v962 = vmul.f32 %v959, %v61
  %v963 = vadd.f32 %v947, %v961
  %v964 = vadd.f32 %v950, %v962
  %965 = vset.pattern.permute.xlu0 2
  %966 = vperm.xlu0 %965, %v894
  %v967 = vpop.permute.xlu0 %966
  %969 = vset.pattern.permute.xlu0 2
  %970 = vperm.xlu0 %969, %v897
  %v971 = vpop.permute.xlu0 %970
  %v973 = vmul.f32 %v967, %v62
  %v974 = vmul.f32 %v971, %v63
  %v975 = vadd.f32 %v963, %v973
  %v976 = vadd.f32 %v964, %v974
  %977 = vset.pattern.permute.xlu0 3
  %978 = vperm.xlu0 %977, %v894
  %v979 = vpop.permute.xlu0 %978
  %981 = vset.pattern.permute.xlu0 3
  %982 = vperm.xlu0 %981, %v897
  %v983 = vpop.permute.xlu0 %982
  %v985 = vmul.f32 %v979, %v64
  %v986 = vmul.f32 %v983, %v65
  %v987 = vadd.f32 %v975, %v985
  %v988 = vadd.f32 %v976, %v986
  %v989 = vsel %vm355, %v987, -1e+30
  %v990 = vsel %vm356, %v988, -1e+30
  %v991 = vsel %vm561, %v989, -inf
  %992 = vmax.xlane.f32.xlu0 %v991
  %v993 = vpop.xlane.xlu0 %992
  %v994 = vsel %vm561, %v990, -inf
  %995 = vmax.xlane.f32.xlu0 %v994
  %v996 = vpop.xlane.xlu0 %995
  %v997 = vsub.f32 %v989, %v993
  %v998 = vsub.f32 %v990, %v996
  %v999 = vmul.f32 %v997, 1.442695
  %v1000 = vpow.pop %v999
  %v1001 = vmul.f32 %v998, 1.442695
  %v1002 = vpow.pop %v1001
  %v1003 = vsel %vm355, %v1000, 0.0
  %v1004 = vsel %vm356, %v1002, 0.0
  %v1005 = vsel %vm561, %v1003, 0.0
  %1006 = vadd.xlane.f32.xlu0 %v1005
  %v1007 = vpop.xlane.xlu0 %1006
  %v1008 = vsel %vm561, %v1004, 0.0
  %1009 = vadd.xlane.f32.xlu0 %v1008
  %v1010 = vpop.xlane.xlu0 %1009
  %v1011 = vmax.f32 %v1007, 1e-30
  %v1012 = vmax.f32 %v1010, 1e-30
  %v1013 = vrcp.pop %v1011
  %v1014 = vrcp.pop %v1012
  %v1015 = vmul.f32 %v1003, %v1013
  %v1016 = vmul.f32 %v1004, %v1014
  %v1017 = vpack.c.bf16 %v1016, %v1015
  %v1018 = vmul.f32 %v1015, %v58
  %v1019 = vmul.f32 %v1016, %v59
  %v1020 = vsel %vm561, %v1018, 0.0
  %1021 = vadd.xlane.f32.xlu0 %v1020
  %v1022 = vpop.xlane.xlu0 %1021
  %v1023 = vsel %vm561, %v1019, 0.0
  %1024 = vadd.xlane.f32.xlu0 %v1023
  %v1025 = vpop.xlane.xlu0 %1024
  %v1026 = vmul.f32 %v1015, %v60
  %v1027 = vmul.f32 %v1016, %v61
  %v1028 = vsel %vm561, %v1026, 0.0
  %1029 = vadd.xlane.f32.xlu0 %v1028
  %v1030 = vpop.xlane.xlu0 %1029
  %v1031 = vsel %vm561, %v1027, 0.0
  %1032 = vadd.xlane.f32.xlu0 %v1031
  %v1033 = vpop.xlane.xlu0 %1032
  %v1034 = vmul.f32 %v1015, %v62
  %v1035 = vmul.f32 %v1016, %v63
  %v1036 = vsel %vm561, %v1034, 0.0
  %1037 = vadd.xlane.f32.xlu0 %v1036
  %v1038 = vpop.xlane.xlu0 %1037
  %v1039 = vsel %vm561, %v1035, 0.0
  %1040 = vadd.xlane.f32.xlu0 %v1039
  %v1041 = vpop.xlane.xlu0 %1040
  %v1042 = vmul.f32 %v1015, %v64
  %v1043 = vmul.f32 %v1016, %v65
  %v1044 = vsel %vm561, %v1042, 0.0
  %1045 = vadd.xlane.f32.xlu0 %v1044
  %v1046 = vpop.xlane.xlu0 %1045
  %v1047 = vsel %vm561, %v1043, 0.0
  %1048 = vadd.xlane.f32.xlu0 %v1047
  %v1049 = vpop.xlane.xlu0 %1048
  %v1050 = vsel %vm622, %v1022, %v1030
  %v1051 = vsel %vm622, %v1025, %v1033
  %v1052 = vsel %vm625, %v1050, %v1038
  %v1053 = vsel %vm625, %v1051, %v1041
  %v1054 = vsel %vm628, %v1052, %v1046
  %v1055 = vsel %vm628, %v1053, %v1049
  %v1056 = vpack.c.bf16 %v1055, %v1054
  %1058 = vrot.lane.b32.xlu0 %v632, 96
  %v1059 = vpop.permute.xlu0 %1058
  %v1061 = vsel %vm633, %v1056, 0
  %v1064 = vsel %vm637, %v1059, 0
  %1066 = vmatprep.subr.bf16.mxu0 0
  %1067 = vmatpush1.bf16.msra.mxu0 %v1064
  %1068 = vmatprep.subr.bf16.mxu0 0
  %1069 = vmatpush1.bf16.msra.mxu0 0
  %1070 = vmatprep.subr.bf16.mxu0 0
  %1071 = vmatpush1.bf16.msra.mxu0 0
  %1072 = vmatprep.subr.bf16.mxu0 0
  %1073 = vmatpush1.bf16.msra.mxu0 0
  %1074 = vmatprep.subr.bf16.mxu0 0
  %1075 = vmatpush1.bf16.msra.mxu0 0
  %1076 = vmatprep.subr.bf16.mxu0 0
  %1077 = vmatpush1.bf16.msra.mxu0 0
  %1078 = vmatprep.subr.bf16.mxu0 0
  %1079 = vmatpush1.bf16.msra.mxu0 0
  %1080 = vmatprep.subr.bf16.mxu0 0
  %1081 = vmatpush1.bf16.msra.mxu0 0
  %1082 = vmatprep.subr.bf16.mxu0 0
  %1083 = vmatpush1.bf16.msra.mxu0 0
  %1084 = vmatprep.subr.bf16.mxu0 0
  %1085 = vmatpush1.bf16.msra.mxu0 0
  %1086 = vmatprep.subr.bf16.mxu0 0
  %1087 = vmatpush1.bf16.msra.mxu0 0
  %1088 = vmatprep.subr.bf16.mxu0 0
  %1089 = vmatpush1.bf16.msra.mxu0 0
  %1090 = vmatprep.subr.bf16.mxu0 0
  %1091 = vmatpush1.bf16.msra.mxu0 0
  %1092 = vmatprep.subr.bf16.mxu0 0
  %1093 = vmatpush1.bf16.msra.mxu0 0
  %1094 = vmatprep.subr.bf16.mxu0 0
  %1095 = vmatpush1.bf16.msra.mxu0 0
  %1096 = vmatprep.subr.bf16.mxu0 0
  %1097 = vmatpush1.bf16.msra.mxu0 0
  %1098 = vmatprep.mubr.bf16.mxu0 0
  %1099 = vmatmul.mubr.bf16.gmra.mrb[0].mxu0 %v1061
  %v1100 = vpop.f32.mrb[0].mxu0
  %v1101 = vadd.f32 0.0, %v1100
  %v1102 = vpop.f32.mrb[0].mxu0
  %v1103 = vpop.f32.mrb[0].mxu0
  %v1104 = vadd.f32 0.0, %v1103
  %v1105 = vpop.f32.mrb[0].mxu0
  %1106 = vdwg.mxu0
  %1108 = vrot.lane.b32.xlu0 %v589, 96
  %v1109 = vpop.permute.xlu0 %1108
  %v1112 = vsel %vm561, %v1017, 0
  %1114 = vmatprep.subr.bf16.mxu0 0
  %1115 = vmatpush1.bf16.msra.mxu0 %v1109
  %1116 = vmatprep.subr.bf16.mxu0 0
  %1117 = vmatpush1.bf16.msra.mxu0 0
  %1118 = vmatprep.subr.bf16.mxu0 0
  %1119 = vmatpush1.bf16.msra.mxu0 0
  %1120 = vmatprep.subr.bf16.mxu0 0
  %1121 = vmatpush1.bf16.msra.mxu0 0
  %1122 = vmatprep.subr.bf16.mxu0 0
  %1123 = vmatpush1.bf16.msra.mxu0 0
  %1124 = vmatprep.subr.bf16.mxu0 0
  %1125 = vmatpush1.bf16.msra.mxu0 0
  %1126 = vmatprep.subr.bf16.mxu0 0
  %1127 = vmatpush1.bf16.msra.mxu0 0
  %1128 = vmatprep.subr.bf16.mxu0 0
  %1129 = vmatpush1.bf16.msra.mxu0 0
  %1130 = vmatprep.subr.bf16.mxu0 0
  %1131 = vmatpush1.bf16.msra.mxu0 0
  %1132 = vmatprep.subr.bf16.mxu0 0
  %1133 = vmatpush1.bf16.msra.mxu0 0
  %1134 = vmatprep.subr.bf16.mxu0 0
  %1135 = vmatpush1.bf16.msra.mxu0 0
  %1136 = vmatprep.subr.bf16.mxu0 0
  %1137 = vmatpush1.bf16.msra.mxu0 0
  %1138 = vmatprep.subr.bf16.mxu0 0
  %1139 = vmatpush1.bf16.msra.mxu0 0
  %1140 = vmatprep.subr.bf16.mxu0 0
  %1141 = vmatpush1.bf16.msra.mxu0 0
  %1142 = vmatprep.subr.bf16.mxu0 0
  %1143 = vmatpush1.bf16.msra.mxu0 0
  %1144 = vmatprep.subr.bf16.mxu0 0
  %1145 = vmatpush1.bf16.msra.mxu0 0
  %1146 = vmatprep.mubr.bf16.mxu0 0
  %1147 = vmatmul.mubr.bf16.gmra.mrb[0].mxu0 %v1112
  %v1148 = vpop.f32.mrb[0].mxu0
  %v1149 = vadd.f32 %v1101, %v1148
  %v1150 = vpop.f32.mrb[0].mxu0
  %v1151 = vpop.f32.mrb[0].mxu0
  %v1152 = vadd.f32 %v1104, %v1151
  %v1153 = vpop.f32.mrb[0].mxu0
  %1154 = vdwg.mxu0
  %v1155 = vpack.c.bf16 %v1152, %v1149
  %v1157 = vsel %vm80, %v1155, 0
  %1159 = vmatprep.subr.bf16.mxu0 0
  %1160 = vmatpush1.bf16.msra.mxu0 %v301
  %1161 = vmatprep.subr.bf16.mxu0 0
  %1162 = vmatpush1.bf16.msra.mxu0 %v302
  %1163 = vmatprep.subr.bf16.mxu0 0
  %1164 = vmatpush1.bf16.msra.mxu0 0
  %1165 = vmatprep.subr.bf16.mxu0 0
  %1166 = vmatpush1.bf16.msra.mxu0 0
  %1167 = vmatprep.subr.bf16.mxu0 0
  %1168 = vmatpush1.bf16.msra.mxu0 0
  %1169 = vmatprep.subr.bf16.mxu0 0
  %1170 = vmatpush1.bf16.msra.mxu0 0
  %1171 = vmatprep.subr.bf16.mxu0 0
  %1172 = vmatpush1.bf16.msra.mxu0 0
  %1173 = vmatprep.subr.bf16.mxu0 0
  %1174 = vmatpush1.bf16.msra.mxu0 0
  %1175 = vmatprep.subr.bf16.mxu0 0
  %1176 = vmatpush1.bf16.msra.mxu0 0
  %1177 = vmatprep.subr.bf16.mxu0 0
  %1178 = vmatpush1.bf16.msra.mxu0 0
  %1179 = vmatprep.subr.bf16.mxu0 0
  %1180 = vmatpush1.bf16.msra.mxu0 0
  %1181 = vmatprep.subr.bf16.mxu0 0
  %1182 = vmatpush1.bf16.msra.mxu0 0
  %1183 = vmatprep.subr.bf16.mxu0 0
  %1184 = vmatpush1.bf16.msra.mxu0 0
  %1185 = vmatprep.subr.bf16.mxu0 0
  %1186 = vmatpush1.bf16.msra.mxu0 0
  %1187 = vmatprep.subr.bf16.mxu0 0
  %1188 = vmatpush1.bf16.msra.mxu0 0
  %1189 = vmatprep.subr.bf16.mxu0 0
  %1190 = vmatpush1.bf16.msra.mxu0 0
  %1191 = vmatprep.mubr.bf16.mxu0 0
  %1192 = vmatmul.mubr.bf16.gmra.mrb[0].mxu0 %v1157
  %v1193 = vpop.f32.mrb[0].mxu0
  %v1194 = vadd.f32 0.0, %v1193
  %v1195 = vpop.f32.mrb[0].mxu0
  %v1196 = vpop.f32.mrb[0].mxu0
  %v1197 = vadd.f32 0.0, %v1196
  %v1198 = vpop.f32.mrb[0].mxu0
  %1199 = vdwg.mxu0
  %v1200 = vadd.f32 %v771, %v1194
  %v1201 = vadd.f32 %v772, %v1197
  %v1202 = vmax.f32 %v1200, 0.0
  %v1203 = vmax.f32 %v1201, 0.0
  %v1204 = vsel %vm80, %v1202, 0.0
  %1205 = vadd.xlane.f32.xlu0 %v1204
  %v1206 = vpop.xlane.xlu0 %1205
  %v1207 = vsel %vm80, %v1203, 0.0
  %1208 = vadd.xlane.f32.xlu0 %v1207
  %v1209 = vpop.xlane.xlu0 %1208
  %v1210 = vrcp.pop 32.0
  %v1211 = vmul.f32 %v1206, %v1210
  %v1212 = vmul.f32 %v1209, %v1210
  %v1213 = vsub.f32 %v1202, %v1211
  %v1214 = vsub.f32 %v1203, %v1212
  %v1215 = vmul.f32 %v1213, %v1213
  %v1216 = vmul.f32 %v1214, %v1214
  %v1217 = vsel %vm80, %v1215, 0.0
  %1218 = vadd.xlane.f32.xlu0 %v1217
  %v1219 = vpop.xlane.xlu0 %1218
  %v1220 = vsel %vm80, %v1216, 0.0
  %1221 = vadd.xlane.f32.xlu0 %v1220
  %v1222 = vpop.xlane.xlu0 %1221
  %v1223 = vmul.f32 %v1219, %v1210
  %v1224 = vmul.f32 %v1222, %v1210
  %v1225 = vadd.f32 %v1223, 1e-05
  %v1226 = vadd.f32 %v1224, 1e-05
  %v1227 = vrsqrt.pop %v1225
  %v1228 = vrsqrt.pop %v1226
  %v1229 = vmul.f32 %v1213, %v1227
  %v1230 = vmul.f32 %v1214, %v1228
  %v1231 = vld [vmem:[%s14] sm:$0x1]
  %v1233 = vlaneseq
  %v1234 = vshrl.u32 %v1233, 7
  %v1235 = vsub.s32 0, %v1234
  %v1236 = vrot.slane %v1231, %v1235
  %v1238 = vmul.f32 %v1229, %v1236
  %v1239 = vmul.f32 %v1230, %v1236
  %v1240 = vld [vmem:[%s15] sm:$0x1]
  %v1242 = vlaneseq
  %v1243 = vshrl.u32 %v1242, 7
  %v1244 = vsub.s32 0, %v1243
  %v1245 = vrot.slane %v1240, %v1244
  %v1247 = vadd.f32 %v1238, %v1245
  %v1248 = vadd.f32 %v1239, %v1245
  %1249 = vst.msk [vmem:[%s16] sm:$0xff] %vm80, %v1247
  %1250 = vst.msk [vmem:[%s16 + $0x8] sm:$0xff] %vm80, %v1248
  // Predicated region
  $region66: #{fwd.4} parent=0 // pred_check
    _
  $region67: #{fwd.4} parent=0 // pred_check_branch
    %1252 = sbr.rel (0) target = $region69
  $region68: #{fwd.4} parent=0 // pred_region
    _
  $region69: #{fwd.4} parent=0 // pred_fallthru
    _
  // Predicated region
  $region70: #{fwd.4} parent=0 // pred_check
    _
  $region71: #{fwd.4} parent=0 // pred_check_branch
    %1254 = sbr.rel (0) target = $region73
  $region72: #{fwd.4} parent=0 // pred_region
    _
  $region73: #{fwd.4} parent=0 // pred_fallthru
    _

// kernel: fwd.5
$region0: #{fwd.5}
  #allocation0 [shape = 'u32[]', space=smem, size = 0x4, offset = 0x4, fixed_abs, tag = 'smem constant byte address 0x4 - core index']
  #allocation1 [shape = 'u32[144,128]{1,0:T(1,128)}', space=vmem, size = 0x12000, scoped, tag = 'internal scratch']
  #allocation2 [shape = 'f32[1,1]{1,0:T(1,128)S(1)}', space=vmem, size = 0x200, scoped, tag = 'scoped memory for fwd.5']
  #allocation3 [shape = 'f32[1,1]{1,0:T(1,128)S(1)}', space=vmem, size = 0x200, scoped, tag = 'scoped memory for fwd.5']
  %s0 = inlined_call_operand.vmem [shape: f32[8,32], index: 0, kind: input, shape index: {}]
  %s1 = inlined_call_operand.vmem [shape: f32[2,8], index: 1, kind: input, shape index: {}]
  %s2 = inlined_call_operand.vmem [shape: f32[2,1], index: 2, kind: input, shape index: {}]
  %s3 = inlined_call_operand.vmem [shape: f32[2,1], index: 3, kind: input, shape index: {}]
  %s4 = inlined_call_operand.vmem [shape: f32[32,1], index: 4, kind: input, shape index: {}]
  %s5 = inlined_call_operand.<no memory space> [shape: f32[1,1], index: 5, kind: input, shape index: {}]
  %s6 = inlined_call_operand.vmem [shape: f32[34,64], index: 6, kind: input, shape index: {}]
  %s7 = inlined_call_operand.vmem [shape: f32[1,64], index: 7, kind: input, shape index: {}]
  %s8 = inlined_call_operand.vmem [shape: f32[64,16], index: 8, kind: input, shape index: {}]
  %s9 = inlined_call_operand.vmem [shape: f32[1,16], index: 9, kind: input, shape index: {}]
  %s10 = inlined_call_operand.vmem [shape: f32[16,1], index: 10, kind: input, shape index: {}]
  %s11 = inlined_call_operand.<no memory space> [shape: f32[1,1], index: 11, kind: input, shape index: {}]
  %s12 = inlined_call_operand.vmem [shape: f32[2,1], index: 12, kind: output, shape index: {}]
  %s13 = sld [smem:[#allocation0]]
  $region58: #{fwd.5} parent=0
    _
  %s15 = ssub.s32 1, %s13
  %s16 = scalar_select 0, %s15, %s13
  %v17 = vstv %s5
  %18 = vst [vmem:[#allocation2] sm:$0x1] %v17
  %v19 = vstv %s11
  %20 = vst [vmem:[#allocation3] sm:$0x1] %v19
  // Predicated region
  $region2: #{fwd.5} parent=0 // pred_check
    _
  $region3: #{fwd.5} parent=0 // pred_check_branch
    %22 = sbr.rel (0) target = $region5
  $region4: #{fwd.5} parent=0 // pred_region
    _
  $region5: #{fwd.5} parent=0 // pred_fallthru
    _
  // Predicated region
  $region6: #{fwd.5} parent=0 // pred_check
    _
  $region7: #{fwd.5} parent=0 // pred_check_branch
    %24 = sbr.rel (0) target = $region9
  $region8: #{fwd.5} parent=0 // pred_region
    _
  $region9: #{fwd.5} parent=0 // pred_fallthru
    _
  // Predicated region
  $region10: #{fwd.5} parent=0 // pred_check
    _
  $region11: #{fwd.5} parent=0 // pred_check_branch
    %26 = sbr.rel (0) target = $region13
  $region12: #{fwd.5} parent=0 // pred_region
    _
  $region13: #{fwd.5} parent=0 // pred_fallthru
    _
  // Predicated region
  $region14: #{fwd.5} parent=0 // pred_check
    _
  $region15: #{fwd.5} parent=0 // pred_check_branch
    %28 = sbr.rel (0) target = $region17
  $region16: #{fwd.5} parent=0 // pred_region
    _
  $region17: #{fwd.5} parent=0 // pred_fallthru
    _
  // Predicated region
  $region18: #{fwd.5} parent=0 // pred_check
    _
  $region19: #{fwd.5} parent=0 // pred_check_branch
    %30 = sbr.rel (0) target = $region21
  $region20: #{fwd.5} parent=0 // pred_region
    _
  $region21: #{fwd.5} parent=0 // pred_fallthru
    _
  // Predicated region
  $region22: #{fwd.5} parent=0 // pred_check
    _
  $region23: #{fwd.5} parent=0 // pred_check_branch
    %32 = sbr.rel (0) target = $region25
  $region24: #{fwd.5} parent=0 // pred_region
    _
  $region25: #{fwd.5} parent=0 // pred_fallthru
    _
  // Predicated region
  $region26: #{fwd.5} parent=0 // pred_check
    _
  $region27: #{fwd.5} parent=0 // pred_check_branch
    %34 = sbr.rel (0) target = $region29
  $region28: #{fwd.5} parent=0 // pred_region
    _
  $region29: #{fwd.5} parent=0 // pred_fallthru
    _
  // Predicated region
  $region30: #{fwd.5} parent=0 // pred_check
    _
  $region31: #{fwd.5} parent=0 // pred_check_branch
    %36 = sbr.rel (0) target = $region33
  $region32: #{fwd.5} parent=0 // pred_region
    _
  $region33: #{fwd.5} parent=0 // pred_fallthru
    _
  // Predicated region
  $region34: #{fwd.5} parent=0 // pred_check
    _
  $region35: #{fwd.5} parent=0 // pred_check_branch
    %38 = sbr.rel (0) target = $region37
  $region36: #{fwd.5} parent=0 // pred_region
    _
  $region37: #{fwd.5} parent=0 // pred_fallthru
    _
  // Predicated region
  $region38: #{fwd.5} parent=0 // pred_check
    _
  $region39: #{fwd.5} parent=0 // pred_check_branch
    %40 = sbr.rel (0) target = $region41
  $region40: #{fwd.5} parent=0 // pred_region
    _
  $region41: #{fwd.5} parent=0 // pred_fallthru
    _
  // Predicated region
  $region42: #{fwd.5} parent=0 // pred_check
    _
  $region43: #{fwd.5} parent=0 // pred_check_branch
    %42 = sbr.rel (0) target = $region45
  $region44: #{fwd.5} parent=0 // pred_region
    _
  $region45: #{fwd.5} parent=0 // pred_fallthru
    _
  // Predicated region
  $region46: #{fwd.5} parent=0 // pred_check
    _
  $region47: #{fwd.5} parent=0 // pred_check_branch
    %44 = sbr.rel (0) target = $region49
  $region48: #{fwd.5} parent=0 // pred_region
    _
  $region49: #{fwd.5} parent=0 // pred_fallthru
    _
  %v45 = vld [vmem:[%s0] sm:$0xff]
  %v46 = vld [vmem:[%s4] sm:$0xff]
  %v47 = vld [vmem:[%s4 + $0x8] sm:$0xff]
  %v48 = vld [vmem:[%s4 + $0x10] sm:$0xff]
  %v49 = vld [vmem:[%s4 + $0x18] sm:$0xff]
  %v50 = vld [vmem:[#allocation2] sm:$0x1]
  %v52 = vlaneseq
  %v53 = vshrl.u32 %v52, 7
  %v54 = vsub.s32 0, %v53
  %v55 = vrot.slane %v50, %v54
  %vm57 = vcmask 261120
  %v59 = vsel %vm57, %v45, 0
  %61 = vmatprep.subr.mxu0 0.0
  %62 = vmatpush1.msra.mxu0 %v46
  %63 = vmatprep.subr.mxu0 0.0
  %64 = vmatpush1.msra.mxu0 %v47
  %65 = vmatprep.subr.mxu0 0.0
  %66 = vmatpush1.msra.mxu0 %v48
  %67 = vmatprep.subr.mxu0 0.0
  %68 = vmatpush1.msra.mxu0 %v49
  %69 = vmatprep.subr.mxu0 0.0
  %70 = vmatpush1.msra.mxu0 0.0
  %71 = vmatprep.subr.mxu0 0.0
  %72 = vmatpush1.msra.mxu0 0.0
  %73 = vmatprep.subr.mxu0 0.0
  %74 = vmatpush1.msra.mxu0 0.0
  %75 = vmatprep.subr.mxu0 0.0
  %76 = vmatpush1.msra.mxu0 0.0
  %77 = vmatprep.subr.mxu0 0.0
  %78 = vmatpush1.msra.mxu0 0.0
  %79 = vmatprep.subr.mxu0 0.0
  %80 = vmatpush1.msra.mxu0 0.0
  %81 = vmatprep.subr.mxu0 0.0
  %82 = vmatpush1.msra.mxu0 0.0
  %83 = vmatprep.subr.mxu0 0.0
  %84 = vmatpush1.msra.mxu0 0.0
  %85 = vmatprep.subr.mxu0 0.0
  %86 = vmatpush1.msra.mxu0 0.0
  %87 = vmatprep.subr.mxu0 0.0
  %88 = vmatpush1.msra.mxu0 0.0
  %89 = vmatprep.subr.mxu0 0.0
  %90 = vmatpush1.msra.mxu0 0.0
  %91 = vmatprep.subr.mxu0 0.0
  %92 = vmatpush1.msra.mxu0 0.0
  %93 = vmatprep.subr.mxu0 0.0
  %94 = vmatpush1.msra.mxu0 0.0
  %95 = vmatprep.subr.mxu0 0.0
  %96 = vmatpush1.msra.mxu0 0.0
  %97 = vmatprep.subr.mxu0 0.0
  %98 = vmatpush1.msra.mxu0 0.0
  %99 = vmatprep.subr.mxu0 0.0
  %100 = vmatpush1.msra.mxu0 0.0
  %101 = vmatprep.subr.mxu0 0.0
  %102 = vmatpush1.msra.mxu0 0.0
  %103 = vmatprep.subr.mxu0 0.0
  %104 = vmatpush1.msra.mxu0 0.0
  %105 = vmatprep.subr.mxu0 0.0
  %106 = vmatpush1.msra.mxu0 0.0
  %107 = vmatprep.subr.mxu0 0.0
  %108 = vmatpush1.msra.mxu0 0.0
  %109 = vmatprep.subr.mxu0 0.0
  %110 = vmatpush1.msra.mxu0 0.0
  %111 = vmatprep.subr.mxu0 0.0
  %112 = vmatpush1.msra.mxu0 0.0
  %113 = vmatprep.subr.mxu0 0.0
  %114 = vmatpush1.msra.mxu0 0.0
  %115 = vmatprep.subr.mxu0 0.0
  %116 = vmatpush1.msra.mxu0 0.0
  %117 = vmatprep.subr.mxu0 0.0
  %118 = vmatpush1.msra.mxu0 0.0
  %119 = vmatprep.subr.mxu0 0.0
  %120 = vmatpush1.msra.mxu0 0.0
  %121 = vmatprep.subr.mxu0 0.0
  %122 = vmatpush1.msra.mxu0 0.0
  %123 = vmatprep.subr.mxu0 0.0
  %124 = vmatpush1.msra.mxu0 0.0
  %125 = vmatprep.mubr.f32.mxu0 0.0
  %126 = vmatmul.mubr.f32.gmra.mrb[0].mxu0 %v59
  %v127 = vpop.f32.mrb[0].mxu0
  %v128 = vadd.f32 %v55, %v127
  %v129 = vpop.f32.mrb[0].mxu0
  %130 = vdwg.mxu0
  %131 = vxpose.xlu0.b32.start [1/16] %v128, 128
  %132 = vxpose.xlu0.b32.cont [2/16] 0.0, 128
  %133 = vxpose.xlu0.b32.cont [3/16] 0.0, 128
  %134 = vxpose.xlu0.b32.cont [4/16] 0.0, 128
  %135 = vxpose.xlu0.b32.cont [5/16] 0.0, 128
  %136 = vxpose.xlu0.b32.cont [6/16] 0.0, 128
  %137 = vxpose.xlu0.b32.cont [7/16] 0.0, 128
  %138 = vxpose.xlu0.b32.cont [8/16] 0.0, 128
  %139 = vxpose.xlu0.b32.cont [9/16] 0.0, 128
  %140 = vxpose.xlu0.b32.cont [10/16] 0.0, 128
  %141 = vxpose.xlu0.b32.cont [11/16] 0.0, 128
  %142 = vxpose.xlu0.b32.cont [12/16] 0.0, 128
  %143 = vxpose.xlu0.b32.cont [13/16] 0.0, 128
  %144 = vxpose.xlu0.b32.cont [14/16] 0.0, 128
  %145 = vxpose.xlu0.b32.cont [15/16] 0.0, 128
  %146 = vxpose.xlu0.b32.end [16/16] 0.0, 128
  %v147 = vpop.trf.xlu0
  %v148 = vpop.trf.xlu0
  %v149 = vpop.trf.xlu0
  %v150 = vpop.trf.xlu0
  %v151 = vpop.trf.xlu0
  %v152 = vpop.trf.xlu0
  %v153 = vpop.trf.xlu0
  %v154 = vpop.trf.xlu0
  %v155 = vpop.trf.xlu0
  %v156 = vpop.trf.xlu0
  %v157 = vpop.trf.xlu0
  %v158 = vpop.trf.xlu0
  %v159 = vpop.trf.xlu0
  %v160 = vpop.trf.xlu0
  %v161 = vpop.trf.xlu0
  %v162 = vpop.trf.xlu0
  %v163 = vld [vmem:[%s1] sm:$0x3]
  %vm164 = vcmp.gt.f32.partialorder %v163, 0.0
  %v165 = vlaneseq
  %v166 = vshrl.u32 %v165, 7
  %v167 = vsub.s32 0, %v166
  %v168 = vrot.slane %v147, %v167
  %v169 = vsel %vm164, %v168, -1e+30
  %vm170 = vcmask 58368
  %v171 = vsel %vm170, %v169, -inf
  %172 = vmax.xlane.f32.xlu0 %v171
  %v173 = vpop.xlane.xlu0 %172
  %v174 = vsub.f32 %v168, %v173
  %v175 = vmul.f32 %v174, 1.442695
  %v176 = vpow.pop %v175
  %v177 = vsel %vm164, %v176, 0.0
  %v178 = vsel %vm170, %v177, 0.0
  %179 = vadd.xlane.f32.xlu0 %v178
  %v180 = vpop.xlane.xlu0 %179
  %v181 = vmax.f32 %v180, 1e-30
  %v182 = vrcp.pop %v181
  %v183 = vmul.f32 %v177, %v182
  %vm184 = vcmask 64512
  %v186 = vsel %vm184, %v183, 0
  %188 = vmatprep.subr.mxu0 0.0
  %189 = vmatpush1.msra.mxu0 %v45
  %190 = vmatprep.subr.mxu0 0.0
  %191 = vmatpush1.msra.mxu0 0.0
  %192 = vmatprep.subr.mxu0 0.0
  %193 = vmatpush1.msra.mxu0 0.0
  %194 = vmatprep.subr.mxu0 0.0
  %195 = vmatpush1.msra.mxu0 0.0
  %196 = vmatprep.subr.mxu0 0.0
  %197 = vmatpush1.msra.mxu0 0.0
  %198 = vmatprep.subr.mxu0 0.0
  %199 = vmatpush1.msra.mxu0 0.0
  %200 = vmatprep.subr.mxu0 0.0
  %201 = vmatpush1.msra.mxu0 0.0
  %202 = vmatprep.subr.mxu0 0.0
  %203 = vmatpush1.msra.mxu0 0.0
  %204 = vmatprep.subr.mxu0 0.0
  %205 = vmatpush1.msra.mxu0 0.0
  %206 = vmatprep.subr.mxu0 0.0
  %207 = vmatpush1.msra.mxu0 0.0
  %208 = vmatprep.subr.mxu0 0.0
  %209 = vmatpush1.msra.mxu0 0.0
  %210 = vmatprep.subr.mxu0 0.0
  %211 = vmatpush1.msra.mxu0 0.0
  %212 = vmatprep.subr.mxu0 0.0
  %213 = vmatpush1.msra.mxu0 0.0
  %214 = vmatprep.subr.mxu0 0.0
  %215 = vmatpush1.msra.mxu0 0.0
  %216 = vmatprep.subr.mxu0 0.0
  %217 = vmatpush1.msra.mxu0 0.0
  %218 = vmatprep.subr.mxu0 0.0
  %219 = vmatpush1.msra.mxu0 0.0
  %220 = vmatprep.subr.mxu0 0.0
  %221 = vmatpush1.msra.mxu0 0.0
  %222 = vmatprep.subr.mxu0 0.0
  %223 = vmatpush1.msra.mxu0 0.0
  %224 = vmatprep.subr.mxu0 0.0
  %225 = vmatpush1.msra.mxu0 0.0
  %226 = vmatprep.subr.mxu0 0.0
  %227 = vmatpush1.msra.mxu0 0.0
  %228 = vmatprep.subr.mxu0 0.0
  %229 = vmatpush1.msra.mxu0 0.0
  %230 = vmatprep.subr.mxu0 0.0
  %231 = vmatpush1.msra.mxu0 0.0
  %232 = vmatprep.subr.mxu0 0.0
  %233 = vmatpush1.msra.mxu0 0.0
  %234 = vmatprep.subr.mxu0 0.0
  %235 = vmatpush1.msra.mxu0 0.0
  %236 = vmatprep.subr.mxu0 0.0
  %237 = vmatpush1.msra.mxu0 0.0
  %238 = vmatprep.subr.mxu0 0.0
  %239 = vmatpush1.msra.mxu0 0.0
  %240 = vmatprep.subr.mxu0 0.0
  %241 = vmatpush1.msra.mxu0 0.0
  %242 = vmatprep.subr.mxu0 0.0
  %243 = vmatpush1.msra.mxu0 0.0
  %244 = vmatprep.subr.mxu0 0.0
  %245 = vmatpush1.msra.mxu0 0.0
  %246 = vmatprep.subr.mxu0 0.0
  %247 = vmatpush1.msra.mxu0 0.0
  %248 = vmatprep.subr.mxu0 0.0
  %249 = vmatpush1.msra.mxu0 0.0
  %250 = vmatprep.subr.mxu0 0.0
  %251 = vmatpush1.msra.mxu0 0.0
  %252 = vmatprep.mubr.f32.mxu0 0.0
  %253 = vmatmul.mubr.f32.gmra.mrb[0].mxu0 %v186
  %v254 = vpop.f32.mrb[0].mxu0
  %v255 = vadd.f32 0.0, %v254
  %v256 = vpop.f32.mrb[0].mxu0
  %257 = vdwg.mxu0
  %v258 = vld [vmem:[%s6] sm:$0xff]
  %v259 = vld [vmem:[%s6 + $0x8] sm:$0xff]
  %v260 = vld [vmem:[%s6 + $0x10] sm:$0xff]
  %v261 = vld [vmem:[%s6 + $0x18] sm:$0xff]
  %v262 = vld [vmem:[%s6 + $0x20] sm:$0x3]
  %v263 = vld [vmem:[%s2] sm:$0x3]
  %265 = vset.pattern.permute.xlu0 0
  %266 = vperm.xlu0 %265, %v263
  %v267 = vpop.permute.xlu0 %266
  %v269 = vlaneseq
  %v270 = vshrl.u32 %v269, 7
  %v271 = vsub.s32 0, %v270
  %v272 = vrot.slane %v262, %v271
  %v273 = vmul.f32 %v267, %v272
  %v275 = vsel %vm57, %v255, 0
  %277 = vmatprep.subr.mxu0 0.0
  %278 = vmatpush1.msra.mxu0 %v258
  %279 = vmatprep.subr.mxu0 0.0
  %280 = vmatpush1.msra.mxu0 %v259
  %281 = vmatprep.subr.mxu0 0.0
  %282 = vmatpush1.msra.mxu0 %v260
  %283 = vmatprep.subr.mxu0 0.0
  %284 = vmatpush1.msra.mxu0 %v261
  %285 = vmatprep.subr.mxu0 0.0
  %286 = vmatpush1.msra.mxu0 0.0
  %287 = vmatprep.subr.mxu0 0.0
  %288 = vmatpush1.msra.mxu0 0.0
  %289 = vmatprep.subr.mxu0 0.0
  %290 = vmatpush1.msra.mxu0 0.0
  %291 = vmatprep.subr.mxu0 0.0
  %292 = vmatpush1.msra.mxu0 0.0
  %293 = vmatprep.subr.mxu0 0.0
  %294 = vmatpush1.msra.mxu0 0.0
  %295 = vmatprep.subr.mxu0 0.0
  %296 = vmatpush1.msra.mxu0 0.0
  %297 = vmatprep.subr.mxu0 0.0
  %298 = vmatpush1.msra.mxu0 0.0
  %299 = vmatprep.subr.mxu0 0.0
  %300 = vmatpush1.msra.mxu0 0.0
  %301 = vmatprep.subr.mxu0 0.0
  %302 = vmatpush1.msra.mxu0 0.0
  %303 = vmatprep.subr.mxu0 0.0
  %304 = vmatpush1.msra.mxu0 0.0
  %305 = vmatprep.subr.mxu0 0.0
  %306 = vmatpush1.msra.mxu0 0.0
  %307 = vmatprep.subr.mxu0 0.0
  %308 = vmatpush1.msra.mxu0 0.0
  %309 = vmatprep.subr.mxu0 0.0
  %310 = vmatpush1.msra.mxu0 0.0
  %311 = vmatprep.subr.mxu0 0.0
  %312 = vmatpush1.msra.mxu0 0.0
  %313 = vmatprep.subr.mxu0 0.0
  %314 = vmatpush1.msra.mxu0 0.0
  %315 = vmatprep.subr.mxu0 0.0
  %316 = vmatpush1.msra.mxu0 0.0
  %317 = vmatprep.subr.mxu0 0.0
  %318 = vmatpush1.msra.mxu0 0.0
  %319 = vmatprep.subr.mxu0 0.0
  %320 = vmatpush1.msra.mxu0 0.0
  %321 = vmatprep.subr.mxu0 0.0
  %322 = vmatpush1.msra.mxu0 0.0
  %323 = vmatprep.subr.mxu0 0.0
  %324 = vmatpush1.msra.mxu0 0.0
  %325 = vmatprep.subr.mxu0 0.0
  %326 = vmatpush1.msra.mxu0 0.0
  %327 = vmatprep.subr.mxu0 0.0
  %328 = vmatpush1.msra.mxu0 0.0
  %329 = vmatprep.subr.mxu0 0.0
  %330 = vmatpush1.msra.mxu0 0.0
  %331 = vmatprep.subr.mxu0 0.0
  %332 = vmatpush1.msra.mxu0 0.0
  %333 = vmatprep.subr.mxu0 0.0
  %334 = vmatpush1.msra.mxu0 0.0
  %335 = vmatprep.subr.mxu0 0.0
  %336 = vmatpush1.msra.mxu0 0.0
  %337 = vmatprep.subr.mxu0 0.0
  %338 = vmatpush1.msra.mxu0 0.0
  %339 = vmatprep.subr.mxu0 0.0
  %340 = vmatpush1.msra.mxu0 0.0
  %341 = vmatprep.mubr.f32.mxu0 0.0
  %342 = vmatmul.mubr.f32.gmra.mrb[0].mxu0 %v275
  %v343 = vpop.f32.mrb[0].mxu0
  %v344 = vadd.f32 %v273, %v343
  %v345 = vpop.f32.mrb[0].mxu0
  %346 = vdwg.mxu0
  %v347 = vld [vmem:[%s3] sm:$0x3]
  %349 = vset.pattern.permute.xlu0 0
  %350 = vperm.xlu0 %349, %v347
  %v351 = vpop.permute.xlu0 %350
  %v353 = vlaneseq
  %v354 = vshrl.u32 %v353, 7
  %v355 = vsub.s32 1, %v354
  %v356 = vrot.slane %v262, %v355
  %v357 = vmul.f32 %v351, %v356
  %v358 = vadd.f32 %v344, %v357
  %v359 = vld [vmem:[%s7] sm:$0x1]
  %v361 = vlaneseq
  %v362 = vshrl.u32 %v361, 7
  %v363 = vsub.s32 0, %v362
  %v364 = vrot.slane %v359, %v363
  %v366 = vadd.f32 %v358, %v364
  %v367 = vmax.f32 %v366, 0.0
  %v368 = vld [vmem:[%s8] sm:$0xff]
  %v369 = vld [vmem:[%s8 + $0x8] sm:$0xff]
  %v370 = vld [vmem:[%s8 + $0x10] sm:$0xff]
  %v371 = vld [vmem:[%s8 + $0x18] sm:$0xff]
  %v372 = vld [vmem:[%s8 + $0x20] sm:$0xff]
  %v373 = vld [vmem:[%s8 + $0x28] sm:$0xff]
  %v374 = vld [vmem:[%s8 + $0x30] sm:$0xff]
  %v375 = vld [vmem:[%s8 + $0x38] sm:$0xff]
  %v376 = vld [vmem:[%s9] sm:$0x1]
  %v378 = vlaneseq
  %v379 = vshrl.u32 %v378, 7
  %v380 = vsub.s32 0, %v379
  %v381 = vrot.slane %v376, %v380
  %vm383 = vcmask 523264
  %v385 = vsel %vm383, %v367, 0
  %387 = vmatprep.subr.mxu0 0.0
  %388 = vmatpush1.msra.mxu0 %v368
  %389 = vmatprep.subr.mxu0 0.0
  %390 = vmatpush1.msra.mxu0 %v369
  %391 = vmatprep.subr.mxu0 0.0
  %392 = vmatpush1.msra.mxu0 %v370
  %393 = vmatprep.subr.mxu0 0.0
  %394 = vmatpush1.msra.mxu0 %v371
  %395 = vmatprep.subr.mxu0 0.0
  %396 = vmatpush1.msra.mxu0 %v372
  %397 = vmatprep.subr.mxu0 0.0
  %398 = vmatpush1.msra.mxu0 %v373
  %399 = vmatprep.subr.mxu0 0.0
  %400 = vmatpush1.msra.mxu0 %v374
  %401 = vmatprep.subr.mxu0 0.0
  %402 = vmatpush1.msra.mxu0 %v375
  %403 = vmatprep.subr.mxu0 0.0
  %404 = vmatpush1.msra.mxu0 0.0
  %405 = vmatprep.subr.mxu0 0.0
  %406 = vmatpush1.msra.mxu0 0.0
  %407 = vmatprep.subr.mxu0 0.0
  %408 = vmatpush1.msra.mxu0 0.0
  %409 = vmatprep.subr.mxu0 0.0
  %410 = vmatpush1.msra.mxu0 0.0
  %411 = vmatprep.subr.mxu0 0.0
  %412 = vmatpush1.msra.mxu0 0.0
  %413 = vmatprep.subr.mxu0 0.0
  %414 = vmatpush1.msra.mxu0 0.0
  %415 = vmatprep.subr.mxu0 0.0
  %416 = vmatpush1.msra.mxu0 0.0
  %417 = vmatprep.subr.mxu0 0.0
  %418 = vmatpush1.msra.mxu0 0.0
  %419 = vmatprep.subr.mxu0 0.0
  %420 = vmatpush1.msra.mxu0 0.0
  %421 = vmatprep.subr.mxu0 0.0
  %422 = vmatpush1.msra.mxu0 0.0
  %423 = vmatprep.subr.mxu0 0.0
  %424 = vmatpush1.msra.mxu0 0.0
  %425 = vmatprep.subr.mxu0 0.0
  %426 = vmatpush1.msra.mxu0 0.0
  %427 = vmatprep.subr.mxu0 0.0
  %428 = vmatpush1.msra.mxu0 0.0
  %429 = vmatprep.subr.mxu0 0.0
  %430 = vmatpush1.msra.mxu0 0.0
  %431 = vmatprep.subr.mxu0 0.0
  %432 = vmatpush1.msra.mxu0 0.0
  %433 = vmatprep.subr.mxu0 0.0
  %434 = vmatpush1.msra.mxu0 0.0
  %435 = vmatprep.subr.mxu0 0.0
  %436 = vmatpush1.msra.mxu0 0.0
  %437 = vmatprep.subr.mxu0 0.0
  %438 = vmatpush1.msra.mxu0 0.0
  %439 = vmatprep.subr.mxu0 0.0
  %440 = vmatpush1.msra.mxu0 0.0
  %441 = vmatprep.subr.mxu0 0.0
  %442 = vmatpush1.msra.mxu0 0.0
  %443 = vmatprep.subr.mxu0 0.0
  %444 = vmatpush1.msra.mxu0 0.0
  %445 = vmatprep.subr.mxu0 0.0
  %446 = vmatpush1.msra.mxu0 0.0
  %447 = vmatprep.subr.mxu0 0.0
  %448 = vmatpush1.msra.mxu0 0.0
  %449 = vmatprep.subr.mxu0 0.0
  %450 = vmatpush1.msra.mxu0 0.0
  %451 = vmatprep.mubr.f32.mxu0 0.0
  %452 = vmatmul.mubr.f32.gmra.mrb[0].mxu0 %v385
  %v453 = vpop.f32.mrb[0].mxu0
  %v454 = vadd.f32 %v381, %v453
  %v455 = vpop.f32.mrb[0].mxu0
  %456 = vdwg.mxu0
  %v457 = vmax.f32 %v454, 0.0
  %v458 = vld [vmem:[%s10] sm:$0xff]
  %v459 = vld [vmem:[%s10 + $0x8] sm:$0xff]
  %v460 = vld [vmem:[#allocation3] sm:$0x1]
  %v462 = vlaneseq
  %v463 = vshrl.u32 %v462, 7
  %v464 = vsub.s32 0, %v463
  %v465 = vrot.slane %v460, %v464
  %vm467 = vcmask 130048
  %v469 = vsel %vm467, %v457, 0
  %471 = vmatprep.subr.mxu0 0.0
  %472 = vmatpush1.msra.mxu0 %v458
  %473 = vmatprep.subr.mxu0 0.0
  %474 = vmatpush1.msra.mxu0 %v459
  %475 = vmatprep.subr.mxu0 0.0
  %476 = vmatpush1.msra.mxu0 0.0
  %477 = vmatprep.subr.mxu0 0.0
  %478 = vmatpush1.msra.mxu0 0.0
  %479 = vmatprep.subr.mxu0 0.0
  %480 = vmatpush1.msra.mxu0 0.0
  %481 = vmatprep.subr.mxu0 0.0
  %482 = vmatpush1.msra.mxu0 0.0
  %483 = vmatprep.subr.mxu0 0.0
  %484 = vmatpush1.msra.mxu0 0.0
  %485 = vmatprep.subr.mxu0 0.0
  %486 = vmatpush1.msra.mxu0 0.0
  %487 = vmatprep.subr.mxu0 0.0
  %488 = vmatpush1.msra.mxu0 0.0
  %489 = vmatprep.subr.mxu0 0.0
  %490 = vmatpush1.msra.mxu0 0.0
  %491 = vmatprep.subr.mxu0 0.0
  %492 = vmatpush1.msra.mxu0 0.0
  %493 = vmatprep.subr.mxu0 0.0
  %494 = vmatpush1.msra.mxu0 0.0
  %495 = vmatprep.subr.mxu0 0.0
  %496 = vmatpush1.msra.mxu0 0.0
  %497 = vmatprep.subr.mxu0 0.0
  %498 = vmatpush1.msra.mxu0 0.0
  %499 = vmatprep.subr.mxu0 0.0
  %500 = vmatpush1.msra.mxu0 0.0
  %501 = vmatprep.subr.mxu0 0.0
  %502 = vmatpush1.msra.mxu0 0.0
  %503 = vmatprep.subr.mxu0 0.0
  %504 = vmatpush1.msra.mxu0 0.0
  %505 = vmatprep.subr.mxu0 0.0
  %506 = vmatpush1.msra.mxu0 0.0
  %507 = vmatprep.subr.mxu0 0.0
  %508 = vmatpush1.msra.mxu0 0.0
  %509 = vmatprep.subr.mxu0 0.0
  %510 = vmatpush1.msra.mxu0 0.0
  %511 = vmatprep.subr.mxu0 0.0
  %512 = vmatpush1.msra.mxu0 0.0
  %513 = vmatprep.subr.mxu0 0.0
  %514 = vmatpush1.msra.mxu0 0.0
  %515 = vmatprep.subr.mxu0 0.0
  %516 = vmatpush1.msra.mxu0 0.0
  %517 = vmatprep.subr.mxu0 0.0
  %518 = vmatpush1.msra.mxu0 0.0
  %519 = vmatprep.subr.mxu0 0.0
  %520 = vmatpush1.msra.mxu0 0.0
  %521 = vmatprep.subr.mxu0 0.0
  %522 = vmatpush1.msra.mxu0 0.0
  %523 = vmatprep.subr.mxu0 0.0
  %524 = vmatpush1.msra.mxu0 0.0
  %525 = vmatprep.subr.mxu0 0.0
  %526 = vmatpush1.msra.mxu0 0.0
  %527 = vmatprep.subr.mxu0 0.0
  %528 = vmatpush1.msra.mxu0 0.0
  %529 = vmatprep.subr.mxu0 0.0
  %530 = vmatpush1.msra.mxu0 0.0
  %531 = vmatprep.subr.mxu0 0.0
  %532 = vmatpush1.msra.mxu0 0.0
  %533 = vmatprep.subr.mxu0 0.0
  %534 = vmatpush1.msra.mxu0 0.0
  %535 = vmatprep.mubr.f32.mxu0 0.0
  %536 = vmatmul.mubr.f32.gmra.mrb[0].mxu0 %v469
  %v537 = vpop.f32.mrb[0].mxu0
  %v538 = vadd.f32 %v465, %v537
  %v539 = vpop.f32.mrb[0].mxu0
  %540 = vdwg.mxu0
  %vm541 = vcmask 1024
  %542 = vst.msk [vmem:[%s12] sm:$0x3] %vm541, %v538
  // Predicated region
  $region50: #{fwd.5} parent=0 // pred_check
    _
  $region51: #{fwd.5} parent=0 // pred_check_branch
    %544 = sbr.rel (0) target = $region53
  $region52: #{fwd.5} parent=0 // pred_region
    _
  $region53: #{fwd.5} parent=0 // pred_fallthru
    _
  // Predicated region
  $region54: #{fwd.5} parent=0 // pred_check
    _
  $region55: #{fwd.5} parent=0 // pred_check_branch
    %546 = sbr.rel (0) target = $region57
  $region56: #{fwd.5} parent=0 // pred_region
    _
  $region57: #{fwd.5} parent=0 // pred_fallthru
    _

</llo_original>
